<compile_context>
chip_gen: v7x
topology: tpu7x:2x2x1
jax: 0.10.0
libtpu: 0.0.40
codegen_flags: <defaults>
</compile_context>

<pallas_src>
from functools import partial

import numpy as np
import jax
import jax.numpy as jnp
from jax.experimental import pallas as pl
from jax.experimental.pallas import tpu as pltpu

# ---------------- model dims (small, consistent with the module) -------------
EMBED_SIZE = 128
HIDDEN_SIZE = 128
VOCAB_SIZE = 256
NUM_LAYERS = 1          # module uses num_layers=1; kernel implements 1 layer
BATCH = 8
CAP_LEN = 8             # caption length -> LSTM sequence length T = CAP_LEN + 1


# ---------------- fused Pallas kernel -----------------------------------------
def decoder_fused_kernel(x_ref, wih_ref, wfused_ref, b_ref, bout_ref,
                         logits_ref, xp_scr, *, T, B):
    """Full decoder forward in one kernel invocation.

    x_ref:      (T*B, E)    bf16, time-major flattened embeddings (features at t=0)
    wih_ref:    (E, 4H)     bf16, input->gates weight, gate order [i|f|o|g]
    wfused_ref: (H, 4H+V)   bf16, [W_hh | W_out] concatenated along columns
    b_ref:      (1, 4H)     f32,  b_ih + b_hh folded
    bout_ref:   (1, V)      f32,  output linear bias
    logits_ref: (T*B, V)    f32 output (lane-dense, V = 256)
    xp_scr:     (T*B, 4H)   f32 VMEM scratch: precomputed input projections
    """
    H = wfused_ref.shape[0]
    V = logits_ref.shape[1]
    G = 4 * H                                   # gate-column count

    # (1) Input projection (bf16 operands, f32 accumulate).  Step-0 rows first,
    #     so the serial recurrence can start while the bulk projection drains
    #     behind it (MXU is otherwise idle during the EUP sigmoid/tanh phases).
    xp_scr[pl.ds(0, B), :] = (
        jnp.dot(x_ref[pl.ds(0, B), :], wih_ref[...],
                preferred_element_type=jnp.float32) + b_ref[...])
    xp_scr[pl.ds(B, (T - 1) * B), :] = (
        jnp.dot(x_ref[pl.ds(B, (T - 1) * B), :], wih_ref[...],
                preferred_element_type=jnp.float32) + b_ref[...])

    # (2) Serial recurrence, fully unrolled (T static & small).  One fused
    #     (B,H)@(H,4H+V) dot per step: gate pre-activations for step t AND the
    #     logits for step t-1 come out of the same LHS push.
    h = jnp.zeros((B, H), jnp.float32)
    c = jnp.zeros((B, H), jnp.float32)
    for t in range(T):
        if t == 0:
            # h_{-1} == 0: no matmul needed, gates are just the input projection.
            gates = xp_scr[pl.ds(0, B), :]
        else:
            fused = jnp.dot(h.astype(jnp.bfloat16), wfused_ref[...],
                            preferred_element_type=jnp.float32)     # (B, 4H+V)
            # logits of the PREVIOUS step, piggy-backed on this step's dot.
            logits_ref[pl.ds((t - 1) * B, B), :] = fused[:, G:] + bout_ref[...]
            gates = xp_scr[pl.ds(t * B, B), :] + fused[:, :G]

        # gate order [i|f|o|g]: one sigmoid over a contiguous (B,3H) slab.
        sig = jax.nn.sigmoid(gates[:, :3 * H])
        i = sig[:, 0 * H:1 * H]
        f = sig[:, 1 * H:2 * H]
        o = sig[:, 2 * H:3 * H]
        g = jnp.tanh(gates[:, 3 * H:])
        c = f * c + i * g
        h = o * jnp.tanh(c)

    # (3) Logits for the final step's hidden state (small trailing matmul that
    #     reuses the W_out columns of the fused weight).
    logits_ref[pl.ds((T - 1) * B, B), :] = (
        jnp.dot(h.astype(jnp.bfloat16), wfused_ref[:, pl.ds(G, V)],
                preferred_element_type=jnp.float32) + bout_ref[...])


# ---------------- wrapper ------------------------------------------------------
def decoder_fused_pallas(x_flat, w_ih, w_fused, b_lstm, b_out, T, B):
    """x_flat: (T*B, E) bf16, time-major flattened. Returns logits (T*B, V) f32."""
    TB, E = x_flat.shape
    H = w_fused.shape[0]
    V = b_out.shape[1]
    assert TB == T * B and w_fused.shape[1] == 4 * H + V

    kernel = partial(decoder_fused_kernel, T=T, B=B)
    return pl.pallas_call(
        kernel,
        out_shape=jax.ShapeDtypeStruct((TB, V), jnp.float32),
        grid_spec=pltpu.PrefetchScalarGridSpec(
            num_scalar_prefetch=0,
            grid=(1,),
            in_specs=[
                pl.BlockSpec((TB, E), lambda i: (0, 0)),          # x (bf16)
                pl.BlockSpec((E, 4 * H), lambda i: (0, 0)),       # w_ih (bf16)
                pl.BlockSpec((H, 4 * H + V), lambda i: (0, 0)),   # [w_hh|w_out]
                pl.BlockSpec((1, 4 * H), lambda i: (0, 0)),       # b_lstm (f32)
                pl.BlockSpec((1, V), lambda i: (0, 0)),           # b_out (f32)
            ],
            out_specs=pl.BlockSpec((TB, V), lambda i: (0, 0)),
            scratch_shapes=[
                pltpu.VMEM((TB, 4 * H), jnp.float32),   # input projections
            ],
        ),
        compiler_params=pltpu.CompilerParams(
            dimension_semantics=("arbitrary",),
            vmem_limit_bytes=8 * 1024 * 1024,   # resident footprint ~1 MiB
        ),
    )(x_flat, w_ih, w_fused, b_lstm, b_out)


def decoder_rnn_forward(params, features, captions, lengths):
    """Mirrors DecoderRNN.forward.

    features: (B, E) f32, captions: (B, CAP_LEN) int32,
    lengths: python list of ints, sorted descending (pack_padded_sequence
    default enforce_sorted=True). NOTE: lengths is consumed at trace time,
    so distinct length patterns retrace (same as before).
    Returns (sum(lengths), VOCAB_SIZE) — linear applied to packed LSTM outputs.
    """
    B = features.shape[0]
    # embeddings = embed(captions); cat features at the front (glue, plain JAX)
    # TODO(synk): embedding gather stays as jnp.take outside the kernel; a DMA
    # gather kernel is possible but pointless at these sizes.
    emb = jnp.take(params["embed"], captions, axis=0)            # (B, Tc, E)
    seq = jnp.concatenate([features[:, None, :], emb], axis=1)   # (B, T, E)
    T = seq.shape[1]
    x_flat = jnp.transpose(seq, (1, 0, 2)).reshape(T * B, EMBED_SIZE)  # (T*B, E)

    # bf16 MXU operands (f32 accumulation + f32 elementwise inside the kernel).
    x_bf16 = x_flat.astype(jnp.bfloat16)
    w_ih_bf16 = params["w_ih"].astype(jnp.bfloat16)
    w_fused_bf16 = jnp.concatenate(
        [params["w_hh"], params["w_out"]], axis=1).astype(jnp.bfloat16)

    # One fused kernel: LSTM recurrence + output linear. (T*B, V) logits.
    logits_all = decoder_fused_pallas(
        x_bf16, w_ih_bf16, w_fused_bf16,
        params["b_lstm"], params["b_out"], T, B)                 # (T*B, V)

    # pack_padded_sequence ordering: timestep-major, only batches with len > t.
    # Linear is row-wise, so gathering packed rows from the full logits is
    # exactly linear(packed hiddens). Single flat-index gather, no pad/slice.
    flat_idx = np.array(
        [t * B + b
         for t in range(max(lengths))
         for b in range(B) if lengths[b] > t],
        dtype=np.int32)                                          # (N,)
    return logits_all[flat_idx]                                  # (N, V)


# ---------------- pure-JAX f32 reference (for a sanity check) ----------------
def decoder_rnn_reference(params, features, captions, lengths):
    B = features.shape[0]
    emb = jnp.take(params["embed"], captions, axis=0)
    seq = jnp.concatenate([features[:, None, :], emb], axis=1)
    x_tbe = jnp.transpose(seq, (1, 0, 2))

    def step(carry, x):
        h, c = carry
        gates = x @ params["w_ih"] + h @ params["w_hh"] + params["b_lstm"]
        i, f, o, g = jnp.split(gates, 4, axis=-1)   # gate order [i|f|o|g]
        i, f, o = jax.nn.sigmoid(i), jax.nn.sigmoid(f), jax.nn.sigmoid(o)
        g = jnp.tanh(g)
        c = f * c + i * g
        h = o * jnp.tanh(c)
        return (h, c), h

    h0 = jnp.zeros((B, HIDDEN_SIZE), jnp.float32)
    _, hiddens = jax.lax.scan(step, (h0, h0), x_tbe)             # (T, B, H)

    rows = []
    for t in range(max(lengths)):
        for b in range(B):
            if lengths[b] > t:
                rows.append(hiddens[t, b])
    packed = jnp.stack(rows, axis=0)
    return packed @ params["w_out"] + params["b_out"]


# ---------------- main --------------------------------------------------------
if __name__ == "__main__":
    key = jax.random.PRNGKey(0)
    ks = jax.random.split(key, 8)
    k_lstm = 1.0 / np.sqrt(HIDDEN_SIZE)

    params = {
        # nn.Embedding(vocab_size, embed_size)
        "embed": jax.random.normal(ks[0], (VOCAB_SIZE, EMBED_SIZE), jnp.float32),
        # nn.LSTM(embed, hidden): weights stored transposed; gate order [i|f|o|g]
        # (a pure relabeling of the random columns vs. PyTorch's [i|f|g|o]).
        "w_ih": jax.random.uniform(ks[1], (EMBED_SIZE, 4 * HIDDEN_SIZE),
                                   jnp.float32, -k_lstm, k_lstm),
        "w_hh": jax.random.uniform(ks[2], (HIDDEN_SIZE, 4 * HIDDEN_SIZE),
                                   jnp.float32, -k_lstm, k_lstm),
        # b_ih + b_hh folded into a single bias
        "b_lstm": jax.random.uniform(ks[3], (1, 4 * HIDDEN_SIZE),
                                     jnp.float32, -k_lstm, k_lstm),
        # nn.Linear(hidden_size, vocab_size), stored as (H, V)
        "w_out": jax.random.uniform(ks[4], (HIDDEN_SIZE, VOCAB_SIZE),
                                    jnp.float32, -k_lstm, k_lstm),
        "b_out": jax.random.uniform(ks[5], (1, VOCAB_SIZE),
                                    jnp.float32, -k_lstm, k_lstm),
    }

    features = jax.random.normal(ks[6], (BATCH, EMBED_SIZE), jnp.float32)
    captions = jax.random.randint(ks[7], (BATCH, CAP_LEN), 0, VOCAB_SIZE,
                                  dtype=jnp.int32)
    # pack_padded_sequence default requires lengths sorted descending
    lengths = [9, 8, 7, 6, 5, 5, 4, 3]
    assert len(lengths) == BATCH and max(lengths) <= CAP_LEN + 1

    out = decoder_rnn_forward(params, features, captions, lengths)
    out = jax.block_until_ready(out)

    # Tolerance loosened vs. the all-f32 version: MXU operands are bf16 (f32
    # accumulation), so ~1e-2-level deviations from the f32 reference are expected.
    ref = decoder_rnn_reference(params, features, captions, lengths)
    np.testing.assert_allclose(np.asarray(out), np.asarray(ref),
                               rtol=5e-2, atol=5e-2)

    print("KERNEL_OK")
</pallas_src>

<mosaic_0001>
module attributes {stable_mosaic.version = 11 : i64} {
  func.func @decoder_fused_kernel(%arg0: i32, %arg1: memref<72x128xbf16, #tpu.memory_space<vmem>>, %arg2: memref<128x512xbf16, #tpu.memory_space<vmem>>, %arg3: memref<128x768xbf16, #tpu.memory_space<vmem>>, %arg4: memref<1x512xf32, #tpu.memory_space<vmem>>, %arg5: memref<1x256xf32, #tpu.memory_space<vmem>>, %arg6: memref<72x256xf32, #tpu.memory_space<vmem>>, %arg7: memref<72x512xf32, #tpu.memory_space<vmem>>) attributes {dimension_semantics = [#tpu.dimension_semantics<arbitrary>], iteration_bounds = array<i64: 1>, scalar_prefetch = 0 : i64, scratch_operands = 1 : i64, tpu.core_type = #tpu.core_type<tc>, window_params = [{pipeline_mode = #tpu.pipeline_mode<synchronous>, transform_indices = @transform_0, window_bounds = array<i64: 72, 128>}, {pipeline_mode = #tpu.pipeline_mode<synchronous>, transform_indices = @transform_1, window_bounds = array<i64: 128, 512>}, {pipeline_mode = #tpu.pipeline_mode<synchronous>, transform_indices = @transform_2, window_bounds = array<i64: 128, 768>}, {pipeline_mode = #tpu.pipeline_mode<synchronous>, transform_indices = @transform_3, window_bounds = array<i64: 1, 512>}, {pipeline_mode = #tpu.pipeline_mode<synchronous>, transform_indices = @transform_4, window_bounds = array<i64: 1, 256>}, {pipeline_mode = #tpu.pipeline_mode<synchronous>, transform_indices = @transform_5, window_bounds = array<i64: 72, 256>}]} {
    %c0 = arith.constant 0 : index
    %c0_0 = arith.constant 0 : index
    %0 = vector.load %arg1[%c0, %c0_0] : memref<72x128xbf16, #tpu.memory_space<vmem>>, vector<8x128xbf16>
    %c0_1 = arith.constant 0 : index
    %c0_2 = arith.constant 0 : index
    %1 = vector.load %arg2[%c0_1, %c0_2] : memref<128x512xbf16, #tpu.memory_space<vmem>>, vector<128x512xbf16>
    %cst = arith.constant dense<0.000000e+00> : vector<8x512xf32>
    %2 = tpu.matmul %0, %1, %cst {dimension_numbers = #tpu.dot_dimension_numbers<[1], [0], [0], [1], [0, 0, 1, 1], [], []>} : vector<8x128xbf16>, vector<128x512xbf16>, vector<8x512xf32> -> vector<8x512xf32>
    %c0_3 = arith.constant 0 : index
    %c0_4 = arith.constant 0 : index
    %3 = vector.load %arg4[%c0_3, %c0_4] : memref<1x512xf32, #tpu.memory_space<vmem>>, vector<1x512xf32>
    %4 = vector.broadcast %3 : vector<1x512xf32> to vector<8x512xf32>
    %5 = arith.addf %2, %4 : vector<8x512xf32>
    %c0_5 = arith.constant 0 : index
    %c0_6 = arith.constant 0 : index
    %6 = vector.load %arg7[%c0_5, %c0_6] : memref<72x512xf32, #tpu.memory_space<vmem>>, vector<8x512xf32>
    tpu.vector_store %arg7[%c0_5, %c0_6], %5 {strides = array<i32>} : memref<72x512xf32, #tpu.memory_space<vmem>>, vector<8x512xf32>,
    %c8 = arith.constant 8 : index
    %c0_7 = arith.constant 0 : index
    %7 = vector.load %arg1[%c8, %c0_7] : memref<72x128xbf16, #tpu.memory_space<vmem>>, vector<64x128xbf16>
    %c0_8 = arith.constant 0 : index
    %c0_9 = arith.constant 0 : index
    %8 = vector.load %arg2[%c0_8, %c0_9] : memref<128x512xbf16, #tpu.memory_space<vmem>>, vector<128x512xbf16>
    %cst_10 = arith.constant dense<0.000000e+00> : vector<64x512xf32>
    %9 = tpu.matmul %7, %8, %cst_10 {dimension_numbers = #tpu.dot_dimension_numbers<[1], [0], [0], [1], [0, 0, 1, 1], [], []>} : vector<64x128xbf16>, vector<128x512xbf16>, vector<64x512xf32> -> vector<64x512xf32>
    %c0_11 = arith.constant 0 : index
    %c0_12 = arith.constant 0 : index
    %10 = vector.load %arg4[%c0_11, %c0_12] : memref<1x512xf32, #tpu.memory_space<vmem>>, vector<1x512xf32>
    %11 = vector.broadcast %10 : vector<1x512xf32> to vector<64x512xf32>
    %12 = arith.addf %9, %11 : vector<64x512xf32>
    %c8_13 = arith.constant 8 : index
    %c0_14 = arith.constant 0 : index
    %13 = vector.load %arg7[%c8_13, %c0_14] : memref<72x512xf32, #tpu.memory_space<vmem>>, vector<64x512xf32>
    tpu.vector_store %arg7[%c8_13, %c0_14], %12 {strides = array<i32>} : memref<72x512xf32, #tpu.memory_space<vmem>>, vector<64x512xf32>,
    %cst_15 = arith.constant 0.000000e+00 : f32
    %14 = vector.broadcast %cst_15 : f32 to vector<8x128xf32>
    %c0_16 = arith.constant 0 : index
    %c0_17 = arith.constant 0 : index
    %15 = vector.load %arg7[%c0_16, %c0_17] : memref<72x512xf32, #tpu.memory_space<vmem>>, vector<8x512xf32>
    %16 = vector.extract_strided_slice %15 {offsets = [0, 0], sizes = [8, 384], strides = [1, 1]} : vector<8x512xf32> to vector<8x384xf32>
    %17 = arith.negf %16 : vector<8x384xf32>
    %18 = math.exp %17 : vector<8x384xf32>
    %cst_18 = arith.constant 1.000000e+00 : f32
    %19 = vector.broadcast %cst_18 : f32 to vector<8x384xf32>
    %20 = arith.addf %19, %18 : vector<8x384xf32>
    %21 = arith.divf %19, %20 : vector<8x384xf32>
    %22 = vector.extract_strided_slice %21 {offsets = [0, 0], sizes = [8, 128], strides = [1, 1]} : vector<8x384xf32> to vector<8x128xf32>
    %23 = vector.extract_strided_slice %21 {offsets = [0, 128], sizes = [8, 128], strides = [1, 1]} : vector<8x384xf32> to vector<8x128xf32>
    %24 = vector.extract_strided_slice %21 {offsets = [0, 256], sizes = [8, 128], strides = [1, 1]} : vector<8x384xf32> to vector<8x128xf32>
    %25 = vector.extract_strided_slice %15 {offsets = [0, 384], sizes = [8, 128], strides = [1, 1]} : vector<8x512xf32> to vector<8x128xf32>
    %26 = math.tanh %25 : vector<8x128xf32>
    %27 = arith.mulf %23, %14 : vector<8x128xf32>
    %28 = arith.mulf %22, %26 : vector<8x128xf32>
    %29 = arith.addf %27, %28 : vector<8x128xf32>
    %30 = math.tanh %29 : vector<8x128xf32>
    %31 = arith.mulf %24, %30 : vector<8x128xf32>
    %32 = arith.truncf %31 : vector<8x128xf32> to vector<8x128xbf16>
    %c0_19 = arith.constant 0 : index
    %c0_20 = arith.constant 0 : index
    %33 = vector.load %arg3[%c0_19, %c0_20] : memref<128x768xbf16, #tpu.memory_space<vmem>>, vector<128x768xbf16>
    %cst_21 = arith.constant dense<0.000000e+00> : vector<8x768xf32>
    %34 = tpu.matmul %32, %33, %cst_21 {dimension_numbers = #tpu.dot_dimension_numbers<[1], [0], [0], [1], [0, 0, 1, 1], [], []>} : vector<8x128xbf16>, vector<128x768xbf16>, vector<8x768xf32> -> vector<8x768xf32>
    %35 = vector.extract_strided_slice %34 {offsets = [0, 512], sizes = [8, 256], strides = [1, 1]} : vector<8x768xf32> to vector<8x256xf32>
    %c0_22 = arith.constant 0 : index
    %c0_23 = arith.constant 0 : index
    %36 = vector.load %arg5[%c0_22, %c0_23] : memref<1x256xf32, #tpu.memory_space<vmem>>, vector<1x256xf32>
    %37 = vector.broadcast %36 : vector<1x256xf32> to vector<8x256xf32>
    %38 = arith.addf %35, %37 : vector<8x256xf32>
    %c0_24 = arith.constant 0 : index
    %c0_25 = arith.constant 0 : index
    %39 = vector.load %arg6[%c0_24, %c0_25] : memref<72x256xf32, #tpu.memory_space<vmem>>, vector<8x256xf32>
    tpu.vector_store %arg6[%c0_24, %c0_25], %38 {strides = array<i32>} : memref<72x256xf32, #tpu.memory_space<vmem>>, vector<8x256xf32>,
    %c8_26 = arith.constant 8 : index
    %c0_27 = arith.constant 0 : index
    %40 = vector.load %arg7[%c8_26, %c0_27] : memref<72x512xf32, #tpu.memory_space<vmem>>, vector<8x512xf32>
    %41 = vector.extract_strided_slice %34 {offsets = [0, 0], sizes = [8, 512], strides = [1, 1]} : vector<8x768xf32> to vector<8x512xf32>
    %42 = arith.addf %40, %41 : vector<8x512xf32>
    %43 = vector.extract_strided_slice %42 {offsets = [0, 0], sizes = [8, 384], strides = [1, 1]} : vector<8x512xf32> to vector<8x384xf32>
    %44 = arith.negf %43 : vector<8x384xf32>
    %45 = math.exp %44 : vector<8x384xf32>
    %cst_28 = arith.constant 1.000000e+00 : f32
    %46 = vector.broadcast %cst_28 : f32 to vector<8x384xf32>
    %47 = arith.addf %46, %45 : vector<8x384xf32>
    %48 = arith.divf %46, %47 : vector<8x384xf32>
    %49 = vector.extract_strided_slice %48 {offsets = [0, 0], sizes = [8, 128], strides = [1, 1]} : vector<8x384xf32> to vector<8x128xf32>
    %50 = vector.extract_strided_slice %48 {offsets = [0, 128], sizes = [8, 128], strides = [1, 1]} : vector<8x384xf32> to vector<8x128xf32>
    %51 = vector.extract_strided_slice %48 {offsets = [0, 256], sizes = [8, 128], strides = [1, 1]} : vector<8x384xf32> to vector<8x128xf32>
    %52 = vector.extract_strided_slice %42 {offsets = [0, 384], sizes = [8, 128], strides = [1, 1]} : vector<8x512xf32> to vector<8x128xf32>
    %53 = math.tanh %52 : vector<8x128xf32>
    %54 = arith.mulf %50, %29 : vector<8x128xf32>
    %55 = arith.mulf %49, %53 : vector<8x128xf32>
    %56 = arith.addf %54, %55 : vector<8x128xf32>
    %57 = math.tanh %56 : vector<8x128xf32>
    %58 = arith.mulf %51, %57 : vector<8x128xf32>
    %59 = arith.truncf %58 : vector<8x128xf32> to vector<8x128xbf16>
    %c0_29 = arith.constant 0 : index
    %c0_30 = arith.constant 0 : index
    %60 = vector.load %arg3[%c0_29, %c0_30] : memref<128x768xbf16, #tpu.memory_space<vmem>>, vector<128x768xbf16>
    %cst_31 = arith.constant dense<0.000000e+00> : vector<8x768xf32>
    %61 = tpu.matmul %59, %60, %cst_31 {dimension_numbers = #tpu.dot_dimension_numbers<[1], [0], [0], [1], [0, 0, 1, 1], [], []>} : vector<8x128xbf16>, vector<128x768xbf16>, vector<8x768xf32> -> vector<8x768xf32>
    %62 = vector.extract_strided_slice %61 {offsets = [0, 512], sizes = [8, 256], strides = [1, 1]} : vector<8x768xf32> to vector<8x256xf32>
    %c0_32 = arith.constant 0 : index
    %c0_33 = arith.constant 0 : index
    %63 = vector.load %arg5[%c0_32, %c0_33] : memref<1x256xf32, #tpu.memory_space<vmem>>, vector<1x256xf32>
    %64 = vector.broadcast %63 : vector<1x256xf32> to vector<8x256xf32>
    %65 = arith.addf %62, %64 : vector<8x256xf32>
    %c8_34 = arith.constant 8 : index
    %c0_35 = arith.constant 0 : index
    %66 = vector.load %arg6[%c8_34, %c0_35] : memref<72x256xf32, #tpu.memory_space<vmem>>, vector<8x256xf32>
    tpu.vector_store %arg6[%c8_34, %c0_35], %65 {strides = array<i32>} : memref<72x256xf32, #tpu.memory_space<vmem>>, vector<8x256xf32>,
    %c16 = arith.constant 16 : index
    %c0_36 = arith.constant 0 : index
    %67 = vector.load %arg7[%c16, %c0_36] : memref<72x512xf32, #tpu.memory_space<vmem>>, vector<8x512xf32>
    %68 = vector.extract_strided_slice %61 {offsets = [0, 0], sizes = [8, 512], strides = [1, 1]} : vector<8x768xf32> to vector<8x512xf32>
    %69 = arith.addf %67, %68 : vector<8x512xf32>
    %70 = vector.extract_strided_slice %69 {offsets = [0, 0], sizes = [8, 384], strides = [1, 1]} : vector<8x512xf32> to vector<8x384xf32>
    %71 = arith.negf %70 : vector<8x384xf32>
    %72 = math.exp %71 : vector<8x384xf32>
    %cst_37 = arith.constant 1.000000e+00 : f32
    %73 = vector.broadcast %cst_37 : f32 to vector<8x384xf32>
    %74 = arith.addf %73, %72 : vector<8x384xf32>
    %75 = arith.divf %73, %74 : vector<8x384xf32>
    %76 = vector.extract_strided_slice %75 {offsets = [0, 0], sizes = [8, 128], strides = [1, 1]} : vector<8x384xf32> to vector<8x128xf32>
    %77 = vector.extract_strided_slice %75 {offsets = [0, 128], sizes = [8, 128], strides = [1, 1]} : vector<8x384xf32> to vector<8x128xf32>
    %78 = vector.extract_strided_slice %75 {offsets = [0, 256], sizes = [8, 128], strides = [1, 1]} : vector<8x384xf32> to vector<8x128xf32>
    %79 = vector.extract_strided_slice %69 {offsets = [0, 384], sizes = [8, 128], strides = [1, 1]} : vector<8x512xf32> to vector<8x128xf32>
    %80 = math.tanh %79 : vector<8x128xf32>
    %81 = arith.mulf %77, %56 : vector<8x128xf32>
    %82 = arith.mulf %76, %80 : vector<8x128xf32>
    %83 = arith.addf %81, %82 : vector<8x128xf32>
    %84 = math.tanh %83 : vector<8x128xf32>
    %85 = arith.mulf %78, %84 : vector<8x128xf32>
    %86 = arith.truncf %85 : vector<8x128xf32> to vector<8x128xbf16>
    %c0_38 = arith.constant 0 : index
    %c0_39 = arith.constant 0 : index
    %87 = vector.load %arg3[%c0_38, %c0_39] : memref<128x768xbf16, #tpu.memory_space<vmem>>, vector<128x768xbf16>
    %cst_40 = arith.constant dense<0.000000e+00> : vector<8x768xf32>
    %88 = tpu.matmul %86, %87, %cst_40 {dimension_numbers = #tpu.dot_dimension_numbers<[1], [0], [0], [1], [0, 0, 1, 1], [], []>} : vector<8x128xbf16>, vector<128x768xbf16>, vector<8x768xf32> -> vector<8x768xf32>
    %89 = vector.extract_strided_slice %88 {offsets = [0, 512], sizes = [8, 256], strides = [1, 1]} : vector<8x768xf32> to vector<8x256xf32>
    %c0_41 = arith.constant 0 : index
    %c0_42 = arith.constant 0 : index
    %90 = vector.load %arg5[%c0_41, %c0_42] : memref<1x256xf32, #tpu.memory_space<vmem>>, vector<1x256xf32>
    %91 = vector.broadcast %90 : vector<1x256xf32> to vector<8x256xf32>
    %92 = arith.addf %89, %91 : vector<8x256xf32>
    %c16_43 = arith.constant 16 : index
    %c0_44 = arith.constant 0 : index
    %93 = vector.load %arg6[%c16_43, %c0_44] : memref<72x256xf32, #tpu.memory_space<vmem>>, vector<8x256xf32>
    tpu.vector_store %arg6[%c16_43, %c0_44], %92 {strides = array<i32>} : memref<72x256xf32, #tpu.memory_space<vmem>>, vector<8x256xf32>,
    %c24 = arith.constant 24 : index
    %c0_45 = arith.constant 0 : index
    %94 = vector.load %arg7[%c24, %c0_45] : memref<72x512xf32, #tpu.memory_space<vmem>>, vector<8x512xf32>
    %95 = vector.extract_strided_slice %88 {offsets = [0, 0], sizes = [8, 512], strides = [1, 1]} : vector<8x768xf32> to vector<8x512xf32>
    %96 = arith.addf %94, %95 : vector<8x512xf32>
    %97 = vector.extract_strided_slice %96 {offsets = [0, 0], sizes = [8, 384], strides = [1, 1]} : vector<8x512xf32> to vector<8x384xf32>
    %98 = arith.negf %97 : vector<8x384xf32>
    %99 = math.exp %98 : vector<8x384xf32>
    %cst_46 = arith.constant 1.000000e+00 : f32
    %100 = vector.broadcast %cst_46 : f32 to vector<8x384xf32>
    %101 = arith.addf %100, %99 : vector<8x384xf32>
    %102 = arith.divf %100, %101 : vector<8x384xf32>
    %103 = vector.extract_strided_slice %102 {offsets = [0, 0], sizes = [8, 128], strides = [1, 1]} : vector<8x384xf32> to vector<8x128xf32>
    %104 = vector.extract_strided_slice %102 {offsets = [0, 128], sizes = [8, 128], strides = [1, 1]} : vector<8x384xf32> to vector<8x128xf32>
    %105 = vector.extract_strided_slice %102 {offsets = [0, 256], sizes = [8, 128], strides = [1, 1]} : vector<8x384xf32> to vector<8x128xf32>
    %106 = vector.extract_strided_slice %96 {offsets = [0, 384], sizes = [8, 128], strides = [1, 1]} : vector<8x512xf32> to vector<8x128xf32>
    %107 = math.tanh %106 : vector<8x128xf32>
    %108 = arith.mulf %104, %83 : vector<8x128xf32>
    %109 = arith.mulf %103, %107 : vector<8x128xf32>
    %110 = arith.addf %108, %109 : vector<8x128xf32>
    %111 = math.tanh %110 : vector<8x128xf32>
    %112 = arith.mulf %105, %111 : vector<8x128xf32>
    %113 = arith.truncf %112 : vector<8x128xf32> to vector<8x128xbf16>
    %c0_47 = arith.constant 0 : index
    %c0_48 = arith.constant 0 : index
    %114 = vector.load %arg3[%c0_47, %c0_48] : memref<128x768xbf16, #tpu.memory_space<vmem>>, vector<128x768xbf16>
    %cst_49 = arith.constant dense<0.000000e+00> : vector<8x768xf32>
    %115 = tpu.matmul %113, %114, %cst_49 {dimension_numbers = #tpu.dot_dimension_numbers<[1], [0], [0], [1], [0, 0, 1, 1], [], []>} : vector<8x128xbf16>, vector<128x768xbf16>, vector<8x768xf32> -> vector<8x768xf32>
    %116 = vector.extract_strided_slice %115 {offsets = [0, 512], sizes = [8, 256], strides = [1, 1]} : vector<8x768xf32> to vector<8x256xf32>
    %c0_50 = arith.constant 0 : index
    %c0_51 = arith.constant 0 : index
    %117 = vector.load %arg5[%c0_50, %c0_51] : memref<1x256xf32, #tpu.memory_space<vmem>>, vector<1x256xf32>
    %118 = vector.broadcast %117 : vector<1x256xf32> to vector<8x256xf32>
    %119 = arith.addf %116, %118 : vector<8x256xf32>
    %c24_52 = arith.constant 24 : index
    %c0_53 = arith.constant 0 : index
    %120 = vector.load %arg6[%c24_52, %c0_53] : memref<72x256xf32, #tpu.memory_space<vmem>>, vector<8x256xf32>
    tpu.vector_store %arg6[%c24_52, %c0_53], %119 {strides = array<i32>} : memref<72x256xf32, #tpu.memory_space<vmem>>, vector<8x256xf32>,
    %c32 = arith.constant 32 : index
    %c0_54 = arith.constant 0 : index
    %121 = vector.load %arg7[%c32, %c0_54] : memref<72x512xf32, #tpu.memory_space<vmem>>, vector<8x512xf32>
    %122 = vector.extract_strided_slice %115 {offsets = [0, 0], sizes = [8, 512], strides = [1, 1]} : vector<8x768xf32> to vector<8x512xf32>
    %123 = arith.addf %121, %122 : vector<8x512xf32>
    %124 = vector.extract_strided_slice %123 {offsets = [0, 0], sizes = [8, 384], strides = [1, 1]} : vector<8x512xf32> to vector<8x384xf32>
    %125 = arith.negf %124 : vector<8x384xf32>
    %126 = math.exp %125 : vector<8x384xf32>
    %cst_55 = arith.constant 1.000000e+00 : f32
    %127 = vector.broadcast %cst_55 : f32 to vector<8x384xf32>
    %128 = arith.addf %127, %126 : vector<8x384xf32>
    %129 = arith.divf %127, %128 : vector<8x384xf32>
    %130 = vector.extract_strided_slice %129 {offsets = [0, 0], sizes = [8, 128], strides = [1, 1]} : vector<8x384xf32> to vector<8x128xf32>
    %131 = vector.extract_strided_slice %129 {offsets = [0, 128], sizes = [8, 128], strides = [1, 1]} : vector<8x384xf32> to vector<8x128xf32>
    %132 = vector.extract_strided_slice %129 {offsets = [0, 256], sizes = [8, 128], strides = [1, 1]} : vector<8x384xf32> to vector<8x128xf32>
    %133 = vector.extract_strided_slice %123 {offsets = [0, 384], sizes = [8, 128], strides = [1, 1]} : vector<8x512xf32> to vector<8x128xf32>
    %134 = math.tanh %133 : vector<8x128xf32>
    %135 = arith.mulf %131, %110 : vector<8x128xf32>
    %136 = arith.mulf %130, %134 : vector<8x128xf32>
    %137 = arith.addf %135, %136 : vector<8x128xf32>
    %138 = math.tanh %137 : vector<8x128xf32>
    %139 = arith.mulf %132, %138 : vector<8x128xf32>
    %140 = arith.truncf %139 : vector<8x128xf32> to vector<8x128xbf16>
    %c0_56 = arith.constant 0 : index
    %c0_57 = arith.constant 0 : index
    %141 = vector.load %arg3[%c0_56, %c0_57] : memref<128x768xbf16, #tpu.memory_space<vmem>>, vector<128x768xbf16>
    %cst_58 = arith.constant dense<0.000000e+00> : vector<8x768xf32>
    %142 = tpu.matmul %140, %141, %cst_58 {dimension_numbers = #tpu.dot_dimension_numbers<[1], [0], [0], [1], [0, 0, 1, 1], [], []>} : vector<8x128xbf16>, vector<128x768xbf16>, vector<8x768xf32> -> vector<8x768xf32>
    %143 = vector.extract_strided_slice %142 {offsets = [0, 512], sizes = [8, 256], strides = [1, 1]} : vector<8x768xf32> to vector<8x256xf32>
    %c0_59 = arith.constant 0 : index
    %c0_60 = arith.constant 0 : index
    %144 = vector.load %arg5[%c0_59, %c0_60] : memref<1x256xf32, #tpu.memory_space<vmem>>, vector<1x256xf32>
    %145 = vector.broadcast %144 : vector<1x256xf32> to vector<8x256xf32>
    %146 = arith.addf %143, %145 : vector<8x256xf32>
    %c32_61 = arith.constant 32 : index
    %c0_62 = arith.constant 0 : index
    %147 = vector.load %arg6[%c32_61, %c0_62] : memref<72x256xf32, #tpu.memory_space<vmem>>, vector<8x256xf32>
    tpu.vector_store %arg6[%c32_61, %c0_62], %146 {strides = array<i32>} : memref<72x256xf32, #tpu.memory_space<vmem>>, vector<8x256xf32>,
    %c40 = arith.constant 40 : index
    %c0_63 = arith.constant 0 : index
    %148 = vector.load %arg7[%c40, %c0_63] : memref<72x512xf32, #tpu.memory_space<vmem>>, vector<8x512xf32>
    %149 = vector.extract_strided_slice %142 {offsets = [0, 0], sizes = [8, 512], strides = [1, 1]} : vector<8x768xf32> to vector<8x512xf32>
    %150 = arith.addf %148, %149 : vector<8x512xf32>
    %151 = vector.extract_strided_slice %150 {offsets = [0, 0], sizes = [8, 384], strides = [1, 1]} : vector<8x512xf32> to vector<8x384xf32>
    %152 = arith.negf %151 : vector<8x384xf32>
    %153 = math.exp %152 : vector<8x384xf32>
    %cst_64 = arith.constant 1.000000e+00 : f32
    %154 = vector.broadcast %cst_64 : f32 to vector<8x384xf32>
    %155 = arith.addf %154, %153 : vector<8x384xf32>
    %156 = arith.divf %154, %155 : vector<8x384xf32>
    %157 = vector.extract_strided_slice %156 {offsets = [0, 0], sizes = [8, 128], strides = [1, 1]} : vector<8x384xf32> to vector<8x128xf32>
    %158 = vector.extract_strided_slice %156 {offsets = [0, 128], sizes = [8, 128], strides = [1, 1]} : vector<8x384xf32> to vector<8x128xf32>
    %159 = vector.extract_strided_slice %156 {offsets = [0, 256], sizes = [8, 128], strides = [1, 1]} : vector<8x384xf32> to vector<8x128xf32>
    %160 = vector.extract_strided_slice %150 {offsets = [0, 384], sizes = [8, 128], strides = [1, 1]} : vector<8x512xf32> to vector<8x128xf32>
    %161 = math.tanh %160 : vector<8x128xf32>
    %162 = arith.mulf %158, %137 : vector<8x128xf32>
    %163 = arith.mulf %157, %161 : vector<8x128xf32>
    %164 = arith.addf %162, %163 : vector<8x128xf32>
    %165 = math.tanh %164 : vector<8x128xf32>
    %166 = arith.mulf %159, %165 : vector<8x128xf32>
    %167 = arith.truncf %166 : vector<8x128xf32> to vector<8x128xbf16>
    %c0_65 = arith.constant 0 : index
    %c0_66 = arith.constant 0 : index
    %168 = vector.load %arg3[%c0_65, %c0_66] : memref<128x768xbf16, #tpu.memory_space<vmem>>, vector<128x768xbf16>
    %cst_67 = arith.constant dense<0.000000e+00> : vector<8x768xf32>
    %169 = tpu.matmul %167, %168, %cst_67 {dimension_numbers = #tpu.dot_dimension_numbers<[1], [0], [0], [1], [0, 0, 1, 1], [], []>} : vector<8x128xbf16>, vector<128x768xbf16>, vector<8x768xf32> -> vector<8x768xf32>
    %170 = vector.extract_strided_slice %169 {offsets = [0, 512], sizes = [8, 256], strides = [1, 1]} : vector<8x768xf32> to vector<8x256xf32>
    %c0_68 = arith.constant 0 : index
    %c0_69 = arith.constant 0 : index
    %171 = vector.load %arg5[%c0_68, %c0_69] : memref<1x256xf32, #tpu.memory_space<vmem>>, vector<1x256xf32>
    %172 = vector.broadcast %171 : vector<1x256xf32> to vector<8x256xf32>
    %173 = arith.addf %170, %172 : vector<8x256xf32>
    %c40_70 = arith.constant 40 : index
    %c0_71 = arith.constant 0 : index
    %174 = vector.load %arg6[%c40_70, %c0_71] : memref<72x256xf32, #tpu.memory_space<vmem>>, vector<8x256xf32>
    tpu.vector_store %arg6[%c40_70, %c0_71], %173 {strides = array<i32>} : memref<72x256xf32, #tpu.memory_space<vmem>>, vector<8x256xf32>,
    %c48 = arith.constant 48 : index
    %c0_72 = arith.constant 0 : index
    %175 = vector.load %arg7[%c48, %c0_72] : memref<72x512xf32, #tpu.memory_space<vmem>>, vector<8x512xf32>
    %176 = vector.extract_strided_slice %169 {offsets = [0, 0], sizes = [8, 512], strides = [1, 1]} : vector<8x768xf32> to vector<8x512xf32>
    %177 = arith.addf %175, %176 : vector<8x512xf32>
    %178 = vector.extract_strided_slice %177 {offsets = [0, 0], sizes = [8, 384], strides = [1, 1]} : vector<8x512xf32> to vector<8x384xf32>
    %179 = arith.negf %178 : vector<8x384xf32>
    %180 = math.exp %179 : vector<8x384xf32>
    %cst_73 = arith.constant 1.000000e+00 : f32
    %181 = vector.broadcast %cst_73 : f32 to vector<8x384xf32>
    %182 = arith.addf %181, %180 : vector<8x384xf32>
    %183 = arith.divf %181, %182 : vector<8x384xf32>
    %184 = vector.extract_strided_slice %183 {offsets = [0, 0], sizes = [8, 128], strides = [1, 1]} : vector<8x384xf32> to vector<8x128xf32>
    %185 = vector.extract_strided_slice %183 {offsets = [0, 128], sizes = [8, 128], strides = [1, 1]} : vector<8x384xf32> to vector<8x128xf32>
    %186 = vector.extract_strided_slice %183 {offsets = [0, 256], sizes = [8, 128], strides = [1, 1]} : vector<8x384xf32> to vector<8x128xf32>
    %187 = vector.extract_strided_slice %177 {offsets = [0, 384], sizes = [8, 128], strides = [1, 1]} : vector<8x512xf32> to vector<8x128xf32>
    %188 = math.tanh %187 : vector<8x128xf32>
    %189 = arith.mulf %185, %164 : vector<8x128xf32>
    %190 = arith.mulf %184, %188 : vector<8x128xf32>
    %191 = arith.addf %189, %190 : vector<8x128xf32>
    %192 = math.tanh %191 : vector<8x128xf32>
    %193 = arith.mulf %186, %192 : vector<8x128xf32>
    %194 = arith.truncf %193 : vector<8x128xf32> to vector<8x128xbf16>
    %c0_74 = arith.constant 0 : index
    %c0_75 = arith.constant 0 : index
    %195 = vector.load %arg3[%c0_74, %c0_75] : memref<128x768xbf16, #tpu.memory_space<vmem>>, vector<128x768xbf16>
    %cst_76 = arith.constant dense<0.000000e+00> : vector<8x768xf32>
    %196 = tpu.matmul %194, %195, %cst_76 {dimension_numbers = #tpu.dot_dimension_numbers<[1], [0], [0], [1], [0, 0, 1, 1], [], []>} : vector<8x128xbf16>, vector<128x768xbf16>, vector<8x768xf32> -> vector<8x768xf32>
    %197 = vector.extract_strided_slice %196 {offsets = [0, 512], sizes = [8, 256], strides = [1, 1]} : vector<8x768xf32> to vector<8x256xf32>
    %c0_77 = arith.constant 0 : index
    %c0_78 = arith.constant 0 : index
    %198 = vector.load %arg5[%c0_77, %c0_78] : memref<1x256xf32, #tpu.memory_space<vmem>>, vector<1x256xf32>
    %199 = vector.broadcast %198 : vector<1x256xf32> to vector<8x256xf32>
    %200 = arith.addf %197, %199 : vector<8x256xf32>
    %c48_79 = arith.constant 48 : index
    %c0_80 = arith.constant 0 : index
    %201 = vector.load %arg6[%c48_79, %c0_80] : memref<72x256xf32, #tpu.memory_space<vmem>>, vector<8x256xf32>
    tpu.vector_store %arg6[%c48_79, %c0_80], %200 {strides = array<i32>} : memref<72x256xf32, #tpu.memory_space<vmem>>, vector<8x256xf32>,
    %c56 = arith.constant 56 : index
    %c0_81 = arith.constant 0 : index
    %202 = vector.load %arg7[%c56, %c0_81] : memref<72x512xf32, #tpu.memory_space<vmem>>, vector<8x512xf32>
    %203 = vector.extract_strided_slice %196 {offsets = [0, 0], sizes = [8, 512], strides = [1, 1]} : vector<8x768xf32> to vector<8x512xf32>
    %204 = arith.addf %202, %203 : vector<8x512xf32>
    %205 = vector.extract_strided_slice %204 {offsets = [0, 0], sizes = [8, 384], strides = [1, 1]} : vector<8x512xf32> to vector<8x384xf32>
    %206 = arith.negf %205 : vector<8x384xf32>
    %207 = math.exp %206 : vector<8x384xf32>
    %cst_82 = arith.constant 1.000000e+00 : f32
    %208 = vector.broadcast %cst_82 : f32 to vector<8x384xf32>
    %209 = arith.addf %208, %207 : vector<8x384xf32>
    %210 = arith.divf %208, %209 : vector<8x384xf32>
    %211 = vector.extract_strided_slice %210 {offsets = [0, 0], sizes = [8, 128], strides = [1, 1]} : vector<8x384xf32> to vector<8x128xf32>
    %212 = vector.extract_strided_slice %210 {offsets = [0, 128], sizes = [8, 128], strides = [1, 1]} : vector<8x384xf32> to vector<8x128xf32>
    %213 = vector.extract_strided_slice %210 {offsets = [0, 256], sizes = [8, 128], strides = [1, 1]} : vector<8x384xf32> to vector<8x128xf32>
    %214 = vector.extract_strided_slice %204 {offsets = [0, 384], sizes = [8, 128], strides = [1, 1]} : vector<8x512xf32> to vector<8x128xf32>
    %215 = math.tanh %214 : vector<8x128xf32>
    %216 = arith.mulf %212, %191 : vector<8x128xf32>
    %217 = arith.mulf %211, %215 : vector<8x128xf32>
    %218 = arith.addf %216, %217 : vector<8x128xf32>
    %219 = math.tanh %218 : vector<8x128xf32>
    %220 = arith.mulf %213, %219 : vector<8x128xf32>
    %221 = arith.truncf %220 : vector<8x128xf32> to vector<8x128xbf16>
    %c0_83 = arith.constant 0 : index
    %c0_84 = arith.constant 0 : index
    %222 = vector.load %arg3[%c0_83, %c0_84] : memref<128x768xbf16, #tpu.memory_space<vmem>>, vector<128x768xbf16>
    %cst_85 = arith.constant dense<0.000000e+00> : vector<8x768xf32>
    %223 = tpu.matmul %221, %222, %cst_85 {dimension_numbers = #tpu.dot_dimension_numbers<[1], [0], [0], [1], [0, 0, 1, 1], [], []>} : vector<8x128xbf16>, vector<128x768xbf16>, vector<8x768xf32> -> vector<8x768xf32>
    %224 = vector.extract_strided_slice %223 {offsets = [0, 512], sizes = [8, 256], strides = [1, 1]} : vector<8x768xf32> to vector<8x256xf32>
    %c0_86 = arith.constant 0 : index
    %c0_87 = arith.constant 0 : index
    %225 = vector.load %arg5[%c0_86, %c0_87] : memref<1x256xf32, #tpu.memory_space<vmem>>, vector<1x256xf32>
    %226 = vector.broadcast %225 : vector<1x256xf32> to vector<8x256xf32>
    %227 = arith.addf %224, %226 : vector<8x256xf32>
    %c56_88 = arith.constant 56 : index
    %c0_89 = arith.constant 0 : index
    %228 = vector.load %arg6[%c56_88, %c0_89] : memref<72x256xf32, #tpu.memory_space<vmem>>, vector<8x256xf32>
    tpu.vector_store %arg6[%c56_88, %c0_89], %227 {strides = array<i32>} : memref<72x256xf32, #tpu.memory_space<vmem>>, vector<8x256xf32>,
    %c64 = arith.constant 64 : index
    %c0_90 = arith.constant 0 : index
    %229 = vector.load %arg7[%c64, %c0_90] : memref<72x512xf32, #tpu.memory_space<vmem>>, vector<8x512xf32>
    %230 = vector.extract_strided_slice %223 {offsets = [0, 0], sizes = [8, 512], strides = [1, 1]} : vector<8x768xf32> to vector<8x512xf32>
    %231 = arith.addf %229, %230 : vector<8x512xf32>
    %232 = vector.extract_strided_slice %231 {offsets = [0, 0], sizes = [8, 384], strides = [1, 1]} : vector<8x512xf32> to vector<8x384xf32>
    %233 = arith.negf %232 : vector<8x384xf32>
    %234 = math.exp %233 : vector<8x384xf32>
    %cst_91 = arith.constant 1.000000e+00 : f32
    %235 = vector.broadcast %cst_91 : f32 to vector<8x384xf32>
    %236 = arith.addf %235, %234 : vector<8x384xf32>
    %237 = arith.divf %235, %236 : vector<8x384xf32>
    %238 = vector.extract_strided_slice %237 {offsets = [0, 0], sizes = [8, 128], strides = [1, 1]} : vector<8x384xf32> to vector<8x128xf32>
    %239 = vector.extract_strided_slice %237 {offsets = [0, 128], sizes = [8, 128], strides = [1, 1]} : vector<8x384xf32> to vector<8x128xf32>
    %240 = vector.extract_strided_slice %237 {offsets = [0, 256], sizes = [8, 128], strides = [1, 1]} : vector<8x384xf32> to vector<8x128xf32>
    %241 = vector.extract_strided_slice %231 {offsets = [0, 384], sizes = [8, 128], strides = [1, 1]} : vector<8x512xf32> to vector<8x128xf32>
    %242 = math.tanh %241 : vector<8x128xf32>
    %243 = arith.mulf %239, %218 : vector<8x128xf32>
    %244 = arith.mulf %238, %242 : vector<8x128xf32>
    %245 = arith.addf %243, %244 : vector<8x128xf32>
    %246 = math.tanh %245 : vector<8x128xf32>
    %247 = arith.mulf %240, %246 : vector<8x128xf32>
    %248 = arith.truncf %247 : vector<8x128xf32> to vector<8x128xbf16>
    %c0_92 = arith.constant 0 : index
    %c512 = arith.constant 512 : index
    %249 = vector.load %arg3[%c0_92, %c512] : memref<128x768xbf16, #tpu.memory_space<vmem>>, vector<128x256xbf16>
    %cst_93 = arith.constant dense<0.000000e+00> : vector<8x256xf32>
    %250 = tpu.matmul %248, %249, %cst_93 {dimension_numbers = #tpu.dot_dimension_numbers<[1], [0], [0], [1], [0, 0, 1, 1], [], []>} : vector<8x128xbf16>, vector<128x256xbf16>, vector<8x256xf32> -> vector<8x256xf32>
    %c0_94 = arith.constant 0 : index
    %c0_95 = arith.constant 0 : index
    %251 = vector.load %arg5[%c0_94, %c0_95] : memref<1x256xf32, #tpu.memory_space<vmem>>, vector<1x256xf32>
    %252 = vector.broadcast %251 : vector<1x256xf32> to vector<8x256xf32>
    %253 = arith.addf %250, %252 : vector<8x256xf32>
    %c64_96 = arith.constant 64 : index
    %c0_97 = arith.constant 0 : index
    %254 = vector.load %arg6[%c64_96, %c0_97] : memref<72x256xf32, #tpu.memory_space<vmem>>, vector<8x256xf32>
    tpu.vector_store %arg6[%c64_96, %c0_97], %253 {strides = array<i32>} : memref<72x256xf32, #tpu.memory_space<vmem>>, vector<8x256xf32>,
    return
  }
  func.func @transform_0(%arg0: i32) -> (i32, i32) {
    %c0_i32 = arith.constant 0 : i32
    %c0_i32_0 = arith.constant 0 : i32
    %c0_i32_1 = arith.constant 0 : i32
    return %c0_i32, %c0_i32_0 : i32, i32
  }
  func.func @transform_1(%arg0: i32) -> (i32, i32) {
    %c0_i32 = arith.constant 0 : i32
    %c0_i32_0 = arith.constant 0 : i32
    %c0_i32_1 = arith.constant 0 : i32
    return %c0_i32, %c0_i32_0 : i32, i32
  }
  func.func @transform_2(%arg0: i32) -> (i32, i32) {
    %c0_i32 = arith.constant 0 : i32
    %c0_i32_0 = arith.constant 0 : i32
    %c0_i32_1 = arith.constant 0 : i32
    return %c0_i32, %c0_i32_0 : i32, i32
  }
  func.func @transform_3(%arg0: i32) -> (i32, i32) {
    %c0_i32 = arith.constant 0 : i32
    %c0_i32_0 = arith.constant 0 : i32
    %c0_i32_1 = arith.constant 0 : i32
    return %c0_i32, %c0_i32_0 : i32, i32
  }
  func.func @transform_4(%arg0: i32) -> (i32, i32) {
    %c0_i32 = arith.constant 0 : i32
    %c0_i32_0 = arith.constant 0 : i32
    %c0_i32_1 = arith.constant 0 : i32
    return %c0_i32, %c0_i32_0 : i32, i32
  }
  func.func @transform_5(%arg0: i32) -> (i32, i32) {
    %c0_i32 = arith.constant 0 : i32
    %c0_i32_0 = arith.constant 0 : i32
    %c0_i32_1 = arith.constant 0 : i32
    return %c0_i32, %c0_i32_0 : i32, i32
  }
}

</mosaic_0001>

<llo_original>
// kernel: tpu_custom_call.1
$region0: #{tpu_custom_call.1}
  #allocation0 [shape = 'u32[]', space=smem, size = 0x4, offset = 0x4, fixed_abs, tag = 'smem constant byte address 0x4 - core index']
  #allocation1 [shape = 'u32[144,128]{1,0:T(1,128)}', space=vmem, size = 0x12000, scoped, tag = 'internal scratch']
  #allocation2 [shape = 'f32[72,512]{1,0:T(8,128)}', space=vmem, size = 0x24000, scoped, tag = 'scratch operand']
  %s0 = inlined_call_operand.hbm [shape: bf16[72,128], index: 0, kind: input, shape index: {}]
  %s1 = inlined_call_operand.hbm [shape: bf16[128,512], index: 1, kind: input, shape index: {}]
  %s2 = inlined_call_operand.hbm [shape: bf16[128,768], index: 2, kind: input, shape index: {}]
  %s3 = inlined_call_operand.vmem [shape: f32[1,512], index: 3, kind: input, shape index: {}]
  %s4 = inlined_call_operand.vmem [shape: f32[1,256], index: 4, kind: input, shape index: {}]
  %s5 = inlined_call_operand.hbm [shape: f32[72,256], index: 5, kind: output, shape index: {}]
  %s6 = sld [smem:[#allocation0]]
  $region42: #{tpu_custom_call.1} parent=0
    _
  %s8 = ssub.s32 1, %s6
  %s9 = scalar_select 0, %s8, %s6
  $region1: #{tpu_custom_call.1} parent=0
    #allocation3 [shape = 'u8[18432]{0}', space=vmem, size = 0x4800, scoped, tag = 'input window, operand 0, single buffered']
    #allocation4 [shape = 's32[1]{0}', space=sflag, size = 0x4, scoped, tag = 'scoped memory for tpu_custom_call.1']
    #allocation5 [shape = 's32[1]{0}', space=sflag, size = 0x4, scoped, tag = 'scoped memory for tpu_custom_call.1']
    #allocation6 [shape = 'u8[131072]{0}', space=vmem, size = 0x20000, scoped, tag = 'input window, operand 1, single buffered']
    #allocation7 [shape = 's32[1]{0}', space=sflag, size = 0x4, scoped, tag = 'scoped memory for tpu_custom_call.1']
    #allocation8 [shape = 'u8[196608]{0}', space=vmem, size = 0x30000, scoped, tag = 'input window, operand 2, single buffered']
    #allocation9 [shape = 'u8[73728]{0}', space=vmem, size = 0x12000, scoped, tag = 'output window, operand 0, single buffered']
    %10 = vsyncpa [#allocation4], 0
    %11 = vsyncpa [#allocation7], 0
    %12 = vsyncpa [#allocation5], 0
    // Predicated region
    $region2: #{tpu_custom_call.1} parent=1 // pred_check
      _
    $region3: #{tpu_custom_call.1} parent=1 // pred_check_branch
      %14 = sbr.rel (0) target = $region5
    $region4: #{tpu_custom_call.1} parent=1 // pred_region
      %s16 = ssub.s32 576, 576
      %17 = vsyncadd [#allocation4], %s16
      %s18 = sshll.u32 [#allocation3], 4
      %s19 = int_to_ptr.vmem [resolvable:$true] %s18
      %24 = dma.hbm_to_vmem [thread:$0]  %s0, 576, %s19, [#allocation4], 64, 64, 4
    $region5: #{tpu_custom_call.1} parent=1 // pred_fallthru
      _
    // Predicated region
    $region6: #{tpu_custom_call.1} parent=1 // pred_check
      _
    $region7: #{tpu_custom_call.1} parent=1 // pred_check_branch
      %26 = sbr.rel (0) target = $region9
    $region8: #{tpu_custom_call.1} parent=1 // pred_region
      %s28 = ssub.s32 4096, 4096
      %29 = vsyncadd [#allocation7], %s28
      %s30 = sshll.u32 [#allocation6], 4
      %s31 = int_to_ptr.vmem [resolvable:$true] %s30
      %36 = dma.hbm_to_vmem [thread:$0]  %s1, 4096, %s31, [#allocation7], 256, 256, 16
    $region9: #{tpu_custom_call.1} parent=1 // pred_fallthru
      _
    // Predicated region
    $region10: #{tpu_custom_call.1} parent=1 // pred_check
      _
    $region11: #{tpu_custom_call.1} parent=1 // pred_check_branch
      %38 = sbr.rel (0) target = $region13
    $region12: #{tpu_custom_call.1} parent=1 // pred_region
      %s40 = ssub.s32 6144, 6144
      %41 = vsyncadd [#allocation7], %s40
      %s42 = sshll.u32 [#allocation8], 4
      %s43 = int_to_ptr.vmem [resolvable:$true] %s42
      %48 = dma.hbm_to_vmem [thread:$0]  %s2, 6144, %s43, [#allocation7], 384, 384, 24
    $region13: #{tpu_custom_call.1} parent=1 // pred_fallthru
      _
    // Predicated region
    $region14: #{tpu_custom_call.1} parent=1 // pred_check
      _
    $region15: #{tpu_custom_call.1} parent=1 // pred_check_branch
      %50 = sbr.rel (0) target = $region17
    $region16: #{tpu_custom_call.1} parent=1 // pred_region
      _
    $region17: #{tpu_custom_call.1} parent=1 // pred_fallthru
      _
    // Predicated region
    $region18: #{tpu_custom_call.1} parent=1 // pred_check
      _
    $region19: #{tpu_custom_call.1} parent=1 // pred_check_branch
      %52 = sbr.rel (0) target = $region21
    $region20: #{tpu_custom_call.1} parent=1 // pred_region
      _
    $region21: #{tpu_custom_call.1} parent=1 // pred_fallthru
      _
    // Predicated region
    $region22: #{tpu_custom_call.1} parent=1 // pred_check
      _
    $region23: #{tpu_custom_call.1} parent=1 // pred_check_branch
      %54 = sbr.rel (0) target = $region25
    $region24: #{tpu_custom_call.1} parent=1 // pred_region
      %55 = dma.done [#allocation4], 576
    $region25: #{tpu_custom_call.1} parent=1 // pred_fallthru
      _
    // Predicated region
    $region26: #{tpu_custom_call.1} parent=1 // pred_check
      _
    $region27: #{tpu_custom_call.1} parent=1 // pred_check_branch
      %57 = sbr.rel (0) target = $region29
    $region28: #{tpu_custom_call.1} parent=1 // pred_region
      %58 = dma.done [#allocation7], 4096
    $region29: #{tpu_custom_call.1} parent=1 // pred_fallthru
      _
    // Predicated region
    $region30: #{tpu_custom_call.1} parent=1 // pred_check
      _
    $region31: #{tpu_custom_call.1} parent=1 // pred_check_branch
      %60 = sbr.rel (0) target = $region33
    $region32: #{tpu_custom_call.1} parent=1 // pred_region
      %61 = dma.done [#allocation7], 6144
    $region33: #{tpu_custom_call.1} parent=1 // pred_fallthru
      _
    %v63 = vld [vmem:[#allocation3] sm:$0xf]
    %v64 = vld [vmem:[#allocation6] sm:$0xff]
    %v65 = vld [vmem:[#allocation6 + $0x8] sm:$0xff]
    %v66 = vld [vmem:[#allocation6 + $0x10] sm:$0xff]
    %v67 = vld [vmem:[#allocation6 + $0x18] sm:$0xff]
    %v68 = vld [vmem:[#allocation6 + $0x20] sm:$0xff]
    %v69 = vld [vmem:[#allocation6 + $0x28] sm:$0xff]
    %v70 = vld [vmem:[#allocation6 + $0x30] sm:$0xff]
    %v71 = vld [vmem:[#allocation6 + $0x38] sm:$0xff]
    %v72 = vld [vmem:[#allocation6 + $0x40] sm:$0xff]
    %v73 = vld [vmem:[#allocation6 + $0x48] sm:$0xff]
    %v74 = vld [vmem:[#allocation6 + $0x50] sm:$0xff]
    %v75 = vld [vmem:[#allocation6 + $0x58] sm:$0xff]
    %v76 = vld [vmem:[#allocation6 + $0x60] sm:$0xff]
    %v77 = vld [vmem:[#allocation6 + $0x68] sm:$0xff]
    %v78 = vld [vmem:[#allocation6 + $0x70] sm:$0xff]
    %v79 = vld [vmem:[#allocation6 + $0x78] sm:$0xff]
    %v80 = vld [vmem:[#allocation6 + $0x80] sm:$0xff]
    %v81 = vld [vmem:[#allocation6 + $0x88] sm:$0xff]
    %v82 = vld [vmem:[#allocation6 + $0x90] sm:$0xff]
    %v83 = vld [vmem:[#allocation6 + $0x98] sm:$0xff]
    %v84 = vld [vmem:[#allocation6 + $0xa0] sm:$0xff]
    %v85 = vld [vmem:[#allocation6 + $0xa8] sm:$0xff]
    %v86 = vld [vmem:[#allocation6 + $0xb0] sm:$0xff]
    %v87 = vld [vmem:[#allocation6 + $0xb8] sm:$0xff]
    %v88 = vld [vmem:[#allocation6 + $0xc0] sm:$0xff]
    %v89 = vld [vmem:[#allocation6 + $0xc8] sm:$0xff]
    %v90 = vld [vmem:[#allocation6 + $0xd0] sm:$0xff]
    %v91 = vld [vmem:[#allocation6 + $0xd8] sm:$0xff]
    %v92 = vld [vmem:[#allocation6 + $0xe0] sm:$0xff]
    %v93 = vld [vmem:[#allocation6 + $0xe8] sm:$0xff]
    %v94 = vld [vmem:[#allocation6 + $0xf0] sm:$0xff]
    %v95 = vld [vmem:[#allocation6 + $0xf8] sm:$0xff]
    %v96 = vld [vmem:[%s3] sm:$0xf]
    %v98 = vlaneseq
    %v99 = vshrl.u32 %v98, 7
    %v100 = vsub.s32 0, %v99
    %v101 = vrot.slane %v96, %v100
    %v102 = vlaneseq
    %v103 = vshrl.u32 %v102, 7
    %v104 = vsub.s32 1, %v103
    %v105 = vrot.slane %v96, %v104
    %v106 = vlaneseq
    %v107 = vshrl.u32 %v106, 7
    %v108 = vsub.s32 2, %v107
    %v109 = vrot.slane %v96, %v108
    %v110 = vlaneseq
    %v111 = vshrl.u32 %v110, 7
    %v112 = vsub.s32 3, %v111
    %v113 = vrot.slane %v96, %v112
    %v150 = vunpack.c.l.b16 %v64
    %v151 = vunpack.c.h.b16 %v64
    %v152 = vunpack.c.l.b16 %v65
    %v153 = vunpack.c.h.b16 %v65
    %v154 = vunpack.c.l.b16 %v66
    %v155 = vunpack.c.h.b16 %v66
    %v156 = vunpack.c.l.b16 %v67
    %v157 = vunpack.c.h.b16 %v67
    %v158 = vunpack.c.l.b16 %v68
    %v159 = vunpack.c.h.b16 %v68
    %v160 = vunpack.c.l.b16 %v69
    %v161 = vunpack.c.h.b16 %v69
    %v162 = vunpack.c.l.b16 %v70
    %v163 = vunpack.c.h.b16 %v70
    %v164 = vunpack.c.l.b16 %v71
    %v165 = vunpack.c.h.b16 %v71
    %v166 = vunpack.c.l.b16 %v72
    %v167 = vunpack.c.h.b16 %v72
    %v168 = vunpack.c.l.b16 %v73
    %v169 = vunpack.c.h.b16 %v73
    %v170 = vunpack.c.l.b16 %v74
    %v171 = vunpack.c.h.b16 %v74
    %v172 = vunpack.c.l.b16 %v75
    %v173 = vunpack.c.h.b16 %v75
    %v174 = vunpack.c.l.b16 %v76
    %v175 = vunpack.c.h.b16 %v76
    %v176 = vunpack.c.l.b16 %v77
    %v177 = vunpack.c.h.b16 %v77
    %v178 = vunpack.c.l.b16 %v78
    %v179 = vunpack.c.h.b16 %v78
    %v180 = vunpack.c.l.b16 %v79
    %v181 = vunpack.c.h.b16 %v79
    %v182 = vunpack.c.l.b16 %v80
    %v183 = vunpack.c.h.b16 %v80
    %v184 = vunpack.c.l.b16 %v81
    %v185 = vunpack.c.h.b16 %v81
    %v186 = vunpack.c.l.b16 %v82
    %v187 = vunpack.c.h.b16 %v82
    %v188 = vunpack.c.l.b16 %v83
    %v189 = vunpack.c.h.b16 %v83
    %v190 = vunpack.c.l.b16 %v84
    %v191 = vunpack.c.h.b16 %v84
    %v192 = vunpack.c.l.b16 %v85
    %v193 = vunpack.c.h.b16 %v85
    %v194 = vunpack.c.l.b16 %v86
    %v195 = vunpack.c.h.b16 %v86
    %v196 = vunpack.c.l.b16 %v87
    %v197 = vunpack.c.h.b16 %v87
    %v198 = vunpack.c.l.b16 %v88
    %v199 = vunpack.c.h.b16 %v88
    %v200 = vunpack.c.l.b16 %v89
    %v201 = vunpack.c.h.b16 %v89
    %v202 = vunpack.c.l.b16 %v90
    %v203 = vunpack.c.h.b16 %v90
    %v204 = vunpack.c.l.b16 %v91
    %v205 = vunpack.c.h.b16 %v91
    %v206 = vunpack.c.l.b16 %v92
    %v207 = vunpack.c.h.b16 %v92
    %v208 = vunpack.c.l.b16 %v93
    %v209 = vunpack.c.h.b16 %v93
    %v210 = vunpack.c.l.b16 %v94
    %v211 = vunpack.c.h.b16 %v94
    %v212 = vunpack.c.l.b16 %v95
    %v213 = vunpack.c.h.b16 %v95
    %v214 = vpack.c.b16 %v154, %v150
    %v215 = vpack.c.b16 %v155, %v151
    %v216 = vpack.c.b16 %v156, %v152
    %v217 = vpack.c.b16 %v157, %v153
    %v218 = vpack.c.b16 %v162, %v158
    %v219 = vpack.c.b16 %v163, %v159
    %v220 = vpack.c.b16 %v164, %v160
    %v221 = vpack.c.b16 %v165, %v161
    %v222 = vpack.c.b16 %v170, %v166
    %v223 = vpack.c.b16 %v171, %v167
    %v224 = vpack.c.b16 %v172, %v168
    %v225 = vpack.c.b16 %v173, %v169
    %v226 = vpack.c.b16 %v178, %v174
    %v227 = vpack.c.b16 %v179, %v175
    %v228 = vpack.c.b16 %v180, %v176
    %v229 = vpack.c.b16 %v181, %v177
    %v230 = vpack.c.b16 %v186, %v182
    %v231 = vpack.c.b16 %v187, %v183
    %v232 = vpack.c.b16 %v188, %v184
    %v233 = vpack.c.b16 %v189, %v185
    %v234 = vpack.c.b16 %v194, %v190
    %v235 = vpack.c.b16 %v195, %v191
    %v236 = vpack.c.b16 %v196, %v192
    %v237 = vpack.c.b16 %v197, %v193
    %v238 = vpack.c.b16 %v202, %v198
    %v239 = vpack.c.b16 %v203, %v199
    %v240 = vpack.c.b16 %v204, %v200
    %v241 = vpack.c.b16 %v205, %v201
    %v242 = vpack.c.b16 %v210, %v206
    %v243 = vpack.c.b16 %v211, %v207
    %v244 = vpack.c.b16 %v212, %v208
    %v245 = vpack.c.b16 %v213, %v209
    %278 = vmatprep.subr.bf16.mxu0 %v215
    %279 = vmatpush1.bf16.msra.mxu0 %v214
    %280 = vmatprep.subr.bf16.mxu0 %v219
    %281 = vmatpush1.bf16.msra.mxu0 %v218
    %282 = vmatprep.subr.bf16.mxu0 %v223
    %283 = vmatpush1.bf16.msra.mxu0 %v222
    %284 = vmatprep.subr.bf16.mxu0 %v227
    %285 = vmatpush1.bf16.msra.mxu0 %v226
    %286 = vmatprep.subr.bf16.mxu0 %v231
    %287 = vmatpush1.bf16.msra.mxu0 %v230
    %288 = vmatprep.subr.bf16.mxu0 %v235
    %289 = vmatpush1.bf16.msra.mxu0 %v234
    %290 = vmatprep.subr.bf16.mxu0 %v239
    %291 = vmatpush1.bf16.msra.mxu0 %v238
    %292 = vmatprep.subr.bf16.mxu0 %v243
    %293 = vmatpush1.bf16.msra.mxu0 %v242
    %294 = vmatprep.subr.bf16.mxu0 0
    %295 = vmatpush1.bf16.msra.mxu0 0
    %296 = vmatprep.subr.bf16.mxu0 0
    %297 = vmatpush1.bf16.msra.mxu0 0
    %298 = vmatprep.subr.bf16.mxu0 0
    %299 = vmatpush1.bf16.msra.mxu0 0
    %300 = vmatprep.subr.bf16.mxu0 0
    %301 = vmatpush1.bf16.msra.mxu0 0
    %302 = vmatprep.subr.bf16.mxu0 0
    %303 = vmatpush1.bf16.msra.mxu0 0
    %304 = vmatprep.subr.bf16.mxu0 0
    %305 = vmatpush1.bf16.msra.mxu0 0
    %306 = vmatprep.subr.bf16.mxu0 0
    %307 = vmatpush1.bf16.msra.mxu0 0
    %308 = vmatprep.subr.bf16.mxu0 0
    %309 = vmatpush1.bf16.msra.mxu0 0
    %310 = vmatprep.mubr.bf16.mxu0 0
    %311 = vmatmul.mubr.bf16.gmra.mrb[0].mxu0 %v63
    %v312 = vpop.f32.mrb[0].mxu0
    %v313 = vadd.f32 %v101, %v312
    %v314 = vpop.f32.mrb[0].mxu0
    %v315 = vadd.f32 %v105, %v314
    %v316 = vpop.f32.mrb[0].mxu0
    %v317 = vpop.f32.mrb[0].mxu0
    %318 = vdwg.mxu0
    %319 = vmatprep.subr.bf16.mxu0 %v217
    %320 = vmatpush1.bf16.msra.mxu0 %v216
    %321 = vmatprep.subr.bf16.mxu0 %v221
    %322 = vmatpush1.bf16.msra.mxu0 %v220
    %323 = vmatprep.subr.bf16.mxu0 %v225
    %324 = vmatpush1.bf16.msra.mxu0 %v224
    %325 = vmatprep.subr.bf16.mxu0 %v229
    %326 = vmatpush1.bf16.msra.mxu0 %v228
    %327 = vmatprep.subr.bf16.mxu0 %v233
    %328 = vmatpush1.bf16.msra.mxu0 %v232
    %329 = vmatprep.subr.bf16.mxu0 %v237
    %330 = vmatpush1.bf16.msra.mxu0 %v236
    %331 = vmatprep.subr.bf16.mxu0 %v241
    %332 = vmatpush1.bf16.msra.mxu0 %v240
    %333 = vmatprep.subr.bf16.mxu0 %v245
    %334 = vmatpush1.bf16.msra.mxu0 %v244
    %335 = vmatprep.subr.bf16.mxu0 0
    %336 = vmatpush1.bf16.msra.mxu0 0
    %337 = vmatprep.subr.bf16.mxu0 0
    %338 = vmatpush1.bf16.msra.mxu0 0
    %339 = vmatprep.subr.bf16.mxu0 0
    %340 = vmatpush1.bf16.msra.mxu0 0
    %341 = vmatprep.subr.bf16.mxu0 0
    %342 = vmatpush1.bf16.msra.mxu0 0
    %343 = vmatprep.subr.bf16.mxu0 0
    %344 = vmatpush1.bf16.msra.mxu0 0
    %345 = vmatprep.subr.bf16.mxu0 0
    %346 = vmatpush1.bf16.msra.mxu0 0
    %347 = vmatprep.subr.bf16.mxu0 0
    %348 = vmatpush1.bf16.msra.mxu0 0
    %349 = vmatprep.subr.bf16.mxu0 0
    %350 = vmatpush1.bf16.msra.mxu0 0
    %351 = vmatprep.mubr.bf16.mxu0 0
    %352 = vmatmul.mubr.bf16.gmra.mrb[0].mxu0 %v63
    %v353 = vpop.f32.mrb[0].mxu0
    %v354 = vadd.f32 %v109, %v353
    %v355 = vpop.f32.mrb[0].mxu0
    %v356 = vadd.f32 %v113, %v355
    %v357 = vpop.f32.mrb[0].mxu0
    %v358 = vpop.f32.mrb[0].mxu0
    %359 = vdwg.mxu0
    %360 = vst [vmem:[#allocation2] sm:$0xff] %v313
    %361 = vst [vmem:[#allocation2 + $0x8] sm:$0xff] %v315
    %362 = vst [vmem:[#allocation2 + $0x10] sm:$0xff] %v354
    %363 = vst [vmem:[#allocation2 + $0x18] sm:$0xff] %v356
    %v364 = vld [vmem:[#allocation3 + $0x4] sm:$0xf]
    %v365 = vld [vmem:[#allocation3 + $0x8] sm:$0xf]
    %v366 = vld [vmem:[#allocation3 + $0xc] sm:$0xf]
    %v367 = vld [vmem:[#allocation3 + $0x10] sm:$0xf]
    %v368 = vld [vmem:[#allocation3 + $0x14] sm:$0xf]
    %v369 = vld [vmem:[#allocation3 + $0x18] sm:$0xf]
    %v370 = vld [vmem:[#allocation3 + $0x1c] sm:$0xf]
    %v371 = vld [vmem:[#allocation3 + $0x20] sm:$0xf]
    %v372 = vld [vmem:[#allocation6] sm:$0xff]
    %v373 = vld [vmem:[#allocation6 + $0x8] sm:$0xff]
    %v374 = vld [vmem:[#allocation6 + $0x10] sm:$0xff]
    %v375 = vld [vmem:[#allocation6 + $0x18] sm:$0xff]
    %v376 = vld [vmem:[#allocation6 + $0x20] sm:$0xff]
    %v377 = vld [vmem:[#allocation6 + $0x28] sm:$0xff]
    %v378 = vld [vmem:[#allocation6 + $0x30] sm:$0xff]
    %v379 = vld [vmem:[#allocation6 + $0x38] sm:$0xff]
    %v380 = vld [vmem:[#allocation6 + $0x40] sm:$0xff]
    %v381 = vld [vmem:[#allocation6 + $0x48] sm:$0xff]
    %v382 = vld [vmem:[#allocation6 + $0x50] sm:$0xff]
    %v383 = vld [vmem:[#allocation6 + $0x58] sm:$0xff]
    %v384 = vld [vmem:[#allocation6 + $0x60] sm:$0xff]
    %v385 = vld [vmem:[#allocation6 + $0x68] sm:$0xff]
    %v386 = vld [vmem:[#allocation6 + $0x70] sm:$0xff]
    %v387 = vld [vmem:[#allocation6 + $0x78] sm:$0xff]
    %v388 = vld [vmem:[#allocation6 + $0x80] sm:$0xff]
    %v389 = vld [vmem:[#allocation6 + $0x88] sm:$0xff]
    %v390 = vld [vmem:[#allocation6 + $0x90] sm:$0xff]
    %v391 = vld [vmem:[#allocation6 + $0x98] sm:$0xff]
    %v392 = vld [vmem:[#allocation6 + $0xa0] sm:$0xff]
    %v393 = vld [vmem:[#allocation6 + $0xa8] sm:$0xff]
    %v394 = vld [vmem:[#allocation6 + $0xb0] sm:$0xff]
    %v395 = vld [vmem:[#allocation6 + $0xb8] sm:$0xff]
    %v396 = vld [vmem:[#allocation6 + $0xc0] sm:$0xff]
    %v397 = vld [vmem:[#allocation6 + $0xc8] sm:$0xff]
    %v398 = vld [vmem:[#allocation6 + $0xd0] sm:$0xff]
    %v399 = vld [vmem:[#allocation6 + $0xd8] sm:$0xff]
    %v400 = vld [vmem:[#allocation6 + $0xe0] sm:$0xff]
    %v401 = vld [vmem:[#allocation6 + $0xe8] sm:$0xff]
    %v402 = vld [vmem:[#allocation6 + $0xf0] sm:$0xff]
    %v403 = vld [vmem:[#allocation6 + $0xf8] sm:$0xff]
    %v404 = vld [vmem:[%s3] sm:$0xf]
    %v406 = vlaneseq
    %v407 = vshrl.u32 %v406, 7
    %v408 = vsub.s32 0, %v407
    %v409 = vrot.slane %v404, %v408
    %v410 = vlaneseq
    %v411 = vshrl.u32 %v410, 7
    %v412 = vsub.s32 1, %v411
    %v413 = vrot.slane %v404, %v412
    %v414 = vlaneseq
    %v415 = vshrl.u32 %v414, 7
    %v416 = vsub.s32 2, %v415
    %v417 = vrot.slane %v404, %v416
    %v418 = vlaneseq
    %v419 = vshrl.u32 %v418, 7
    %v420 = vsub.s32 3, %v419
    %v421 = vrot.slane %v404, %v420
    %v434 = vunpack.c.l.b16 %v364
    %v435 = vunpack.c.l.b16 %v365
    %v436 = vunpack.c.l.b16 %v366
    %v437 = vunpack.c.l.b16 %v367
    %v438 = vunpack.c.l.b16 %v368
    %v439 = vunpack.c.l.b16 %v369
    %v440 = vunpack.c.l.b16 %v370
    %v441 = vunpack.c.l.b16 %v371
    %v442 = vpack.c.b16 %v435, %v434
    %v443 = vpack.c.b16 %v437, %v436
    %v444 = vpack.c.b16 %v439, %v438
    %v445 = vpack.c.b16 %v441, %v440
    %v482 = vunpack.c.l.b16 %v372
    %v483 = vunpack.c.h.b16 %v372
    %v484 = vunpack.c.l.b16 %v373
    %v485 = vunpack.c.h.b16 %v373
    %v486 = vunpack.c.l.b16 %v374
    %v487 = vunpack.c.h.b16 %v374
    %v488 = vunpack.c.l.b16 %v375
    %v489 = vunpack.c.h.b16 %v375
    %v490 = vunpack.c.l.b16 %v376
    %v491 = vunpack.c.h.b16 %v376
    %v492 = vunpack.c.l.b16 %v377
    %v493 = vunpack.c.h.b16 %v377
    %v494 = vunpack.c.l.b16 %v378
    %v495 = vunpack.c.h.b16 %v378
    %v496 = vunpack.c.l.b16 %v379
    %v497 = vunpack.c.h.b16 %v379
    %v498 = vunpack.c.l.b16 %v380
    %v499 = vunpack.c.h.b16 %v380
    %v500 = vunpack.c.l.b16 %v381
    %v501 = vunpack.c.h.b16 %v381
    %v502 = vunpack.c.l.b16 %v382
    %v503 = vunpack.c.h.b16 %v382
    %v504 = vunpack.c.l.b16 %v383
    %v505 = vunpack.c.h.b16 %v383
    %v506 = vunpack.c.l.b16 %v384
    %v507 = vunpack.c.h.b16 %v384
    %v508 = vunpack.c.l.b16 %v385
    %v509 = vunpack.c.h.b16 %v385
    %v510 = vunpack.c.l.b16 %v386
    %v511 = vunpack.c.h.b16 %v386
    %v512 = vunpack.c.l.b16 %v387
    %v513 = vunpack.c.h.b16 %v387
    %v514 = vunpack.c.l.b16 %v388
    %v515 = vunpack.c.h.b16 %v388
    %v516 = vunpack.c.l.b16 %v389
    %v517 = vunpack.c.h.b16 %v389
    %v518 = vunpack.c.l.b16 %v390
    %v519 = vunpack.c.h.b16 %v390
    %v520 = vunpack.c.l.b16 %v391
    %v521 = vunpack.c.h.b16 %v391
    %v522 = vunpack.c.l.b16 %v392
    %v523 = vunpack.c.h.b16 %v392
    %v524 = vunpack.c.l.b16 %v393
    %v525 = vunpack.c.h.b16 %v393
    %v526 = vunpack.c.l.b16 %v394
    %v527 = vunpack.c.h.b16 %v394
    %v528 = vunpack.c.l.b16 %v395
    %v529 = vunpack.c.h.b16 %v395
    %v530 = vunpack.c.l.b16 %v396
    %v531 = vunpack.c.h.b16 %v396
    %v532 = vunpack.c.l.b16 %v397
    %v533 = vunpack.c.h.b16 %v397
    %v534 = vunpack.c.l.b16 %v398
    %v535 = vunpack.c.h.b16 %v398
    %v536 = vunpack.c.l.b16 %v399
    %v537 = vunpack.c.h.b16 %v399
    %v538 = vunpack.c.l.b16 %v400
    %v539 = vunpack.c.h.b16 %v400
    %v540 = vunpack.c.l.b16 %v401
    %v541 = vunpack.c.h.b16 %v401
    %v542 = vunpack.c.l.b16 %v402
    %v543 = vunpack.c.h.b16 %v402
    %v544 = vunpack.c.l.b16 %v403
    %v545 = vunpack.c.h.b16 %v403
    %v546 = vpack.c.b16 %v486, %v482
    %v547 = vpack.c.b16 %v487, %v483
    %v548 = vpack.c.b16 %v488, %v484
    %v549 = vpack.c.b16 %v489, %v485
    %v550 = vpack.c.b16 %v494, %v490
    %v551 = vpack.c.b16 %v495, %v491
    %v552 = vpack.c.b16 %v496, %v492
    %v553 = vpack.c.b16 %v497, %v493
    %v554 = vpack.c.b16 %v502, %v498
    %v555 = vpack.c.b16 %v503, %v499
    %v556 = vpack.c.b16 %v504, %v500
    %v557 = vpack.c.b16 %v505, %v501
    %v558 = vpack.c.b16 %v510, %v506
    %v559 = vpack.c.b16 %v511, %v507
    %v560 = vpack.c.b16 %v512, %v508
    %v561 = vpack.c.b16 %v513, %v509
    %v562 = vpack.c.b16 %v518, %v514
    %v563 = vpack.c.b16 %v519, %v515
    %v564 = vpack.c.b16 %v520, %v516
    %v565 = vpack.c.b16 %v521, %v517
    %v566 = vpack.c.b16 %v526, %v522
    %v567 = vpack.c.b16 %v527, %v523
    %v568 = vpack.c.b16 %v528, %v524
    %v569 = vpack.c.b16 %v529, %v525
    %v570 = vpack.c.b16 %v534, %v530
    %v571 = vpack.c.b16 %v535, %v531
    %v572 = vpack.c.b16 %v536, %v532
    %v573 = vpack.c.b16 %v537, %v533
    %v574 = vpack.c.b16 %v542, %v538
    %v575 = vpack.c.b16 %v543, %v539
    %v576 = vpack.c.b16 %v544, %v540
    %v577 = vpack.c.b16 %v545, %v541
    %610 = vmatprep.subr.bf16.mxu0 %v547
    %611 = vmatpush1.bf16.msra.mxu0 %v546
    %612 = vmatprep.subr.bf16.mxu0 %v551
    %613 = vmatpush1.bf16.msra.mxu0 %v550
    %614 = vmatprep.subr.bf16.mxu0 %v555
    %615 = vmatpush1.bf16.msra.mxu0 %v554
    %616 = vmatprep.subr.bf16.mxu0 %v559
    %617 = vmatpush1.bf16.msra.mxu0 %v558
    %618 = vmatprep.subr.bf16.mxu0 %v563
    %619 = vmatpush1.bf16.msra.mxu0 %v562
    %620 = vmatprep.subr.bf16.mxu0 %v567
    %621 = vmatpush1.bf16.msra.mxu0 %v566
    %622 = vmatprep.subr.bf16.mxu0 %v571
    %623 = vmatpush1.bf16.msra.mxu0 %v570
    %624 = vmatprep.subr.bf16.mxu0 %v575
    %625 = vmatpush1.bf16.msra.mxu0 %v574
    %626 = vmatprep.subr.bf16.mxu0 0
    %627 = vmatpush1.bf16.msra.mxu0 0
    %628 = vmatprep.subr.bf16.mxu0 0
    %629 = vmatpush1.bf16.msra.mxu0 0
    %630 = vmatprep.subr.bf16.mxu0 0
    %631 = vmatpush1.bf16.msra.mxu0 0
    %632 = vmatprep.subr.bf16.mxu0 0
    %633 = vmatpush1.bf16.msra.mxu0 0
    %634 = vmatprep.subr.bf16.mxu0 0
    %635 = vmatpush1.bf16.msra.mxu0 0
    %636 = vmatprep.subr.bf16.mxu0 0
    %637 = vmatpush1.bf16.msra.mxu0 0
    %638 = vmatprep.subr.bf16.mxu0 0
    %639 = vmatpush1.bf16.msra.mxu0 0
    %640 = vmatprep.subr.bf16.mxu0 0
    %641 = vmatpush1.bf16.msra.mxu0 0
    %642 = vmatprep.mubr.bf16.mxu0 0
    %643 = vmatmul.mubr.bf16.gmra.mrb[0].mxu0 %v442
    %v644 = vpop.f32.mrb[0].mxu0
    %v645 = vadd.f32 %v409, %v644
    %v646 = vpop.f32.mrb[0].mxu0
    %v647 = vadd.f32 %v413, %v646
    %v648 = vpop.f32.mrb[0].mxu0
    %v649 = vadd.f32 %v409, %v648
    %v650 = vpop.f32.mrb[0].mxu0
    %v651 = vadd.f32 %v413, %v650
    %652 = vmatprep.mubr.bf16.mxu0 0
    %653 = vmatmul.mubr.bf16.gmra.mrb[0].mxu0 %v443
    %v654 = vpop.f32.mrb[0].mxu0
    %v655 = vadd.f32 %v409, %v654
    %v656 = vpop.f32.mrb[0].mxu0
    %v657 = vadd.f32 %v413, %v656
    %v658 = vpop.f32.mrb[0].mxu0
    %v659 = vadd.f32 %v409, %v658
    %v660 = vpop.f32.mrb[0].mxu0
    %v661 = vadd.f32 %v413, %v660
    %662 = vmatprep.mubr.bf16.mxu0 0
    %663 = vmatmul.mubr.bf16.gmra.mrb[0].mxu0 %v444
    %v664 = vpop.f32.mrb[0].mxu0
    %v665 = vadd.f32 %v409, %v664
    %v666 = vpop.f32.mrb[0].mxu0
    %v667 = vadd.f32 %v413, %v666
    %v668 = vpop.f32.mrb[0].mxu0
    %v669 = vadd.f32 %v409, %v668
    %v670 = vpop.f32.mrb[0].mxu0
    %v671 = vadd.f32 %v413, %v670
    %672 = vmatprep.mubr.bf16.mxu0 0
    %673 = vmatmul.mubr.bf16.gmra.mrb[0].mxu0 %v445
    %v674 = vpop.f32.mrb[0].mxu0
    %v675 = vadd.f32 %v409, %v674
    %v676 = vpop.f32.mrb[0].mxu0
    %v677 = vadd.f32 %v413, %v676
    %v678 = vpop.f32.mrb[0].mxu0
    %v679 = vadd.f32 %v409, %v678
    %v680 = vpop.f32.mrb[0].mxu0
    %v681 = vadd.f32 %v413, %v680
    %682 = vdwg.mxu0
    %683 = vmatprep.subr.bf16.mxu0 %v549
    %684 = vmatpush1.bf16.msra.mxu0 %v548
    %685 = vmatprep.subr.bf16.mxu0 %v553
    %686 = vmatpush1.bf16.msra.mxu0 %v552
    %687 = vmatprep.subr.bf16.mxu0 %v557
    %688 = vmatpush1.bf16.msra.mxu0 %v556
    %689 = vmatprep.subr.bf16.mxu0 %v561
    %690 = vmatpush1.bf16.msra.mxu0 %v560
    %691 = vmatprep.subr.bf16.mxu0 %v565
    %692 = vmatpush1.bf16.msra.mxu0 %v564
    %693 = vmatprep.subr.bf16.mxu0 %v569
    %694 = vmatpush1.bf16.msra.mxu0 %v568
    %695 = vmatprep.subr.bf16.mxu0 %v573
    %696 = vmatpush1.bf16.msra.mxu0 %v572
    %697 = vmatprep.subr.bf16.mxu0 %v577
    %698 = vmatpush1.bf16.msra.mxu0 %v576
    %699 = vmatprep.subr.bf16.mxu0 0
    %700 = vmatpush1.bf16.msra.mxu0 0
    %701 = vmatprep.subr.bf16.mxu0 0
    %702 = vmatpush1.bf16.msra.mxu0 0
    %703 = vmatprep.subr.bf16.mxu0 0
    %704 = vmatpush1.bf16.msra.mxu0 0
    %705 = vmatprep.subr.bf16.mxu0 0
    %706 = vmatpush1.bf16.msra.mxu0 0
    %707 = vmatprep.subr.bf16.mxu0 0
    %708 = vmatpush1.bf16.msra.mxu0 0
    %709 = vmatprep.subr.bf16.mxu0 0
    %710 = vmatpush1.bf16.msra.mxu0 0
    %711 = vmatprep.subr.bf16.mxu0 0
    %712 = vmatpush1.bf16.msra.mxu0 0
    %713 = vmatprep.subr.bf16.mxu0 0
    %714 = vmatpush1.bf16.msra.mxu0 0
    %715 = vmatprep.mubr.bf16.mxu0 0
    %716 = vmatmul.mubr.bf16.gmra.mrb[0].mxu0 %v442
    %v717 = vpop.f32.mrb[0].mxu0
    %v718 = vadd.f32 %v417, %v717
    %v719 = vpop.f32.mrb[0].mxu0
    %v720 = vadd.f32 %v421, %v719
    %v721 = vpop.f32.mrb[0].mxu0
    %v722 = vadd.f32 %v417, %v721
    %v723 = vpop.f32.mrb[0].mxu0
    %v724 = vadd.f32 %v421, %v723
    %725 = vmatprep.mubr.bf16.mxu0 0
    %726 = vmatmul.mubr.bf16.gmra.mrb[0].mxu0 %v443
    %v727 = vpop.f32.mrb[0].mxu0
    %v728 = vadd.f32 %v417, %v727
    %v729 = vpop.f32.mrb[0].mxu0
    %v730 = vadd.f32 %v421, %v729
    %v731 = vpop.f32.mrb[0].mxu0
    %v732 = vadd.f32 %v417, %v731
    %v733 = vpop.f32.mrb[0].mxu0
    %v734 = vadd.f32 %v421, %v733
    %735 = vmatprep.mubr.bf16.mxu0 0
    %736 = vmatmul.mubr.bf16.gmra.mrb[0].mxu0 %v444
    %v737 = vpop.f32.mrb[0].mxu0
    %v738 = vadd.f32 %v417, %v737
    %v739 = vpop.f32.mrb[0].mxu0
    %v740 = vadd.f32 %v421, %v739
    %v741 = vpop.f32.mrb[0].mxu0
    %v742 = vadd.f32 %v417, %v741
    %v743 = vpop.f32.mrb[0].mxu0
    %v744 = vadd.f32 %v421, %v743
    %745 = vmatprep.mubr.bf16.mxu0 0
    %746 = vmatmul.mubr.bf16.gmra.mrb[0].mxu0 %v445
    %v747 = vpop.f32.mrb[0].mxu0
    %v748 = vadd.f32 %v417, %v747
    %v749 = vpop.f32.mrb[0].mxu0
    %v750 = vadd.f32 %v421, %v749
    %v751 = vpop.f32.mrb[0].mxu0
    %v752 = vadd.f32 %v417, %v751
    %v753 = vpop.f32.mrb[0].mxu0
    %v754 = vadd.f32 %v421, %v753
    %755 = vdwg.mxu0
    %756 = vst [vmem:[#allocation2 + $0x20] sm:$0xff] %v645
    %757 = vst [vmem:[#allocation2 + $0x28] sm:$0xff] %v647
    %758 = vst [vmem:[#allocation2 + $0x30] sm:$0xff] %v718
    %759 = vst [vmem:[#allocation2 + $0x38] sm:$0xff] %v720
    %760 = vst [vmem:[#allocation2 + $0x40] sm:$0xff] %v649
    %761 = vst [vmem:[#allocation2 + $0x48] sm:$0xff] %v651
    %762 = vst [vmem:[#allocation2 + $0x50] sm:$0xff] %v722
    %763 = vst [vmem:[#allocation2 + $0x58] sm:$0xff] %v724
    %764 = vst [vmem:[#allocation2 + $0x60] sm:$0xff] %v655
    %765 = vst [vmem:[#allocation2 + $0x68] sm:$0xff] %v657
    %766 = vst [vmem:[#allocation2 + $0x70] sm:$0xff] %v728
    %767 = vst [vmem:[#allocation2 + $0x78] sm:$0xff] %v730
    %768 = vst [vmem:[#allocation2 + $0x80] sm:$0xff] %v659
    %769 = vst [vmem:[#allocation2 + $0x88] sm:$0xff] %v661
    %770 = vst [vmem:[#allocation2 + $0x90] sm:$0xff] %v732
    %771 = vst [vmem:[#allocation2 + $0x98] sm:$0xff] %v734
    %772 = vst [vmem:[#allocation2 + $0xa0] sm:$0xff] %v665
    %773 = vst [vmem:[#allocation2 + $0xa8] sm:$0xff] %v667
    %774 = vst [vmem:[#allocation2 + $0xb0] sm:$0xff] %v738
    %775 = vst [vmem:[#allocation2 + $0xb8] sm:$0xff] %v740
    %776 = vst [vmem:[#allocation2 + $0xc0] sm:$0xff] %v669
    %777 = vst [vmem:[#allocation2 + $0xc8] sm:$0xff] %v671
    %778 = vst [vmem:[#allocation2 + $0xd0] sm:$0xff] %v742
    %779 = vst [vmem:[#allocation2 + $0xd8] sm:$0xff] %v744
    %780 = vst [vmem:[#allocation2 + $0xe0] sm:$0xff] %v675
    %781 = vst [vmem:[#allocation2 + $0xe8] sm:$0xff] %v677
    %782 = vst [vmem:[#allocation2 + $0xf0] sm:$0xff] %v748
    %783 = vst [vmem:[#allocation2 + $0xf8] sm:$0xff] %v750
    %784 = vst [vmem:[#allocation2 + $0x100] sm:$0xff] %v679
    %785 = vst [vmem:[#allocation2 + $0x108] sm:$0xff] %v681
    %786 = vst [vmem:[#allocation2 + $0x110] sm:$0xff] %v752
    %787 = vst [vmem:[#allocation2 + $0x118] sm:$0xff] %v754
    %v788 = vld [vmem:[#allocation2] sm:$0xff]
    %v789 = vld [vmem:[#allocation2 + $0x8] sm:$0xff]
    %v790 = vld [vmem:[#allocation2 + $0x10] sm:$0xff]
    %v791 = vld [vmem:[#allocation2 + $0x18] sm:$0xff]
    %v792 = vxor.u32 %v788, 2147483648
    %v793 = vxor.u32 %v789, 2147483648
    %v794 = vxor.u32 %v790, 2147483648
    %v795 = vmul.f32 %v792, 1.442695
    %v796 = vpow.pop %v795
    %v797 = vmul.f32 %v793, 1.442695
    %v798 = vpow.pop %v797
    %v799 = vmul.f32 %v794, 1.442695
    %v800 = vpow.pop %v799
    %v801 = vadd.f32 %v796, 1.0
    %v802 = vadd.f32 %v798, 1.0
    %v803 = vadd.f32 %v800, 1.0
    %v804 = vrcp.pop %v801
    %v805 = vmul.f32 1.0, %v804
    %v806 = vrcp.pop %v802
    %v807 = vmul.f32 1.0, %v806
    %v808 = vrcp.pop %v803
    %v809 = vmul.f32 1.0, %v808
    %v810 = vtanh.pop %v791
    %v811 = vmul.f32 %v807, 0.0
    %v812 = vmul.f32 %v805, %v810
    %v813 = vadd.f32 %v811, %v812
    %v814 = vtanh.pop %v813
    %v815 = vmul.f32 %v809, %v814
    %v816 = vpack.c.bf16 %v815, %v815
    %v817 = vld [vmem:[#allocation8] sm:$0xff]
    %v818 = vld [vmem:[#allocation8 + $0x8] sm:$0xff]
    %v819 = vld [vmem:[#allocation8 + $0x10] sm:$0xff]
    %v820 = vld [vmem:[#allocation8 + $0x18] sm:$0xff]
    %v821 = vld [vmem:[#allocation8 + $0x20] sm:$0xff]
    %v822 = vld [vmem:[#allocation8 + $0x28] sm:$0xff]
    %v823 = vld [vmem:[#allocation8 + $0x30] sm:$0xff]
    %v824 = vld [vmem:[#allocation8 + $0x38] sm:$0xff]
    %v825 = vld [vmem:[#allocation8 + $0x40] sm:$0xff]
    %v826 = vld [vmem:[#allocation8 + $0x48] sm:$0xff]
    %v827 = vld [vmem:[#allocation8 + $0x50] sm:$0xff]
    %v828 = vld [vmem:[#allocation8 + $0x58] sm:$0xff]
    %v829 = vld [vmem:[#allocation8 + $0x60] sm:$0xff]
    %v830 = vld [vmem:[#allocation8 + $0x68] sm:$0xff]
    %v831 = vld [vmem:[#allocation8 + $0x70] sm:$0xff]
    %v832 = vld [vmem:[#allocation8 + $0x78] sm:$0xff]
    %v833 = vld [vmem:[#allocation8 + $0x80] sm:$0xff]
    %v834 = vld [vmem:[#allocation8 + $0x88] sm:$0xff]
    %v835 = vld [vmem:[#allocation8 + $0x90] sm:$0xff]
    %v836 = vld [vmem:[#allocation8 + $0x98] sm:$0xff]
    %v837 = vld [vmem:[#allocation8 + $0xa0] sm:$0xff]
    %v838 = vld [vmem:[#allocation8 + $0xa8] sm:$0xff]
    %v839 = vld [vmem:[#allocation8 + $0xb0] sm:$0xff]
    %v840 = vld [vmem:[#allocation8 + $0xb8] sm:$0xff]
    %v841 = vld [vmem:[#allocation8 + $0xc0] sm:$0xff]
    %v842 = vld [vmem:[#allocation8 + $0xc8] sm:$0xff]
    %v843 = vld [vmem:[#allocation8 + $0xd0] sm:$0xff]
    %v844 = vld [vmem:[#allocation8 + $0xd8] sm:$0xff]
    %v845 = vld [vmem:[#allocation8 + $0xe0] sm:$0xff]
    %v846 = vld [vmem:[#allocation8 + $0xe8] sm:$0xff]
    %v847 = vld [vmem:[#allocation8 + $0xf0] sm:$0xff]
    %v848 = vld [vmem:[#allocation8 + $0xf8] sm:$0xff]
    %v849 = vld [vmem:[#allocation8 + $0x100] sm:$0xff]
    %v850 = vld [vmem:[#allocation8 + $0x108] sm:$0xff]
    %v851 = vld [vmem:[#allocation8 + $0x110] sm:$0xff]
    %v852 = vld [vmem:[#allocation8 + $0x118] sm:$0xff]
    %v853 = vld [vmem:[#allocation8 + $0x120] sm:$0xff]
    %v854 = vld [vmem:[#allocation8 + $0x128] sm:$0xff]
    %v855 = vld [vmem:[#allocation8 + $0x130] sm:$0xff]
    %v856 = vld [vmem:[#allocation8 + $0x138] sm:$0xff]
    %v857 = vld [vmem:[#allocation8 + $0x140] sm:$0xff]
    %v858 = vld [vmem:[#allocation8 + $0x148] sm:$0xff]
    %v859 = vld [vmem:[#allocation8 + $0x150] sm:$0xff]
    %v860 = vld [vmem:[#allocation8 + $0x158] sm:$0xff]
    %v861 = vld [vmem:[#allocation8 + $0x160] sm:$0xff]
    %v862 = vld [vmem:[#allocation8 + $0x168] sm:$0xff]
    %v863 = vld [vmem:[#allocation8 + $0x170] sm:$0xff]
    %v864 = vld [vmem:[#allocation8 + $0x178] sm:$0xff]
    %v913 = vunpack.c.l.b16 %v817
    %v914 = vunpack.c.h.b16 %v817
    %v915 = vunpack.c.l.b16 %v818
    %v916 = vunpack.c.h.b16 %v818
    %v917 = vunpack.c.l.b16 %v819
    %v918 = vunpack.c.h.b16 %v819
    %v919 = vunpack.c.l.b16 %v820
    %v920 = vunpack.c.h.b16 %v820
    %v921 = vunpack.c.l.b16 %v821
    %v922 = vunpack.c.h.b16 %v821
    %v923 = vunpack.c.l.b16 %v822
    %v924 = vunpack.c.h.b16 %v822
    %v925 = vunpack.c.l.b16 %v823
    %v926 = vunpack.c.h.b16 %v823
    %v927 = vunpack.c.l.b16 %v824
    %v928 = vunpack.c.h.b16 %v824
    %v929 = vunpack.c.l.b16 %v825
    %v930 = vunpack.c.h.b16 %v825
    %v931 = vunpack.c.l.b16 %v826
    %v932 = vunpack.c.h.b16 %v826
    %v933 = vunpack.c.l.b16 %v827
    %v934 = vunpack.c.h.b16 %v827
    %v935 = vunpack.c.l.b16 %v828
    %v936 = vunpack.c.h.b16 %v828
    %v937 = vunpack.c.l.b16 %v829
    %v938 = vunpack.c.h.b16 %v829
    %v939 = vunpack.c.l.b16 %v830
    %v940 = vunpack.c.h.b16 %v830
    %v941 = vunpack.c.l.b16 %v831
    %v942 = vunpack.c.h.b16 %v831
    %v943 = vunpack.c.l.b16 %v832
    %v944 = vunpack.c.h.b16 %v832
    %v945 = vunpack.c.l.b16 %v833
    %v946 = vunpack.c.h.b16 %v833
    %v947 = vunpack.c.l.b16 %v834
    %v948 = vunpack.c.h.b16 %v834
    %v949 = vunpack.c.l.b16 %v835
    %v950 = vunpack.c.h.b16 %v835
    %v951 = vunpack.c.l.b16 %v836
    %v952 = vunpack.c.h.b16 %v836
    %v953 = vunpack.c.l.b16 %v837
    %v954 = vunpack.c.h.b16 %v837
    %v955 = vunpack.c.l.b16 %v838
    %v956 = vunpack.c.h.b16 %v838
    %v957 = vunpack.c.l.b16 %v839
    %v958 = vunpack.c.h.b16 %v839
    %v959 = vunpack.c.l.b16 %v840
    %v960 = vunpack.c.h.b16 %v840
    %v961 = vunpack.c.l.b16 %v841
    %v962 = vunpack.c.h.b16 %v841
    %v963 = vunpack.c.l.b16 %v842
    %v964 = vunpack.c.h.b16 %v842
    %v965 = vunpack.c.l.b16 %v843
    %v966 = vunpack.c.h.b16 %v843
    %v967 = vunpack.c.l.b16 %v844
    %v968 = vunpack.c.h.b16 %v844
    %v969 = vunpack.c.l.b16 %v845
    %v970 = vunpack.c.h.b16 %v845
    %v971 = vunpack.c.l.b16 %v846
    %v972 = vunpack.c.h.b16 %v846
    %v973 = vunpack.c.l.b16 %v847
    %v974 = vunpack.c.h.b16 %v847
    %v975 = vunpack.c.l.b16 %v848
    %v976 = vunpack.c.h.b16 %v848
    %v977 = vunpack.c.l.b16 %v849
    %v978 = vunpack.c.h.b16 %v849
    %v979 = vunpack.c.l.b16 %v850
    %v980 = vunpack.c.h.b16 %v850
    %v981 = vunpack.c.l.b16 %v851
    %v982 = vunpack.c.h.b16 %v851
    %v983 = vunpack.c.l.b16 %v852
    %v984 = vunpack.c.h.b16 %v852
    %v985 = vunpack.c.l.b16 %v853
    %v986 = vunpack.c.h.b16 %v853
    %v987 = vunpack.c.l.b16 %v854
    %v988 = vunpack.c.h.b16 %v854
    %v989 = vunpack.c.l.b16 %v855
    %v990 = vunpack.c.h.b16 %v855
    %v991 = vunpack.c.l.b16 %v856
    %v992 = vunpack.c.h.b16 %v856
    %v993 = vunpack.c.l.b16 %v857
    %v994 = vunpack.c.h.b16 %v857
    %v995 = vunpack.c.l.b16 %v858
    %v996 = vunpack.c.h.b16 %v858
    %v997 = vunpack.c.l.b16 %v859
    %v998 = vunpack.c.h.b16 %v859
    %v999 = vunpack.c.l.b16 %v860
    %v1000 = vunpack.c.h.b16 %v860
    %v1001 = vunpack.c.l.b16 %v861
    %v1002 = vunpack.c.h.b16 %v861
    %v1003 = vunpack.c.l.b16 %v862
    %v1004 = vunpack.c.h.b16 %v862
    %v1005 = vunpack.c.l.b16 %v863
    %v1006 = vunpack.c.h.b16 %v863
    %v1007 = vunpack.c.l.b16 %v864
    %v1008 = vunpack.c.h.b16 %v864
    %v1009 = vpack.c.b16 %v919, %v913
    %v1010 = vpack.c.b16 %v920, %v914
    %v1011 = vpack.c.b16 %v921, %v915
    %v1012 = vpack.c.b16 %v922, %v916
    %v1013 = vpack.c.b16 %v923, %v917
    %v1014 = vpack.c.b16 %v924, %v918
    %v1015 = vpack.c.b16 %v931, %v925
    %v1016 = vpack.c.b16 %v932, %v926
    %v1017 = vpack.c.b16 %v933, %v927
    %v1018 = vpack.c.b16 %v934, %v928
    %v1019 = vpack.c.b16 %v935, %v929
    %v1020 = vpack.c.b16 %v936, %v930
    %v1021 = vpack.c.b16 %v943, %v937
    %v1022 = vpack.c.b16 %v944, %v938
    %v1023 = vpack.c.b16 %v945, %v939
    %v1024 = vpack.c.b16 %v946, %v940
    %v1025 = vpack.c.b16 %v947, %v941
    %v1026 = vpack.c.b16 %v948, %v942
    %v1027 = vpack.c.b16 %v955, %v949
    %v1028 = vpack.c.b16 %v956, %v950
    %v1029 = vpack.c.b16 %v957, %v951
    %v1030 = vpack.c.b16 %v958, %v952
    %v1031 = vpack.c.b16 %v959, %v953
    %v1032 = vpack.c.b16 %v960, %v954
    %v1033 = vpack.c.b16 %v967, %v961
    %v1034 = vpack.c.b16 %v968, %v962
    %v1035 = vpack.c.b16 %v969, %v963
    %v1036 = vpack.c.b16 %v970, %v964
    %v1037 = vpack.c.b16 %v971, %v965
    %v1038 = vpack.c.b16 %v972, %v966
    %v1039 = vpack.c.b16 %v979, %v973
    %v1040 = vpack.c.b16 %v980, %v974
    %v1041 = vpack.c.b16 %v981, %v975
    %v1042 = vpack.c.b16 %v982, %v976
    %v1043 = vpack.c.b16 %v983, %v977
    %v1044 = vpack.c.b16 %v984, %v978
    %v1045 = vpack.c.b16 %v991, %v985
    %v1046 = vpack.c.b16 %v992, %v986
    %v1047 = vpack.c.b16 %v993, %v987
    %v1048 = vpack.c.b16 %v994, %v988
    %v1049 = vpack.c.b16 %v995, %v989
    %v1050 = vpack.c.b16 %v996, %v990
    %v1051 = vpack.c.b16 %v1003, %v997
    %v1052 = vpack.c.b16 %v1004, %v998
    %v1053 = vpack.c.b16 %v1005, %v999
    %v1054 = vpack.c.b16 %v1006, %v1000
    %v1055 = vpack.c.b16 %v1007, %v1001
    %v1056 = vpack.c.b16 %v1008, %v1002
    %1105 = vmatprep.subr.bf16.mxu0 %v1010
    %1106 = vmatpush1.bf16.msra.mxu0 %v1009
    %1107 = vmatprep.subr.bf16.mxu0 %v1016
    %1108 = vmatpush1.bf16.msra.mxu0 %v1015
    %1109 = vmatprep.subr.bf16.mxu0 %v1022
    %1110 = vmatpush1.bf16.msra.mxu0 %v1021
    %1111 = vmatprep.subr.bf16.mxu0 %v1028
    %1112 = vmatpush1.bf16.msra.mxu0 %v1027
    %1113 = vmatprep.subr.bf16.mxu0 %v1034
    %1114 = vmatpush1.bf16.msra.mxu0 %v1033
    %1115 = vmatprep.subr.bf16.mxu0 %v1040
    %1116 = vmatpush1.bf16.msra.mxu0 %v1039
    %1117 = vmatprep.subr.bf16.mxu0 %v1046
    %1118 = vmatpush1.bf16.msra.mxu0 %v1045
    %1119 = vmatprep.subr.bf16.mxu0 %v1052
    %1120 = vmatpush1.bf16.msra.mxu0 %v1051
    %1121 = vmatprep.subr.bf16.mxu0 0
    %1122 = vmatpush1.bf16.msra.mxu0 0
    %1123 = vmatprep.subr.bf16.mxu0 0
    %1124 = vmatpush1.bf16.msra.mxu0 0
    %1125 = vmatprep.subr.bf16.mxu0 0
    %1126 = vmatpush1.bf16.msra.mxu0 0
    %1127 = vmatprep.subr.bf16.mxu0 0
    %1128 = vmatpush1.bf16.msra.mxu0 0
    %1129 = vmatprep.subr.bf16.mxu0 0
    %1130 = vmatpush1.bf16.msra.mxu0 0
    %1131 = vmatprep.subr.bf16.mxu0 0
    %1132 = vmatpush1.bf16.msra.mxu0 0
    %1133 = vmatprep.subr.bf16.mxu0 0
    %1134 = vmatpush1.bf16.msra.mxu0 0
    %1135 = vmatprep.subr.bf16.mxu0 0
    %1136 = vmatpush1.bf16.msra.mxu0 0
    %1137 = vmatprep.mubr.bf16.mxu0 0
    %1138 = vmatmul.mubr.bf16.gmra.mrb[0].mxu0 %v816
    %v1139 = vpop.f32.mrb[0].mxu0
    %v1140 = vadd.f32 0.0, %v1139
    %v1141 = vpop.f32.mrb[0].mxu0
    %v1142 = vadd.f32 0.0, %v1141
    %v1143 = vpop.f32.mrb[0].mxu0
    %v1144 = vpop.f32.mrb[0].mxu0
    %1145 = vdwg.mxu0
    %1146 = vmatprep.subr.bf16.mxu0 %v1012
    %1147 = vmatpush1.bf16.msra.mxu0 %v1011
    %1148 = vmatprep.subr.bf16.mxu0 %v1018
    %1149 = vmatpush1.bf16.msra.mxu0 %v1017
    %1150 = vmatprep.subr.bf16.mxu0 %v1024
    %1151 = vmatpush1.bf16.msra.mxu0 %v1023
    %1152 = vmatprep.subr.bf16.mxu0 %v1030
    %1153 = vmatpush1.bf16.msra.mxu0 %v1029
    %1154 = vmatprep.subr.bf16.mxu0 %v1036
    %1155 = vmatpush1.bf16.msra.mxu0 %v1035
    %1156 = vmatprep.subr.bf16.mxu0 %v1042
    %1157 = vmatpush1.bf16.msra.mxu0 %v1041
    %1158 = vmatprep.subr.bf16.mxu0 %v1048
    %1159 = vmatpush1.bf16.msra.mxu0 %v1047
    %1160 = vmatprep.subr.bf16.mxu0 %v1054
    %1161 = vmatpush1.bf16.msra.mxu0 %v1053
    %1162 = vmatprep.subr.bf16.mxu0 0
    %1163 = vmatpush1.bf16.msra.mxu0 0
    %1164 = vmatprep.subr.bf16.mxu0 0
    %1165 = vmatpush1.bf16.msra.mxu0 0
    %1166 = vmatprep.subr.bf16.mxu0 0
    %1167 = vmatpush1.bf16.msra.mxu0 0
    %1168 = vmatprep.subr.bf16.mxu0 0
    %1169 = vmatpush1.bf16.msra.mxu0 0
    %1170 = vmatprep.subr.bf16.mxu0 0
    %1171 = vmatpush1.bf16.msra.mxu0 0
    %1172 = vmatprep.subr.bf16.mxu0 0
    %1173 = vmatpush1.bf16.msra.mxu0 0
    %1174 = vmatprep.subr.bf16.mxu0 0
    %1175 = vmatpush1.bf16.msra.mxu0 0
    %1176 = vmatprep.subr.bf16.mxu0 0
    %1177 = vmatpush1.bf16.msra.mxu0 0
    %1178 = vmatprep.mubr.bf16.mxu0 0
    %1179 = vmatmul.mubr.bf16.gmra.mrb[0].mxu0 %v816
    %v1180 = vpop.f32.mrb[0].mxu0
    %v1181 = vadd.f32 0.0, %v1180
    %v1182 = vpop.f32.mrb[0].mxu0
    %v1183 = vadd.f32 0.0, %v1182
    %v1184 = vpop.f32.mrb[0].mxu0
    %v1185 = vpop.f32.mrb[0].mxu0
    %1186 = vdwg.mxu0
    %1187 = vmatprep.subr.bf16.mxu0 %v1014
    %1188 = vmatpush1.bf16.msra.mxu0 %v1013
    %1189 = vmatprep.subr.bf16.mxu0 %v1020
    %1190 = vmatpush1.bf16.msra.mxu0 %v1019
    %1191 = vmatprep.subr.bf16.mxu0 %v1026
    %1192 = vmatpush1.bf16.msra.mxu0 %v1025
    %1193 = vmatprep.subr.bf16.mxu0 %v1032
    %1194 = vmatpush1.bf16.msra.mxu0 %v1031
    %1195 = vmatprep.subr.bf16.mxu0 %v1038
    %1196 = vmatpush1.bf16.msra.mxu0 %v1037
    %1197 = vmatprep.subr.bf16.mxu0 %v1044
    %1198 = vmatpush1.bf16.msra.mxu0 %v1043
    %1199 = vmatprep.subr.bf16.mxu0 %v1050
    %1200 = vmatpush1.bf16.msra.mxu0 %v1049
    %1201 = vmatprep.subr.bf16.mxu0 %v1056
    %1202 = vmatpush1.bf16.msra.mxu0 %v1055
    %1203 = vmatprep.subr.bf16.mxu0 0
    %1204 = vmatpush1.bf16.msra.mxu0 0
    %1205 = vmatprep.subr.bf16.mxu0 0
    %1206 = vmatpush1.bf16.msra.mxu0 0
    %1207 = vmatprep.subr.bf16.mxu0 0
    %1208 = vmatpush1.bf16.msra.mxu0 0
    %1209 = vmatprep.subr.bf16.mxu0 0
    %1210 = vmatpush1.bf16.msra.mxu0 0
    %1211 = vmatprep.subr.bf16.mxu0 0
    %1212 = vmatpush1.bf16.msra.mxu0 0
    %1213 = vmatprep.subr.bf16.mxu0 0
    %1214 = vmatpush1.bf16.msra.mxu0 0
    %1215 = vmatprep.subr.bf16.mxu0 0
    %1216 = vmatpush1.bf16.msra.mxu0 0
    %1217 = vmatprep.subr.bf16.mxu0 0
    %1218 = vmatpush1.bf16.msra.mxu0 0
    %1219 = vmatprep.mubr.bf16.mxu0 0
    %1220 = vmatmul.mubr.bf16.gmra.mrb[0].mxu0 %v816
    %v1221 = vpop.f32.mrb[0].mxu0
    %v1222 = vadd.f32 0.0, %v1221
    %v1223 = vpop.f32.mrb[0].mxu0
    %v1224 = vadd.f32 0.0, %v1223
    %v1225 = vpop.f32.mrb[0].mxu0
    %v1226 = vpop.f32.mrb[0].mxu0
    %1227 = vdwg.mxu0
    %v1228 = vld [vmem:[%s4] sm:$0x3]
    %v1230 = vlaneseq
    %v1231 = vshrl.u32 %v1230, 7
    %v1232 = vsub.s32 0, %v1231
    %v1233 = vrot.slane %v1228, %v1232
    %v1234 = vlaneseq
    %v1235 = vshrl.u32 %v1234, 7
    %v1236 = vsub.s32 1, %v1235
    %v1237 = vrot.slane %v1228, %v1236
    %v1240 = vadd.f32 %v1222, %v1233
    %v1241 = vadd.f32 %v1224, %v1237
    %1242 = vst [vmem:[#allocation9] sm:$0xff] %v1240
    %1243 = vst [vmem:[#allocation9 + $0x8] sm:$0xff] %v1241
    %v1244 = vld [vmem:[#allocation2 + $0x20] sm:$0xff]
    %v1245 = vld [vmem:[#allocation2 + $0x28] sm:$0xff]
    %v1246 = vld [vmem:[#allocation2 + $0x30] sm:$0xff]
    %v1247 = vld [vmem:[#allocation2 + $0x38] sm:$0xff]
    %v1248 = vadd.f32 %v1244, %v1140
    %v1249 = vadd.f32 %v1245, %v1142
    %v1250 = vadd.f32 %v1246, %v1181
    %v1251 = vadd.f32 %v1247, %v1183
    %v1252 = vxor.u32 %v1248, 2147483648
    %v1253 = vxor.u32 %v1249, 2147483648
    %v1254 = vxor.u32 %v1250, 2147483648
    %v1255 = vmul.f32 %v1252, 1.442695
    %v1256 = vpow.pop %v1255
    %v1257 = vmul.f32 %v1253, 1.442695
    %v1258 = vpow.pop %v1257
    %v1259 = vmul.f32 %v1254, 1.442695
    %v1260 = vpow.pop %v1259
    %v1261 = vadd.f32 %v1256, 1.0
    %v1262 = vadd.f32 %v1258, 1.0
    %v1263 = vadd.f32 %v1260, 1.0
    %v1264 = vrcp.pop %v1261
    %v1265 = vmul.f32 1.0, %v1264
    %v1266 = vrcp.pop %v1262
    %v1267 = vmul.f32 1.0, %v1266
    %v1268 = vrcp.pop %v1263
    %v1269 = vmul.f32 1.0, %v1268
    %v1270 = vtanh.pop %v1251
    %v1271 = vmul.f32 %v1267, %v813
    %v1272 = vmul.f32 %v1265, %v1270
    %v1273 = vadd.f32 %v1271, %v1272
    %v1274 = vtanh.pop %v1273
    %v1275 = vmul.f32 %v1269, %v1274
    %v1276 = vpack.c.bf16 %v1275, %v1275
    %v1277 = vld [vmem:[#allocation8] sm:$0xff]
    %v1278 = vld [vmem:[#allocation8 + $0x8] sm:$0xff]
    %v1279 = vld [vmem:[#allocation8 + $0x10] sm:$0xff]
    %v1280 = vld [vmem:[#allocation8 + $0x18] sm:$0xff]
    %v1281 = vld [vmem:[#allocation8 + $0x20] sm:$0xff]
    %v1282 = vld [vmem:[#allocation8 + $0x28] sm:$0xff]
    %v1283 = vld [vmem:[#allocation8 + $0x30] sm:$0xff]
    %v1284 = vld [vmem:[#allocation8 + $0x38] sm:$0xff]
    %v1285 = vld [vmem:[#allocation8 + $0x40] sm:$0xff]
    %v1286 = vld [vmem:[#allocation8 + $0x48] sm:$0xff]
    %v1287 = vld [vmem:[#allocation8 + $0x50] sm:$0xff]
    %v1288 = vld [vmem:[#allocation8 + $0x58] sm:$0xff]
    %v1289 = vld [vmem:[#allocation8 + $0x60] sm:$0xff]
    %v1290 = vld [vmem:[#allocation8 + $0x68] sm:$0xff]
    %v1291 = vld [vmem:[#allocation8 + $0x70] sm:$0xff]
    %v1292 = vld [vmem:[#allocation8 + $0x78] sm:$0xff]
    %v1293 = vld [vmem:[#allocation8 + $0x80] sm:$0xff]
    %v1294 = vld [vmem:[#allocation8 + $0x88] sm:$0xff]
    %v1295 = vld [vmem:[#allocation8 + $0x90] sm:$0xff]
    %v1296 = vld [vmem:[#allocation8 + $0x98] sm:$0xff]
    %v1297 = vld [vmem:[#allocation8 + $0xa0] sm:$0xff]
    %v1298 = vld [vmem:[#allocation8 + $0xa8] sm:$0xff]
    %v1299 = vld [vmem:[#allocation8 + $0xb0] sm:$0xff]
    %v1300 = vld [vmem:[#allocation8 + $0xb8] sm:$0xff]
    %v1301 = vld [vmem:[#allocation8 + $0xc0] sm:$0xff]
    %v1302 = vld [vmem:[#allocation8 + $0xc8] sm:$0xff]
    %v1303 = vld [vmem:[#allocation8 + $0xd0] sm:$0xff]
    %v1304 = vld [vmem:[#allocation8 + $0xd8] sm:$0xff]
    %v1305 = vld [vmem:[#allocation8 + $0xe0] sm:$0xff]
    %v1306 = vld [vmem:[#allocation8 + $0xe8] sm:$0xff]
    %v1307 = vld [vmem:[#allocation8 + $0xf0] sm:$0xff]
    %v1308 = vld [vmem:[#allocation8 + $0xf8] sm:$0xff]
    %v1309 = vld [vmem:[#allocation8 + $0x100] sm:$0xff]
    %v1310 = vld [vmem:[#allocation8 + $0x108] sm:$0xff]
    %v1311 = vld [vmem:[#allocation8 + $0x110] sm:$0xff]
    %v1312 = vld [vmem:[#allocation8 + $0x118] sm:$0xff]
    %v1313 = vld [vmem:[#allocation8 + $0x120] sm:$0xff]
    %v1314 = vld [vmem:[#allocation8 + $0x128] sm:$0xff]
    %v1315 = vld [vmem:[#allocation8 + $0x130] sm:$0xff]
    %v1316 = vld [vmem:[#allocation8 + $0x138] sm:$0xff]
    %v1317 = vld [vmem:[#allocation8 + $0x140] sm:$0xff]
    %v1318 = vld [vmem:[#allocation8 + $0x148] sm:$0xff]
    %v1319 = vld [vmem:[#allocation8 + $0x150] sm:$0xff]
    %v1320 = vld [vmem:[#allocation8 + $0x158] sm:$0xff]
    %v1321 = vld [vmem:[#allocation8 + $0x160] sm:$0xff]
    %v1322 = vld [vmem:[#allocation8 + $0x168] sm:$0xff]
    %v1323 = vld [vmem:[#allocation8 + $0x170] sm:$0xff]
    %v1324 = vld [vmem:[#allocation8 + $0x178] sm:$0xff]
    %v1373 = vunpack.c.l.b16 %v1277
    %v1374 = vunpack.c.h.b16 %v1277
    %v1375 = vunpack.c.l.b16 %v1278
    %v1376 = vunpack.c.h.b16 %v1278
    %v1377 = vunpack.c.l.b16 %v1279
    %v1378 = vunpack.c.h.b16 %v1279
    %v1379 = vunpack.c.l.b16 %v1280
    %v1380 = vunpack.c.h.b16 %v1280
    %v1381 = vunpack.c.l.b16 %v1281
    %v1382 = vunpack.c.h.b16 %v1281
    %v1383 = vunpack.c.l.b16 %v1282
    %v1384 = vunpack.c.h.b16 %v1282
    %v1385 = vunpack.c.l.b16 %v1283
    %v1386 = vunpack.c.h.b16 %v1283
    %v1387 = vunpack.c.l.b16 %v1284
    %v1388 = vunpack.c.h.b16 %v1284
    %v1389 = vunpack.c.l.b16 %v1285
    %v1390 = vunpack.c.h.b16 %v1285
    %v1391 = vunpack.c.l.b16 %v1286
    %v1392 = vunpack.c.h.b16 %v1286
    %v1393 = vunpack.c.l.b16 %v1287
    %v1394 = vunpack.c.h.b16 %v1287
    %v1395 = vunpack.c.l.b16 %v1288
    %v1396 = vunpack.c.h.b16 %v1288
    %v1397 = vunpack.c.l.b16 %v1289
    %v1398 = vunpack.c.h.b16 %v1289
    %v1399 = vunpack.c.l.b16 %v1290
    %v1400 = vunpack.c.h.b16 %v1290
    %v1401 = vunpack.c.l.b16 %v1291
    %v1402 = vunpack.c.h.b16 %v1291
    %v1403 = vunpack.c.l.b16 %v1292
    %v1404 = vunpack.c.h.b16 %v1292
    %v1405 = vunpack.c.l.b16 %v1293
    %v1406 = vunpack.c.h.b16 %v1293
    %v1407 = vunpack.c.l.b16 %v1294
    %v1408 = vunpack.c.h.b16 %v1294
    %v1409 = vunpack.c.l.b16 %v1295
    %v1410 = vunpack.c.h.b16 %v1295
    %v1411 = vunpack.c.l.b16 %v1296
    %v1412 = vunpack.c.h.b16 %v1296
    %v1413 = vunpack.c.l.b16 %v1297
    %v1414 = vunpack.c.h.b16 %v1297
    %v1415 = vunpack.c.l.b16 %v1298
    %v1416 = vunpack.c.h.b16 %v1298
    %v1417 = vunpack.c.l.b16 %v1299
    %v1418 = vunpack.c.h.b16 %v1299
    %v1419 = vunpack.c.l.b16 %v1300
    %v1420 = vunpack.c.h.b16 %v1300
    %v1421 = vunpack.c.l.b16 %v1301
    %v1422 = vunpack.c.h.b16 %v1301
    %v1423 = vunpack.c.l.b16 %v1302
    %v1424 = vunpack.c.h.b16 %v1302
    %v1425 = vunpack.c.l.b16 %v1303
    %v1426 = vunpack.c.h.b16 %v1303
    %v1427 = vunpack.c.l.b16 %v1304
    %v1428 = vunpack.c.h.b16 %v1304
    %v1429 = vunpack.c.l.b16 %v1305
    %v1430 = vunpack.c.h.b16 %v1305
    %v1431 = vunpack.c.l.b16 %v1306
    %v1432 = vunpack.c.h.b16 %v1306
    %v1433 = vunpack.c.l.b16 %v1307
    %v1434 = vunpack.c.h.b16 %v1307
    %v1435 = vunpack.c.l.b16 %v1308
    %v1436 = vunpack.c.h.b16 %v1308
    %v1437 = vunpack.c.l.b16 %v1309
    %v1438 = vunpack.c.h.b16 %v1309
    %v1439 = vunpack.c.l.b16 %v1310
    %v1440 = vunpack.c.h.b16 %v1310
    %v1441 = vunpack.c.l.b16 %v1311
    %v1442 = vunpack.c.h.b16 %v1311
    %v1443 = vunpack.c.l.b16 %v1312
    %v1444 = vunpack.c.h.b16 %v1312
    %v1445 = vunpack.c.l.b16 %v1313
    %v1446 = vunpack.c.h.b16 %v1313
    %v1447 = vunpack.c.l.b16 %v1314
    %v1448 = vunpack.c.h.b16 %v1314
    %v1449 = vunpack.c.l.b16 %v1315
    %v1450 = vunpack.c.h.b16 %v1315
    %v1451 = vunpack.c.l.b16 %v1316
    %v1452 = vunpack.c.h.b16 %v1316
    %v1453 = vunpack.c.l.b16 %v1317
    %v1454 = vunpack.c.h.b16 %v1317
    %v1455 = vunpack.c.l.b16 %v1318
    %v1456 = vunpack.c.h.b16 %v1318
    %v1457 = vunpack.c.l.b16 %v1319
    %v1458 = vunpack.c.h.b16 %v1319
    %v1459 = vunpack.c.l.b16 %v1320
    %v1460 = vunpack.c.h.b16 %v1320
    %v1461 = vunpack.c.l.b16 %v1321
    %v1462 = vunpack.c.h.b16 %v1321
    %v1463 = vunpack.c.l.b16 %v1322
    %v1464 = vunpack.c.h.b16 %v1322
    %v1465 = vunpack.c.l.b16 %v1323
    %v1466 = vunpack.c.h.b16 %v1323
    %v1467 = vunpack.c.l.b16 %v1324
    %v1468 = vunpack.c.h.b16 %v1324
    %v1469 = vpack.c.b16 %v1379, %v1373
    %v1470 = vpack.c.b16 %v1380, %v1374
    %v1471 = vpack.c.b16 %v1381, %v1375
    %v1472 = vpack.c.b16 %v1382, %v1376
    %v1473 = vpack.c.b16 %v1383, %v1377
    %v1474 = vpack.c.b16 %v1384, %v1378
    %v1475 = vpack.c.b16 %v1391, %v1385
    %v1476 = vpack.c.b16 %v1392, %v1386
    %v1477 = vpack.c.b16 %v1393, %v1387
    %v1478 = vpack.c.b16 %v1394, %v1388
    %v1479 = vpack.c.b16 %v1395, %v1389
    %v1480 = vpack.c.b16 %v1396, %v1390
    %v1481 = vpack.c.b16 %v1403, %v1397
    %v1482 = vpack.c.b16 %v1404, %v1398
    %v1483 = vpack.c.b16 %v1405, %v1399
    %v1484 = vpack.c.b16 %v1406, %v1400
    %v1485 = vpack.c.b16 %v1407, %v1401
    %v1486 = vpack.c.b16 %v1408, %v1402
    %v1487 = vpack.c.b16 %v1415, %v1409
    %v1488 = vpack.c.b16 %v1416, %v1410
    %v1489 = vpack.c.b16 %v1417, %v1411
    %v1490 = vpack.c.b16 %v1418, %v1412
    %v1491 = vpack.c.b16 %v1419, %v1413
    %v1492 = vpack.c.b16 %v1420, %v1414
    %v1493 = vpack.c.b16 %v1427, %v1421
    %v1494 = vpack.c.b16 %v1428, %v1422
    %v1495 = vpack.c.b16 %v1429, %v1423
    %v1496 = vpack.c.b16 %v1430, %v1424
    %v1497 = vpack.c.b16 %v1431, %v1425
    %v1498 = vpack.c.b16 %v1432, %v1426
    %v1499 = vpack.c.b16 %v1439, %v1433
    %v1500 = vpack.c.b16 %v1440, %v1434
    %v1501 = vpack.c.b16 %v1441, %v1435
    %v1502 = vpack.c.b16 %v1442, %v1436
    %v1503 = vpack.c.b16 %v1443, %v1437
    %v1504 = vpack.c.b16 %v1444, %v1438
    %v1505 = vpack.c.b16 %v1451, %v1445
    %v1506 = vpack.c.b16 %v1452, %v1446
    %v1507 = vpack.c.b16 %v1453, %v1447
    %v1508 = vpack.c.b16 %v1454, %v1448
    %v1509 = vpack.c.b16 %v1455, %v1449
    %v1510 = vpack.c.b16 %v1456, %v1450
    %v1511 = vpack.c.b16 %v1463, %v1457
    %v1512 = vpack.c.b16 %v1464, %v1458
    %v1513 = vpack.c.b16 %v1465, %v1459
    %v1514 = vpack.c.b16 %v1466, %v1460
    %v1515 = vpack.c.b16 %v1467, %v1461
    %v1516 = vpack.c.b16 %v1468, %v1462
    %1565 = vmatprep.subr.bf16.mxu0 %v1470
    %1566 = vmatpush1.bf16.msra.mxu0 %v1469
    %1567 = vmatprep.subr.bf16.mxu0 %v1476
    %1568 = vmatpush1.bf16.msra.mxu0 %v1475
    %1569 = vmatprep.subr.bf16.mxu0 %v1482
    %1570 = vmatpush1.bf16.msra.mxu0 %v1481
    %1571 = vmatprep.subr.bf16.mxu0 %v1488
    %1572 = vmatpush1.bf16.msra.mxu0 %v1487
    %1573 = vmatprep.subr.bf16.mxu0 %v1494
    %1574 = vmatpush1.bf16.msra.mxu0 %v1493
    %1575 = vmatprep.subr.bf16.mxu0 %v1500
    %1576 = vmatpush1.bf16.msra.mxu0 %v1499
    %1577 = vmatprep.subr.bf16.mxu0 %v1506
    %1578 = vmatpush1.bf16.msra.mxu0 %v1505
    %1579 = vmatprep.subr.bf16.mxu0 %v1512
    %1580 = vmatpush1.bf16.msra.mxu0 %v1511
    %1581 = vmatprep.subr.bf16.mxu0 0
    %1582 = vmatpush1.bf16.msra.mxu0 0
    %1583 = vmatprep.subr.bf16.mxu0 0
    %1584 = vmatpush1.bf16.msra.mxu0 0
    %1585 = vmatprep.subr.bf16.mxu0 0
    %1586 = vmatpush1.bf16.msra.mxu0 0
    %1587 = vmatprep.subr.bf16.mxu0 0
    %1588 = vmatpush1.bf16.msra.mxu0 0
    %1589 = vmatprep.subr.bf16.mxu0 0
    %1590 = vmatpush1.bf16.msra.mxu0 0
    %1591 = vmatprep.subr.bf16.mxu0 0
    %1592 = vmatpush1.bf16.msra.mxu0 0
    %1593 = vmatprep.subr.bf16.mxu0 0
    %1594 = vmatpush1.bf16.msra.mxu0 0
    %1595 = vmatprep.subr.bf16.mxu0 0
    %1596 = vmatpush1.bf16.msra.mxu0 0
    %1597 = vmatprep.mubr.bf16.mxu0 0
    %1598 = vmatmul.mubr.bf16.gmra.mrb[0].mxu0 %v1276
    %v1599 = vpop.f32.mrb[0].mxu0
    %v1600 = vadd.f32 0.0, %v1599
    %v1601 = vpop.f32.mrb[0].mxu0
    %v1602 = vadd.f32 0.0, %v1601
    %v1603 = vpop.f32.mrb[0].mxu0
    %v1604 = vpop.f32.mrb[0].mxu0
    %1605 = vdwg.mxu0
    %1606 = vmatprep.subr.bf16.mxu0 %v1472
    %1607 = vmatpush1.bf16.msra.mxu0 %v1471
    %1608 = vmatprep.subr.bf16.mxu0 %v1478
    %1609 = vmatpush1.bf16.msra.mxu0 %v1477
    %1610 = vmatprep.subr.bf16.mxu0 %v1484
    %1611 = vmatpush1.bf16.msra.mxu0 %v1483
    %1612 = vmatprep.subr.bf16.mxu0 %v1490
    %1613 = vmatpush1.bf16.msra.mxu0 %v1489
    %1614 = vmatprep.subr.bf16.mxu0 %v1496
    %1615 = vmatpush1.bf16.msra.mxu0 %v1495
    %1616 = vmatprep.subr.bf16.mxu0 %v1502
    %1617 = vmatpush1.bf16.msra.mxu0 %v1501
    %1618 = vmatprep.subr.bf16.mxu0 %v1508
    %1619 = vmatpush1.bf16.msra.mxu0 %v1507
    %1620 = vmatprep.subr.bf16.mxu0 %v1514
    %1621 = vmatpush1.bf16.msra.mxu0 %v1513
    %1622 = vmatprep.subr.bf16.mxu0 0
    %1623 = vmatpush1.bf16.msra.mxu0 0
    %1624 = vmatprep.subr.bf16.mxu0 0
    %1625 = vmatpush1.bf16.msra.mxu0 0
    %1626 = vmatprep.subr.bf16.mxu0 0
    %1627 = vmatpush1.bf16.msra.mxu0 0
    %1628 = vmatprep.subr.bf16.mxu0 0
    %1629 = vmatpush1.bf16.msra.mxu0 0
    %1630 = vmatprep.subr.bf16.mxu0 0
    %1631 = vmatpush1.bf16.msra.mxu0 0
    %1632 = vmatprep.subr.bf16.mxu0 0
    %1633 = vmatpush1.bf16.msra.mxu0 0
    %1634 = vmatprep.subr.bf16.mxu0 0
    %1635 = vmatpush1.bf16.msra.mxu0 0
    %1636 = vmatprep.subr.bf16.mxu0 0
    %1637 = vmatpush1.bf16.msra.mxu0 0
    %1638 = vmatprep.mubr.bf16.mxu0 0
    %1639 = vmatmul.mubr.bf16.gmra.mrb[0].mxu0 %v1276
    %v1640 = vpop.f32.mrb[0].mxu0
    %v1641 = vadd.f32 0.0, %v1640
    %v1642 = vpop.f32.mrb[0].mxu0
    %v1643 = vadd.f32 0.0, %v1642
    %v1644 = vpop.f32.mrb[0].mxu0
    %v1645 = vpop.f32.mrb[0].mxu0
    %1646 = vdwg.mxu0
    %1647 = vmatprep.subr.bf16.mxu0 %v1474
    %1648 = vmatpush1.bf16.msra.mxu0 %v1473
    %1649 = vmatprep.subr.bf16.mxu0 %v1480
    %1650 = vmatpush1.bf16.msra.mxu0 %v1479
    %1651 = vmatprep.subr.bf16.mxu0 %v1486
    %1652 = vmatpush1.bf16.msra.mxu0 %v1485
    %1653 = vmatprep.subr.bf16.mxu0 %v1492
    %1654 = vmatpush1.bf16.msra.mxu0 %v1491
    %1655 = vmatprep.subr.bf16.mxu0 %v1498
    %1656 = vmatpush1.bf16.msra.mxu0 %v1497
    %1657 = vmatprep.subr.bf16.mxu0 %v1504
    %1658 = vmatpush1.bf16.msra.mxu0 %v1503
    %1659 = vmatprep.subr.bf16.mxu0 %v1510
    %1660 = vmatpush1.bf16.msra.mxu0 %v1509
    %1661 = vmatprep.subr.bf16.mxu0 %v1516
    %1662 = vmatpush1.bf16.msra.mxu0 %v1515
    %1663 = vmatprep.subr.bf16.mxu0 0
    %1664 = vmatpush1.bf16.msra.mxu0 0
    %1665 = vmatprep.subr.bf16.mxu0 0
    %1666 = vmatpush1.bf16.msra.mxu0 0
    %1667 = vmatprep.subr.bf16.mxu0 0
    %1668 = vmatpush1.bf16.msra.mxu0 0
    %1669 = vmatprep.subr.bf16.mxu0 0
    %1670 = vmatpush1.bf16.msra.mxu0 0
    %1671 = vmatprep.subr.bf16.mxu0 0
    %1672 = vmatpush1.bf16.msra.mxu0 0
    %1673 = vmatprep.subr.bf16.mxu0 0
    %1674 = vmatpush1.bf16.msra.mxu0 0
    %1675 = vmatprep.subr.bf16.mxu0 0
    %1676 = vmatpush1.bf16.msra.mxu0 0
    %1677 = vmatprep.subr.bf16.mxu0 0
    %1678 = vmatpush1.bf16.msra.mxu0 0
    %1679 = vmatprep.mubr.bf16.mxu0 0
    %1680 = vmatmul.mubr.bf16.gmra.mrb[0].mxu0 %v1276
    %v1681 = vpop.f32.mrb[0].mxu0
    %v1682 = vadd.f32 0.0, %v1681
    %v1683 = vpop.f32.mrb[0].mxu0
    %v1684 = vadd.f32 0.0, %v1683
    %v1685 = vpop.f32.mrb[0].mxu0
    %v1686 = vpop.f32.mrb[0].mxu0
    %1687 = vdwg.mxu0
    %v1688 = vld [vmem:[%s4] sm:$0x3]
    %v1690 = vlaneseq
    %v1691 = vshrl.u32 %v1690, 7
    %v1692 = vsub.s32 0, %v1691
    %v1693 = vrot.slane %v1688, %v1692
    %v1694 = vlaneseq
    %v1695 = vshrl.u32 %v1694, 7
    %v1696 = vsub.s32 1, %v1695
    %v1697 = vrot.slane %v1688, %v1696
    %v1700 = vadd.f32 %v1682, %v1693
    %v1701 = vadd.f32 %v1684, %v1697
    %1702 = vst [vmem:[#allocation9 + $0x10] sm:$0xff] %v1700
    %1703 = vst [vmem:[#allocation9 + $0x18] sm:$0xff] %v1701
    %v1704 = vld [vmem:[#allocation2 + $0x40] sm:$0xff]
    %v1705 = vld [vmem:[#allocation2 + $0x48] sm:$0xff]
    %v1706 = vld [vmem:[#allocation2 + $0x50] sm:$0xff]
    %v1707 = vld [vmem:[#allocation2 + $0x58] sm:$0xff]
    %v1708 = vadd.f32 %v1704, %v1600
    %v1709 = vadd.f32 %v1705, %v1602
    %v1710 = vadd.f32 %v1706, %v1641
    %v1711 = vadd.f32 %v1707, %v1643
    %v1712 = vxor.u32 %v1708, 2147483648
    %v1713 = vxor.u32 %v1709, 2147483648
    %v1714 = vxor.u32 %v1710, 2147483648
    %v1715 = vmul.f32 %v1712, 1.442695
    %v1716 = vpow.pop %v1715
    %v1717 = vmul.f32 %v1713, 1.442695
    %v1718 = vpow.pop %v1717
    %v1719 = vmul.f32 %v1714, 1.442695
    %v1720 = vpow.pop %v1719
    %v1721 = vadd.f32 %v1716, 1.0
    %v1722 = vadd.f32 %v1718, 1.0
    %v1723 = vadd.f32 %v1720, 1.0
    %v1724 = vrcp.pop %v1721
    %v1725 = vmul.f32 1.0, %v1724
    %v1726 = vrcp.pop %v1722
    %v1727 = vmul.f32 1.0, %v1726
    %v1728 = vrcp.pop %v1723
    %v1729 = vmul.f32 1.0, %v1728
    %v1730 = vtanh.pop %v1711
    %v1731 = vmul.f32 %v1727, %v1273
    %v1732 = vmul.f32 %v1725, %v1730
    %v1733 = vadd.f32 %v1731, %v1732
    %v1734 = vtanh.pop %v1733
    %v1735 = vmul.f32 %v1729, %v1734
    %v1736 = vpack.c.bf16 %v1735, %v1735
    %v1737 = vld [vmem:[#allocation8] sm:$0xff]
    %v1738 = vld [vmem:[#allocation8 + $0x8] sm:$0xff]
    %v1739 = vld [vmem:[#allocation8 + $0x10] sm:$0xff]
    %v1740 = vld [vmem:[#allocation8 + $0x18] sm:$0xff]
    %v1741 = vld [vmem:[#allocation8 + $0x20] sm:$0xff]
    %v1742 = vld [vmem:[#allocation8 + $0x28] sm:$0xff]
    %v1743 = vld [vmem:[#allocation8 + $0x30] sm:$0xff]
    %v1744 = vld [vmem:[#allocation8 + $0x38] sm:$0xff]
    %v1745 = vld [vmem:[#allocation8 + $0x40] sm:$0xff]
    %v1746 = vld [vmem:[#allocation8 + $0x48] sm:$0xff]
    %v1747 = vld [vmem:[#allocation8 + $0x50] sm:$0xff]
    %v1748 = vld [vmem:[#allocation8 + $0x58] sm:$0xff]
    %v1749 = vld [vmem:[#allocation8 + $0x60] sm:$0xff]
    %v1750 = vld [vmem:[#allocation8 + $0x68] sm:$0xff]
    %v1751 = vld [vmem:[#allocation8 + $0x70] sm:$0xff]
    %v1752 = vld [vmem:[#allocation8 + $0x78] sm:$0xff]
    %v1753 = vld [vmem:[#allocation8 + $0x80] sm:$0xff]
    %v1754 = vld [vmem:[#allocation8 + $0x88] sm:$0xff]
    %v1755 = vld [vmem:[#allocation8 + $0x90] sm:$0xff]
    %v1756 = vld [vmem:[#allocation8 + $0x98] sm:$0xff]
    %v1757 = vld [vmem:[#allocation8 + $0xa0] sm:$0xff]
    %v1758 = vld [vmem:[#allocation8 + $0xa8] sm:$0xff]
    %v1759 = vld [vmem:[#allocation8 + $0xb0] sm:$0xff]
    %v1760 = vld [vmem:[#allocation8 + $0xb8] sm:$0xff]
    %v1761 = vld [vmem:[#allocation8 + $0xc0] sm:$0xff]
    %v1762 = vld [vmem:[#allocation8 + $0xc8] sm:$0xff]
    %v1763 = vld [vmem:[#allocation8 + $0xd0] sm:$0xff]
    %v1764 = vld [vmem:[#allocation8 + $0xd8] sm:$0xff]
    %v1765 = vld [vmem:[#allocation8 + $0xe0] sm:$0xff]
    %v1766 = vld [vmem:[#allocation8 + $0xe8] sm:$0xff]
    %v1767 = vld [vmem:[#allocation8 + $0xf0] sm:$0xff]
    %v1768 = vld [vmem:[#allocation8 + $0xf8] sm:$0xff]
    %v1769 = vld [vmem:[#allocation8 + $0x100] sm:$0xff]
    %v1770 = vld [vmem:[#allocation8 + $0x108] sm:$0xff]
    %v1771 = vld [vmem:[#allocation8 + $0x110] sm:$0xff]
    %v1772 = vld [vmem:[#allocation8 + $0x118] sm:$0xff]
    %v1773 = vld [vmem:[#allocation8 + $0x120] sm:$0xff]
    %v1774 = vld [vmem:[#allocation8 + $0x128] sm:$0xff]
    %v1775 = vld [vmem:[#allocation8 + $0x130] sm:$0xff]
    %v1776 = vld [vmem:[#allocation8 + $0x138] sm:$0xff]
    %v1777 = vld [vmem:[#allocation8 + $0x140] sm:$0xff]
    %v1778 = vld [vmem:[#allocation8 + $0x148] sm:$0xff]
    %v1779 = vld [vmem:[#allocation8 + $0x150] sm:$0xff]
    %v1780 = vld [vmem:[#allocation8 + $0x158] sm:$0xff]
    %v1781 = vld [vmem:[#allocation8 + $0x160] sm:$0xff]
    %v1782 = vld [vmem:[#allocation8 + $0x168] sm:$0xff]
    %v1783 = vld [vmem:[#allocation8 + $0x170] sm:$0xff]
    %v1784 = vld [vmem:[#allocation8 + $0x178] sm:$0xff]
    %v1833 = vunpack.c.l.b16 %v1737
    %v1834 = vunpack.c.h.b16 %v1737
    %v1835 = vunpack.c.l.b16 %v1738
    %v1836 = vunpack.c.h.b16 %v1738
    %v1837 = vunpack.c.l.b16 %v1739
    %v1838 = vunpack.c.h.b16 %v1739
    %v1839 = vunpack.c.l.b16 %v1740
    %v1840 = vunpack.c.h.b16 %v1740
    %v1841 = vunpack.c.l.b16 %v1741
    %v1842 = vunpack.c.h.b16 %v1741
    %v1843 = vunpack.c.l.b16 %v1742
    %v1844 = vunpack.c.h.b16 %v1742
    %v1845 = vunpack.c.l.b16 %v1743
    %v1846 = vunpack.c.h.b16 %v1743
    %v1847 = vunpack.c.l.b16 %v1744
    %v1848 = vunpack.c.h.b16 %v1744
    %v1849 = vunpack.c.l.b16 %v1745
    %v1850 = vunpack.c.h.b16 %v1745
    %v1851 = vunpack.c.l.b16 %v1746
    %v1852 = vunpack.c.h.b16 %v1746
    %v1853 = vunpack.c.l.b16 %v1747
    %v1854 = vunpack.c.h.b16 %v1747
    %v1855 = vunpack.c.l.b16 %v1748
    %v1856 = vunpack.c.h.b16 %v1748
    %v1857 = vunpack.c.l.b16 %v1749
    %v1858 = vunpack.c.h.b16 %v1749
    %v1859 = vunpack.c.l.b16 %v1750
    %v1860 = vunpack.c.h.b16 %v1750
    %v1861 = vunpack.c.l.b16 %v1751
    %v1862 = vunpack.c.h.b16 %v1751
    %v1863 = vunpack.c.l.b16 %v1752
    %v1864 = vunpack.c.h.b16 %v1752
    %v1865 = vunpack.c.l.b16 %v1753
    %v1866 = vunpack.c.h.b16 %v1753
    %v1867 = vunpack.c.l.b16 %v1754
    %v1868 = vunpack.c.h.b16 %v1754
    %v1869 = vunpack.c.l.b16 %v1755
    %v1870 = vunpack.c.h.b16 %v1755
    %v1871 = vunpack.c.l.b16 %v1756
    %v1872 = vunpack.c.h.b16 %v1756
    %v1873 = vunpack.c.l.b16 %v1757
    %v1874 = vunpack.c.h.b16 %v1757
    %v1875 = vunpack.c.l.b16 %v1758
    %v1876 = vunpack.c.h.b16 %v1758
    %v1877 = vunpack.c.l.b16 %v1759
    %v1878 = vunpack.c.h.b16 %v1759
    %v1879 = vunpack.c.l.b16 %v1760
    %v1880 = vunpack.c.h.b16 %v1760
    %v1881 = vunpack.c.l.b16 %v1761
    %v1882 = vunpack.c.h.b16 %v1761
    %v1883 = vunpack.c.l.b16 %v1762
    %v1884 = vunpack.c.h.b16 %v1762
    %v1885 = vunpack.c.l.b16 %v1763
    %v1886 = vunpack.c.h.b16 %v1763
    %v1887 = vunpack.c.l.b16 %v1764
    %v1888 = vunpack.c.h.b16 %v1764
    %v1889 = vunpack.c.l.b16 %v1765
    %v1890 = vunpack.c.h.b16 %v1765
    %v1891 = vunpack.c.l.b16 %v1766
    %v1892 = vunpack.c.h.b16 %v1766
    %v1893 = vunpack.c.l.b16 %v1767
    %v1894 = vunpack.c.h.b16 %v1767
    %v1895 = vunpack.c.l.b16 %v1768
    %v1896 = vunpack.c.h.b16 %v1768
    %v1897 = vunpack.c.l.b16 %v1769
    %v1898 = vunpack.c.h.b16 %v1769
    %v1899 = vunpack.c.l.b16 %v1770
    %v1900 = vunpack.c.h.b16 %v1770
    %v1901 = vunpack.c.l.b16 %v1771
    %v1902 = vunpack.c.h.b16 %v1771
    %v1903 = vunpack.c.l.b16 %v1772
    %v1904 = vunpack.c.h.b16 %v1772
    %v1905 = vunpack.c.l.b16 %v1773
    %v1906 = vunpack.c.h.b16 %v1773
    %v1907 = vunpack.c.l.b16 %v1774
    %v1908 = vunpack.c.h.b16 %v1774
    %v1909 = vunpack.c.l.b16 %v1775
    %v1910 = vunpack.c.h.b16 %v1775
    %v1911 = vunpack.c.l.b16 %v1776
    %v1912 = vunpack.c.h.b16 %v1776
    %v1913 = vunpack.c.l.b16 %v1777
    %v1914 = vunpack.c.h.b16 %v1777
    %v1915 = vunpack.c.l.b16 %v1778
    %v1916 = vunpack.c.h.b16 %v1778
    %v1917 = vunpack.c.l.b16 %v1779
    %v1918 = vunpack.c.h.b16 %v1779
    %v1919 = vunpack.c.l.b16 %v1780
    %v1920 = vunpack.c.h.b16 %v1780
    %v1921 = vunpack.c.l.b16 %v1781
    %v1922 = vunpack.c.h.b16 %v1781
    %v1923 = vunpack.c.l.b16 %v1782
    %v1924 = vunpack.c.h.b16 %v1782
    %v1925 = vunpack.c.l.b16 %v1783
    %v1926 = vunpack.c.h.b16 %v1783
    %v1927 = vunpack.c.l.b16 %v1784
    %v1928 = vunpack.c.h.b16 %v1784
    %v1929 = vpack.c.b16 %v1839, %v1833
    %v1930 = vpack.c.b16 %v1840, %v1834
    %v1931 = vpack.c.b16 %v1841, %v1835
    %v1932 = vpack.c.b16 %v1842, %v1836
    %v1933 = vpack.c.b16 %v1843, %v1837
    %v1934 = vpack.c.b16 %v1844, %v1838
    %v1935 = vpack.c.b16 %v1851, %v1845
    %v1936 = vpack.c.b16 %v1852, %v1846
    %v1937 = vpack.c.b16 %v1853, %v1847
    %v1938 = vpack.c.b16 %v1854, %v1848
    %v1939 = vpack.c.b16 %v1855, %v1849
    %v1940 = vpack.c.b16 %v1856, %v1850
    %v1941 = vpack.c.b16 %v1863, %v1857
    %v1942 = vpack.c.b16 %v1864, %v1858
    %v1943 = vpack.c.b16 %v1865, %v1859
    %v1944 = vpack.c.b16 %v1866, %v1860
    %v1945 = vpack.c.b16 %v1867, %v1861
    %v1946 = vpack.c.b16 %v1868, %v1862
    %v1947 = vpack.c.b16 %v1875, %v1869
    %v1948 = vpack.c.b16 %v1876, %v1870
    %v1949 = vpack.c.b16 %v1877, %v1871
    %v1950 = vpack.c.b16 %v1878, %v1872
    %v1951 = vpack.c.b16 %v1879, %v1873
    %v1952 = vpack.c.b16 %v1880, %v1874
    %v1953 = vpack.c.b16 %v1887, %v1881
    %v1954 = vpack.c.b16 %v1888, %v1882
    %v1955 = vpack.c.b16 %v1889, %v1883
    %v1956 = vpack.c.b16 %v1890, %v1884
    %v1957 = vpack.c.b16 %v1891, %v1885
    %v1958 = vpack.c.b16 %v1892, %v1886
    %v1959 = vpack.c.b16 %v1899, %v1893
    %v1960 = vpack.c.b16 %v1900, %v1894
    %v1961 = vpack.c.b16 %v1901, %v1895
    %v1962 = vpack.c.b16 %v1902, %v1896
    %v1963 = vpack.c.b16 %v1903, %v1897
    %v1964 = vpack.c.b16 %v1904, %v1898
    %v1965 = vpack.c.b16 %v1911, %v1905
    %v1966 = vpack.c.b16 %v1912, %v1906
    %v1967 = vpack.c.b16 %v1913, %v1907
    %v1968 = vpack.c.b16 %v1914, %v1908
    %v1969 = vpack.c.b16 %v1915, %v1909
    %v1970 = vpack.c.b16 %v1916, %v1910
    %v1971 = vpack.c.b16 %v1923, %v1917
    %v1972 = vpack.c.b16 %v1924, %v1918
    %v1973 = vpack.c.b16 %v1925, %v1919
    %v1974 = vpack.c.b16 %v1926, %v1920
    %v1975 = vpack.c.b16 %v1927, %v1921
    %v1976 = vpack.c.b16 %v1928, %v1922
    %2025 = vmatprep.subr.bf16.mxu0 %v1930
    %2026 = vmatpush1.bf16.msra.mxu0 %v1929
    %2027 = vmatprep.subr.bf16.mxu0 %v1936
    %2028 = vmatpush1.bf16.msra.mxu0 %v1935
    %2029 = vmatprep.subr.bf16.mxu0 %v1942
    %2030 = vmatpush1.bf16.msra.mxu0 %v1941
    %2031 = vmatprep.subr.bf16.mxu0 %v1948
    %2032 = vmatpush1.bf16.msra.mxu0 %v1947
    %2033 = vmatprep.subr.bf16.mxu0 %v1954
    %2034 = vmatpush1.bf16.msra.mxu0 %v1953
    %2035 = vmatprep.subr.bf16.mxu0 %v1960
    %2036 = vmatpush1.bf16.msra.mxu0 %v1959
    %2037 = vmatprep.subr.bf16.mxu0 %v1966
    %2038 = vmatpush1.bf16.msra.mxu0 %v1965
    %2039 = vmatprep.subr.bf16.mxu0 %v1972
    %2040 = vmatpush1.bf16.msra.mxu0 %v1971
    %2041 = vmatprep.subr.bf16.mxu0 0
    %2042 = vmatpush1.bf16.msra.mxu0 0
    %2043 = vmatprep.subr.bf16.mxu0 0
    %2044 = vmatpush1.bf16.msra.mxu0 0
    %2045 = vmatprep.subr.bf16.mxu0 0
    %2046 = vmatpush1.bf16.msra.mxu0 0
    %2047 = vmatprep.subr.bf16.mxu0 0
    %2048 = vmatpush1.bf16.msra.mxu0 0
    %2049 = vmatprep.subr.bf16.mxu0 0
    %2050 = vmatpush1.bf16.msra.mxu0 0
    %2051 = vmatprep.subr.bf16.mxu0 0
    %2052 = vmatpush1.bf16.msra.mxu0 0
    %2053 = vmatprep.subr.bf16.mxu0 0
    %2054 = vmatpush1.bf16.msra.mxu0 0
    %2055 = vmatprep.subr.bf16.mxu0 0
    %2056 = vmatpush1.bf16.msra.mxu0 0
    %2057 = vmatprep.mubr.bf16.mxu0 0
    %2058 = vmatmul.mubr.bf16.gmra.mrb[0].mxu0 %v1736
    %v2059 = vpop.f32.mrb[0].mxu0
    %v2060 = vadd.f32 0.0, %v2059
    %v2061 = vpop.f32.mrb[0].mxu0
    %v2062 = vadd.f32 0.0, %v2061
    %v2063 = vpop.f32.mrb[0].mxu0
    %v2064 = vpop.f32.mrb[0].mxu0
    %2065 = vdwg.mxu0
    %2066 = vmatprep.subr.bf16.mxu0 %v1932
    %2067 = vmatpush1.bf16.msra.mxu0 %v1931
    %2068 = vmatprep.subr.bf16.mxu0 %v1938
    %2069 = vmatpush1.bf16.msra.mxu0 %v1937
    %2070 = vmatprep.subr.bf16.mxu0 %v1944
    %2071 = vmatpush1.bf16.msra.mxu0 %v1943
    %2072 = vmatprep.subr.bf16.mxu0 %v1950
    %2073 = vmatpush1.bf16.msra.mxu0 %v1949
    %2074 = vmatprep.subr.bf16.mxu0 %v1956
    %2075 = vmatpush1.bf16.msra.mxu0 %v1955
    %2076 = vmatprep.subr.bf16.mxu0 %v1962
    %2077 = vmatpush1.bf16.msra.mxu0 %v1961
    %2078 = vmatprep.subr.bf16.mxu0 %v1968
    %2079 = vmatpush1.bf16.msra.mxu0 %v1967
    %2080 = vmatprep.subr.bf16.mxu0 %v1974
    %2081 = vmatpush1.bf16.msra.mxu0 %v1973
    %2082 = vmatprep.subr.bf16.mxu0 0
    %2083 = vmatpush1.bf16.msra.mxu0 0
    %2084 = vmatprep.subr.bf16.mxu0 0
    %2085 = vmatpush1.bf16.msra.mxu0 0
    %2086 = vmatprep.subr.bf16.mxu0 0
    %2087 = vmatpush1.bf16.msra.mxu0 0
    %2088 = vmatprep.subr.bf16.mxu0 0
    %2089 = vmatpush1.bf16.msra.mxu0 0
    %2090 = vmatprep.subr.bf16.mxu0 0
    %2091 = vmatpush1.bf16.msra.mxu0 0
    %2092 = vmatprep.subr.bf16.mxu0 0
    %2093 = vmatpush1.bf16.msra.mxu0 0
    %2094 = vmatprep.subr.bf16.mxu0 0
    %2095 = vmatpush1.bf16.msra.mxu0 0
    %2096 = vmatprep.subr.bf16.mxu0 0
    %2097 = vmatpush1.bf16.msra.mxu0 0
    %2098 = vmatprep.mubr.bf16.mxu0 0
    %2099 = vmatmul.mubr.bf16.gmra.mrb[0].mxu0 %v1736
    %v2100 = vpop.f32.mrb[0].mxu0
    %v2101 = vadd.f32 0.0, %v2100
    %v2102 = vpop.f32.mrb[0].mxu0
    %v2103 = vadd.f32 0.0, %v2102
    %v2104 = vpop.f32.mrb[0].mxu0
    %v2105 = vpop.f32.mrb[0].mxu0
    %2106 = vdwg.mxu0
    %2107 = vmatprep.subr.bf16.mxu0 %v1934
    %2108 = vmatpush1.bf16.msra.mxu0 %v1933
    %2109 = vmatprep.subr.bf16.mxu0 %v1940
    %2110 = vmatpush1.bf16.msra.mxu0 %v1939
    %2111 = vmatprep.subr.bf16.mxu0 %v1946
    %2112 = vmatpush1.bf16.msra.mxu0 %v1945
    %2113 = vmatprep.subr.bf16.mxu0 %v1952
    %2114 = vmatpush1.bf16.msra.mxu0 %v1951
    %2115 = vmatprep.subr.bf16.mxu0 %v1958
    %2116 = vmatpush1.bf16.msra.mxu0 %v1957
    %2117 = vmatprep.subr.bf16.mxu0 %v1964
    %2118 = vmatpush1.bf16.msra.mxu0 %v1963
    %2119 = vmatprep.subr.bf16.mxu0 %v1970
    %2120 = vmatpush1.bf16.msra.mxu0 %v1969
    %2121 = vmatprep.subr.bf16.mxu0 %v1976
    %2122 = vmatpush1.bf16.msra.mxu0 %v1975
    %2123 = vmatprep.subr.bf16.mxu0 0
    %2124 = vmatpush1.bf16.msra.mxu0 0
    %2125 = vmatprep.subr.bf16.mxu0 0
    %2126 = vmatpush1.bf16.msra.mxu0 0
    %2127 = vmatprep.subr.bf16.mxu0 0
    %2128 = vmatpush1.bf16.msra.mxu0 0
    %2129 = vmatprep.subr.bf16.mxu0 0
    %2130 = vmatpush1.bf16.msra.mxu0 0
    %2131 = vmatprep.subr.bf16.mxu0 0
    %2132 = vmatpush1.bf16.msra.mxu0 0
    %2133 = vmatprep.subr.bf16.mxu0 0
    %2134 = vmatpush1.bf16.msra.mxu0 0
    %2135 = vmatprep.subr.bf16.mxu0 0
    %2136 = vmatpush1.bf16.msra.mxu0 0
    %2137 = vmatprep.subr.bf16.mxu0 0
    %2138 = vmatpush1.bf16.msra.mxu0 0
    %2139 = vmatprep.mubr.bf16.mxu0 0
    %2140 = vmatmul.mubr.bf16.gmra.mrb[0].mxu0 %v1736
    %v2141 = vpop.f32.mrb[0].mxu0
    %v2142 = vadd.f32 0.0, %v2141
    %v2143 = vpop.f32.mrb[0].mxu0
    %v2144 = vadd.f32 0.0, %v2143
    %v2145 = vpop.f32.mrb[0].mxu0
    %v2146 = vpop.f32.mrb[0].mxu0
    %2147 = vdwg.mxu0
    %v2148 = vld [vmem:[%s4] sm:$0x3]
    %v2150 = vlaneseq
    %v2151 = vshrl.u32 %v2150, 7
    %v2152 = vsub.s32 0, %v2151
    %v2153 = vrot.slane %v2148, %v2152
    %v2154 = vlaneseq
    %v2155 = vshrl.u32 %v2154, 7
    %v2156 = vsub.s32 1, %v2155
    %v2157 = vrot.slane %v2148, %v2156
    %v2160 = vadd.f32 %v2142, %v2153
    %v2161 = vadd.f32 %v2144, %v2157
    %2162 = vst [vmem:[#allocation9 + $0x20] sm:$0xff] %v2160
    %2163 = vst [vmem:[#allocation9 + $0x28] sm:$0xff] %v2161
    %v2164 = vld [vmem:[#allocation2 + $0x60] sm:$0xff]
    %v2165 = vld [vmem:[#allocation2 + $0x68] sm:$0xff]
    %v2166 = vld [vmem:[#allocation2 + $0x70] sm:$0xff]
    %v2167 = vld [vmem:[#allocation2 + $0x78] sm:$0xff]
    %v2168 = vadd.f32 %v2164, %v2060
    %v2169 = vadd.f32 %v2165, %v2062
    %v2170 = vadd.f32 %v2166, %v2101
    %v2171 = vadd.f32 %v2167, %v2103
    %v2172 = vxor.u32 %v2168, 2147483648
    %v2173 = vxor.u32 %v2169, 2147483648
    %v2174 = vxor.u32 %v2170, 2147483648
    %v2175 = vmul.f32 %v2172, 1.442695
    %v2176 = vpow.pop %v2175
    %v2177 = vmul.f32 %v2173, 1.442695
    %v2178 = vpow.pop %v2177
    %v2179 = vmul.f32 %v2174, 1.442695
    %v2180 = vpow.pop %v2179
    %v2181 = vadd.f32 %v2176, 1.0
    %v2182 = vadd.f32 %v2178, 1.0
    %v2183 = vadd.f32 %v2180, 1.0
    %v2184 = vrcp.pop %v2181
    %v2185 = vmul.f32 1.0, %v2184
    %v2186 = vrcp.pop %v2182
    %v2187 = vmul.f32 1.0, %v2186
    %v2188 = vrcp.pop %v2183
    %v2189 = vmul.f32 1.0, %v2188
    %v2190 = vtanh.pop %v2171
    %v2191 = vmul.f32 %v2187, %v1733
    %v2192 = vmul.f32 %v2185, %v2190
    %v2193 = vadd.f32 %v2191, %v2192
    %v2194 = vtanh.pop %v2193
    %v2195 = vmul.f32 %v2189, %v2194
    %v2196 = vpack.c.bf16 %v2195, %v2195
    %v2197 = vld [vmem:[#allocation8] sm:$0xff]
    %v2198 = vld [vmem:[#allocation8 + $0x8] sm:$0xff]
    %v2199 = vld [vmem:[#allocation8 + $0x10] sm:$0xff]
    %v2200 = vld [vmem:[#allocation8 + $0x18] sm:$0xff]
    %v2201 = vld [vmem:[#allocation8 + $0x20] sm:$0xff]
    %v2202 = vld [vmem:[#allocation8 + $0x28] sm:$0xff]
    %v2203 = vld [vmem:[#allocation8 + $0x30] sm:$0xff]
    %v2204 = vld [vmem:[#allocation8 + $0x38] sm:$0xff]
    %v2205 = vld [vmem:[#allocation8 + $0x40] sm:$0xff]
    %v2206 = vld [vmem:[#allocation8 + $0x48] sm:$0xff]
    %v2207 = vld [vmem:[#allocation8 + $0x50] sm:$0xff]
    %v2208 = vld [vmem:[#allocation8 + $0x58] sm:$0xff]
    %v2209 = vld [vmem:[#allocation8 + $0x60] sm:$0xff]
    %v2210 = vld [vmem:[#allocation8 + $0x68] sm:$0xff]
    %v2211 = vld [vmem:[#allocation8 + $0x70] sm:$0xff]
    %v2212 = vld [vmem:[#allocation8 + $0x78] sm:$0xff]
    %v2213 = vld [vmem:[#allocation8 + $0x80] sm:$0xff]
    %v2214 = vld [vmem:[#allocation8 + $0x88] sm:$0xff]
    %v2215 = vld [vmem:[#allocation8 + $0x90] sm:$0xff]
    %v2216 = vld [vmem:[#allocation8 + $0x98] sm:$0xff]
    %v2217 = vld [vmem:[#allocation8 + $0xa0] sm:$0xff]
    %v2218 = vld [vmem:[#allocation8 + $0xa8] sm:$0xff]
    %v2219 = vld [vmem:[#allocation8 + $0xb0] sm:$0xff]
    %v2220 = vld [vmem:[#allocation8 + $0xb8] sm:$0xff]
    %v2221 = vld [vmem:[#allocation8 + $0xc0] sm:$0xff]
    %v2222 = vld [vmem:[#allocation8 + $0xc8] sm:$0xff]
    %v2223 = vld [vmem:[#allocation8 + $0xd0] sm:$0xff]
    %v2224 = vld [vmem:[#allocation8 + $0xd8] sm:$0xff]
    %v2225 = vld [vmem:[#allocation8 + $0xe0] sm:$0xff]
    %v2226 = vld [vmem:[#allocation8 + $0xe8] sm:$0xff]
    %v2227 = vld [vmem:[#allocation8 + $0xf0] sm:$0xff]
    %v2228 = vld [vmem:[#allocation8 + $0xf8] sm:$0xff]
    %v2229 = vld [vmem:[#allocation8 + $0x100] sm:$0xff]
    %v2230 = vld [vmem:[#allocation8 + $0x108] sm:$0xff]
    %v2231 = vld [vmem:[#allocation8 + $0x110] sm:$0xff]
    %v2232 = vld [vmem:[#allocation8 + $0x118] sm:$0xff]
    %v2233 = vld [vmem:[#allocation8 + $0x120] sm:$0xff]
    %v2234 = vld [vmem:[#allocation8 + $0x128] sm:$0xff]
    %v2235 = vld [vmem:[#allocation8 + $0x130] sm:$0xff]
    %v2236 = vld [vmem:[#allocation8 + $0x138] sm:$0xff]
    %v2237 = vld [vmem:[#allocation8 + $0x140] sm:$0xff]
    %v2238 = vld [vmem:[#allocation8 + $0x148] sm:$0xff]
    %v2239 = vld [vmem:[#allocation8 + $0x150] sm:$0xff]
    %v2240 = vld [vmem:[#allocation8 + $0x158] sm:$0xff]
    %v2241 = vld [vmem:[#allocation8 + $0x160] sm:$0xff]
    %v2242 = vld [vmem:[#allocation8 + $0x168] sm:$0xff]
    %v2243 = vld [vmem:[#allocation8 + $0x170] sm:$0xff]
    %v2244 = vld [vmem:[#allocation8 + $0x178] sm:$0xff]
    %v2293 = vunpack.c.l.b16 %v2197
    %v2294 = vunpack.c.h.b16 %v2197
    %v2295 = vunpack.c.l.b16 %v2198
    %v2296 = vunpack.c.h.b16 %v2198
    %v2297 = vunpack.c.l.b16 %v2199
    %v2298 = vunpack.c.h.b16 %v2199
    %v2299 = vunpack.c.l.b16 %v2200
    %v2300 = vunpack.c.h.b16 %v2200
    %v2301 = vunpack.c.l.b16 %v2201
    %v2302 = vunpack.c.h.b16 %v2201
    %v2303 = vunpack.c.l.b16 %v2202
    %v2304 = vunpack.c.h.b16 %v2202
    %v2305 = vunpack.c.l.b16 %v2203
    %v2306 = vunpack.c.h.b16 %v2203
    %v2307 = vunpack.c.l.b16 %v2204
    %v2308 = vunpack.c.h.b16 %v2204
    %v2309 = vunpack.c.l.b16 %v2205
    %v2310 = vunpack.c.h.b16 %v2205
    %v2311 = vunpack.c.l.b16 %v2206
    %v2312 = vunpack.c.h.b16 %v2206
    %v2313 = vunpack.c.l.b16 %v2207
    %v2314 = vunpack.c.h.b16 %v2207
    %v2315 = vunpack.c.l.b16 %v2208
    %v2316 = vunpack.c.h.b16 %v2208
    %v2317 = vunpack.c.l.b16 %v2209
    %v2318 = vunpack.c.h.b16 %v2209
    %v2319 = vunpack.c.l.b16 %v2210
    %v2320 = vunpack.c.h.b16 %v2210
    %v2321 = vunpack.c.l.b16 %v2211
    %v2322 = vunpack.c.h.b16 %v2211
    %v2323 = vunpack.c.l.b16 %v2212
    %v2324 = vunpack.c.h.b16 %v2212
    %v2325 = vunpack.c.l.b16 %v2213
    %v2326 = vunpack.c.h.b16 %v2213
    %v2327 = vunpack.c.l.b16 %v2214
    %v2328 = vunpack.c.h.b16 %v2214
    %v2329 = vunpack.c.l.b16 %v2215
    %v2330 = vunpack.c.h.b16 %v2215
    %v2331 = vunpack.c.l.b16 %v2216
    %v2332 = vunpack.c.h.b16 %v2216
    %v2333 = vunpack.c.l.b16 %v2217
    %v2334 = vunpack.c.h.b16 %v2217
    %v2335 = vunpack.c.l.b16 %v2218
    %v2336 = vunpack.c.h.b16 %v2218
    %v2337 = vunpack.c.l.b16 %v2219
    %v2338 = vunpack.c.h.b16 %v2219
    %v2339 = vunpack.c.l.b16 %v2220
    %v2340 = vunpack.c.h.b16 %v2220
    %v2341 = vunpack.c.l.b16 %v2221
    %v2342 = vunpack.c.h.b16 %v2221
    %v2343 = vunpack.c.l.b16 %v2222
    %v2344 = vunpack.c.h.b16 %v2222
    %v2345 = vunpack.c.l.b16 %v2223
    %v2346 = vunpack.c.h.b16 %v2223
    %v2347 = vunpack.c.l.b16 %v2224
    %v2348 = vunpack.c.h.b16 %v2224
    %v2349 = vunpack.c.l.b16 %v2225
    %v2350 = vunpack.c.h.b16 %v2225
    %v2351 = vunpack.c.l.b16 %v2226
    %v2352 = vunpack.c.h.b16 %v2226
    %v2353 = vunpack.c.l.b16 %v2227
    %v2354 = vunpack.c.h.b16 %v2227
    %v2355 = vunpack.c.l.b16 %v2228
    %v2356 = vunpack.c.h.b16 %v2228
    %v2357 = vunpack.c.l.b16 %v2229
    %v2358 = vunpack.c.h.b16 %v2229
    %v2359 = vunpack.c.l.b16 %v2230
    %v2360 = vunpack.c.h.b16 %v2230
    %v2361 = vunpack.c.l.b16 %v2231
    %v2362 = vunpack.c.h.b16 %v2231
    %v2363 = vunpack.c.l.b16 %v2232
    %v2364 = vunpack.c.h.b16 %v2232
    %v2365 = vunpack.c.l.b16 %v2233
    %v2366 = vunpack.c.h.b16 %v2233
    %v2367 = vunpack.c.l.b16 %v2234
    %v2368 = vunpack.c.h.b16 %v2234
    %v2369 = vunpack.c.l.b16 %v2235
    %v2370 = vunpack.c.h.b16 %v2235
    %v2371 = vunpack.c.l.b16 %v2236
    %v2372 = vunpack.c.h.b16 %v2236
    %v2373 = vunpack.c.l.b16 %v2237
    %v2374 = vunpack.c.h.b16 %v2237
    %v2375 = vunpack.c.l.b16 %v2238
    %v2376 = vunpack.c.h.b16 %v2238
    %v2377 = vunpack.c.l.b16 %v2239
    %v2378 = vunpack.c.h.b16 %v2239
    %v2379 = vunpack.c.l.b16 %v2240
    %v2380 = vunpack.c.h.b16 %v2240
    %v2381 = vunpack.c.l.b16 %v2241
    %v2382 = vunpack.c.h.b16 %v2241
    %v2383 = vunpack.c.l.b16 %v2242
    %v2384 = vunpack.c.h.b16 %v2242
    %v2385 = vunpack.c.l.b16 %v2243
    %v2386 = vunpack.c.h.b16 %v2243
    %v2387 = vunpack.c.l.b16 %v2244
    %v2388 = vunpack.c.h.b16 %v2244
    %v2389 = vpack.c.b16 %v2299, %v2293
    %v2390 = vpack.c.b16 %v2300, %v2294
    %v2391 = vpack.c.b16 %v2301, %v2295
    %v2392 = vpack.c.b16 %v2302, %v2296
    %v2393 = vpack.c.b16 %v2303, %v2297
    %v2394 = vpack.c.b16 %v2304, %v2298
    %v2395 = vpack.c.b16 %v2311, %v2305
    %v2396 = vpack.c.b16 %v2312, %v2306
    %v2397 = vpack.c.b16 %v2313, %v2307
    %v2398 = vpack.c.b16 %v2314, %v2308
    %v2399 = vpack.c.b16 %v2315, %v2309
    %v2400 = vpack.c.b16 %v2316, %v2310
    %v2401 = vpack.c.b16 %v2323, %v2317
    %v2402 = vpack.c.b16 %v2324, %v2318
    %v2403 = vpack.c.b16 %v2325, %v2319
    %v2404 = vpack.c.b16 %v2326, %v2320
    %v2405 = vpack.c.b16 %v2327, %v2321
    %v2406 = vpack.c.b16 %v2328, %v2322
    %v2407 = vpack.c.b16 %v2335, %v2329
    %v2408 = vpack.c.b16 %v2336, %v2330
    %v2409 = vpack.c.b16 %v2337, %v2331
    %v2410 = vpack.c.b16 %v2338, %v2332
    %v2411 = vpack.c.b16 %v2339, %v2333
    %v2412 = vpack.c.b16 %v2340, %v2334
    %v2413 = vpack.c.b16 %v2347, %v2341
    %v2414 = vpack.c.b16 %v2348, %v2342
    %v2415 = vpack.c.b16 %v2349, %v2343
    %v2416 = vpack.c.b16 %v2350, %v2344
    %v2417 = vpack.c.b16 %v2351, %v2345
    %v2418 = vpack.c.b16 %v2352, %v2346
    %v2419 = vpack.c.b16 %v2359, %v2353
    %v2420 = vpack.c.b16 %v2360, %v2354
    %v2421 = vpack.c.b16 %v2361, %v2355
    %v2422 = vpack.c.b16 %v2362, %v2356
    %v2423 = vpack.c.b16 %v2363, %v2357
    %v2424 = vpack.c.b16 %v2364, %v2358
    %v2425 = vpack.c.b16 %v2371, %v2365
    %v2426 = vpack.c.b16 %v2372, %v2366
    %v2427 = vpack.c.b16 %v2373, %v2367
    %v2428 = vpack.c.b16 %v2374, %v2368
    %v2429 = vpack.c.b16 %v2375, %v2369
    %v2430 = vpack.c.b16 %v2376, %v2370
    %v2431 = vpack.c.b16 %v2383, %v2377
    %v2432 = vpack.c.b16 %v2384, %v2378
    %v2433 = vpack.c.b16 %v2385, %v2379
    %v2434 = vpack.c.b16 %v2386, %v2380
    %v2435 = vpack.c.b16 %v2387, %v2381
    %v2436 = vpack.c.b16 %v2388, %v2382
    %2485 = vmatprep.subr.bf16.mxu0 %v2390
    %2486 = vmatpush1.bf16.msra.mxu0 %v2389
    %2487 = vmatprep.subr.bf16.mxu0 %v2396
    %2488 = vmatpush1.bf16.msra.mxu0 %v2395
    %2489 = vmatprep.subr.bf16.mxu0 %v2402
    %2490 = vmatpush1.bf16.msra.mxu0 %v2401
    %2491 = vmatprep.subr.bf16.mxu0 %v2408
    %2492 = vmatpush1.bf16.msra.mxu0 %v2407
    %2493 = vmatprep.subr.bf16.mxu0 %v2414
    %2494 = vmatpush1.bf16.msra.mxu0 %v2413
    %2495 = vmatprep.subr.bf16.mxu0 %v2420
    %2496 = vmatpush1.bf16.msra.mxu0 %v2419
    %2497 = vmatprep.subr.bf16.mxu0 %v2426
    %2498 = vmatpush1.bf16.msra.mxu0 %v2425
    %2499 = vmatprep.subr.bf16.mxu0 %v2432
    %2500 = vmatpush1.bf16.msra.mxu0 %v2431
    %2501 = vmatprep.subr.bf16.mxu0 0
    %2502 = vmatpush1.bf16.msra.mxu0 0
    %2503 = vmatprep.subr.bf16.mxu0 0
    %2504 = vmatpush1.bf16.msra.mxu0 0
    %2505 = vmatprep.subr.bf16.mxu0 0
    %2506 = vmatpush1.bf16.msra.mxu0 0
    %2507 = vmatprep.subr.bf16.mxu0 0
    %2508 = vmatpush1.bf16.msra.mxu0 0
    %2509 = vmatprep.subr.bf16.mxu0 0
    %2510 = vmatpush1.bf16.msra.mxu0 0
    %2511 = vmatprep.subr.bf16.mxu0 0
    %2512 = vmatpush1.bf16.msra.mxu0 0
    %2513 = vmatprep.subr.bf16.mxu0 0
    %2514 = vmatpush1.bf16.msra.mxu0 0
    %2515 = vmatprep.subr.bf16.mxu0 0
    %2516 = vmatpush1.bf16.msra.mxu0 0
    %2517 = vmatprep.mubr.bf16.mxu0 0
    %2518 = vmatmul.mubr.bf16.gmra.mrb[0].mxu0 %v2196
    %v2519 = vpop.f32.mrb[0].mxu0
    %v2520 = vadd.f32 0.0, %v2519
    %v2521 = vpop.f32.mrb[0].mxu0
    %v2522 = vadd.f32 0.0, %v2521
    %v2523 = vpop.f32.mrb[0].mxu0
    %v2524 = vpop.f32.mrb[0].mxu0
    %2525 = vdwg.mxu0
    %2526 = vmatprep.subr.bf16.mxu0 %v2392
    %2527 = vmatpush1.bf16.msra.mxu0 %v2391
    %2528 = vmatprep.subr.bf16.mxu0 %v2398
    %2529 = vmatpush1.bf16.msra.mxu0 %v2397
    %2530 = vmatprep.subr.bf16.mxu0 %v2404
    %2531 = vmatpush1.bf16.msra.mxu0 %v2403
    %2532 = vmatprep.subr.bf16.mxu0 %v2410
    %2533 = vmatpush1.bf16.msra.mxu0 %v2409
    %2534 = vmatprep.subr.bf16.mxu0 %v2416
    %2535 = vmatpush1.bf16.msra.mxu0 %v2415
    %2536 = vmatprep.subr.bf16.mxu0 %v2422
    %2537 = vmatpush1.bf16.msra.mxu0 %v2421
    %2538 = vmatprep.subr.bf16.mxu0 %v2428
    %2539 = vmatpush1.bf16.msra.mxu0 %v2427
    %2540 = vmatprep.subr.bf16.mxu0 %v2434
    %2541 = vmatpush1.bf16.msra.mxu0 %v2433
    %2542 = vmatprep.subr.bf16.mxu0 0
    %2543 = vmatpush1.bf16.msra.mxu0 0
    %2544 = vmatprep.subr.bf16.mxu0 0
    %2545 = vmatpush1.bf16.msra.mxu0 0
    %2546 = vmatprep.subr.bf16.mxu0 0
    %2547 = vmatpush1.bf16.msra.mxu0 0
    %2548 = vmatprep.subr.bf16.mxu0 0
    %2549 = vmatpush1.bf16.msra.mxu0 0
    %2550 = vmatprep.subr.bf16.mxu0 0
    %2551 = vmatpush1.bf16.msra.mxu0 0
    %2552 = vmatprep.subr.bf16.mxu0 0
    %2553 = vmatpush1.bf16.msra.mxu0 0
    %2554 = vmatprep.subr.bf16.mxu0 0
    %2555 = vmatpush1.bf16.msra.mxu0 0
    %2556 = vmatprep.subr.bf16.mxu0 0
    %2557 = vmatpush1.bf16.msra.mxu0 0
    %2558 = vmatprep.mubr.bf16.mxu0 0
    %2559 = vmatmul.mubr.bf16.gmra.mrb[0].mxu0 %v2196
    %v2560 = vpop.f32.mrb[0].mxu0
    %v2561 = vadd.f32 0.0, %v2560
    %v2562 = vpop.f32.mrb[0].mxu0
    %v2563 = vadd.f32 0.0, %v2562
    %v2564 = vpop.f32.mrb[0].mxu0
    %v2565 = vpop.f32.mrb[0].mxu0
    %2566 = vdwg.mxu0
    %2567 = vmatprep.subr.bf16.mxu0 %v2394
    %2568 = vmatpush1.bf16.msra.mxu0 %v2393
    %2569 = vmatprep.subr.bf16.mxu0 %v2400
    %2570 = vmatpush1.bf16.msra.mxu0 %v2399
    %2571 = vmatprep.subr.bf16.mxu0 %v2406
    %2572 = vmatpush1.bf16.msra.mxu0 %v2405
    %2573 = vmatprep.subr.bf16.mxu0 %v2412
    %2574 = vmatpush1.bf16.msra.mxu0 %v2411
    %2575 = vmatprep.subr.bf16.mxu0 %v2418
    %2576 = vmatpush1.bf16.msra.mxu0 %v2417
    %2577 = vmatprep.subr.bf16.mxu0 %v2424
    %2578 = vmatpush1.bf16.msra.mxu0 %v2423
    %2579 = vmatprep.subr.bf16.mxu0 %v2430
    %2580 = vmatpush1.bf16.msra.mxu0 %v2429
    %2581 = vmatprep.subr.bf16.mxu0 %v2436
    %2582 = vmatpush1.bf16.msra.mxu0 %v2435
    %2583 = vmatprep.subr.bf16.mxu0 0
    %2584 = vmatpush1.bf16.msra.mxu0 0
    %2585 = vmatprep.subr.bf16.mxu0 0
    %2586 = vmatpush1.bf16.msra.mxu0 0
    %2587 = vmatprep.subr.bf16.mxu0 0
    %2588 = vmatpush1.bf16.msra.mxu0 0
    %2589 = vmatprep.subr.bf16.mxu0 0
    %2590 = vmatpush1.bf16.msra.mxu0 0
    %2591 = vmatprep.subr.bf16.mxu0 0
    %2592 = vmatpush1.bf16.msra.mxu0 0
    %2593 = vmatprep.subr.bf16.mxu0 0
    %2594 = vmatpush1.bf16.msra.mxu0 0
    %2595 = vmatprep.subr.bf16.mxu0 0
    %2596 = vmatpush1.bf16.msra.mxu0 0
    %2597 = vmatprep.subr.bf16.mxu0 0
    %2598 = vmatpush1.bf16.msra.mxu0 0
    %2599 = vmatprep.mubr.bf16.mxu0 0
    %2600 = vmatmul.mubr.bf16.gmra.mrb[0].mxu0 %v2196
    %v2601 = vpop.f32.mrb[0].mxu0
    %v2602 = vadd.f32 0.0, %v2601
    %v2603 = vpop.f32.mrb[0].mxu0
    %v2604 = vadd.f32 0.0, %v2603
    %v2605 = vpop.f32.mrb[0].mxu0
    %v2606 = vpop.f32.mrb[0].mxu0
    %2607 = vdwg.mxu0
    %v2608 = vld [vmem:[%s4] sm:$0x3]
    %v2610 = vlaneseq
    %v2611 = vshrl.u32 %v2610, 7
    %v2612 = vsub.s32 0, %v2611
    %v2613 = vrot.slane %v2608, %v2612
    %v2614 = vlaneseq
    %v2615 = vshrl.u32 %v2614, 7
    %v2616 = vsub.s32 1, %v2615
    %v2617 = vrot.slane %v2608, %v2616
    %v2620 = vadd.f32 %v2602, %v2613
    %v2621 = vadd.f32 %v2604, %v2617
    %2622 = vst [vmem:[#allocation9 + $0x30] sm:$0xff] %v2620
    %2623 = vst [vmem:[#allocation9 + $0x38] sm:$0xff] %v2621
    %v2624 = vld [vmem:[#allocation2 + $0x80] sm:$0xff]
    %v2625 = vld [vmem:[#allocation2 + $0x88] sm:$0xff]
    %v2626 = vld [vmem:[#allocation2 + $0x90] sm:$0xff]
    %v2627 = vld [vmem:[#allocation2 + $0x98] sm:$0xff]
    %v2628 = vadd.f32 %v2624, %v2520
    %v2629 = vadd.f32 %v2625, %v2522
    %v2630 = vadd.f32 %v2626, %v2561
    %v2631 = vadd.f32 %v2627, %v2563
    %v2632 = vxor.u32 %v2628, 2147483648
    %v2633 = vxor.u32 %v2629, 2147483648
    %v2634 = vxor.u32 %v2630, 2147483648
    %v2635 = vmul.f32 %v2632, 1.442695
    %v2636 = vpow.pop %v2635
    %v2637 = vmul.f32 %v2633, 1.442695
    %v2638 = vpow.pop %v2637
    %v2639 = vmul.f32 %v2634, 1.442695
    %v2640 = vpow.pop %v2639
    %v2641 = vadd.f32 %v2636, 1.0
    %v2642 = vadd.f32 %v2638, 1.0
    %v2643 = vadd.f32 %v2640, 1.0
    %v2644 = vrcp.pop %v2641
    %v2645 = vmul.f32 1.0, %v2644
    %v2646 = vrcp.pop %v2642
    %v2647 = vmul.f32 1.0, %v2646
    %v2648 = vrcp.pop %v2643
    %v2649 = vmul.f32 1.0, %v2648
    %v2650 = vtanh.pop %v2631
    %v2651 = vmul.f32 %v2647, %v2193
    %v2652 = vmul.f32 %v2645, %v2650
    %v2653 = vadd.f32 %v2651, %v2652
    %v2654 = vtanh.pop %v2653
    %v2655 = vmul.f32 %v2649, %v2654
    %v2656 = vpack.c.bf16 %v2655, %v2655
    %v2657 = vld [vmem:[#allocation8] sm:$0xff]
    %v2658 = vld [vmem:[#allocation8 + $0x8] sm:$0xff]
    %v2659 = vld [vmem:[#allocation8 + $0x10] sm:$0xff]
    %v2660 = vld [vmem:[#allocation8 + $0x18] sm:$0xff]
    %v2661 = vld [vmem:[#allocation8 + $0x20] sm:$0xff]
    %v2662 = vld [vmem:[#allocation8 + $0x28] sm:$0xff]
    %v2663 = vld [vmem:[#allocation8 + $0x30] sm:$0xff]
    %v2664 = vld [vmem:[#allocation8 + $0x38] sm:$0xff]
    %v2665 = vld [vmem:[#allocation8 + $0x40] sm:$0xff]
    %v2666 = vld [vmem:[#allocation8 + $0x48] sm:$0xff]
    %v2667 = vld [vmem:[#allocation8 + $0x50] sm:$0xff]
    %v2668 = vld [vmem:[#allocation8 + $0x58] sm:$0xff]
    %v2669 = vld [vmem:[#allocation8 + $0x60] sm:$0xff]
    %v2670 = vld [vmem:[#allocation8 + $0x68] sm:$0xff]
    %v2671 = vld [vmem:[#allocation8 + $0x70] sm:$0xff]
    %v2672 = vld [vmem:[#allocation8 + $0x78] sm:$0xff]
    %v2673 = vld [vmem:[#allocation8 + $0x80] sm:$0xff]
    %v2674 = vld [vmem:[#allocation8 + $0x88] sm:$0xff]
    %v2675 = vld [vmem:[#allocation8 + $0x90] sm:$0xff]
    %v2676 = vld [vmem:[#allocation8 + $0x98] sm:$0xff]
    %v2677 = vld [vmem:[#allocation8 + $0xa0] sm:$0xff]
    %v2678 = vld [vmem:[#allocation8 + $0xa8] sm:$0xff]
    %v2679 = vld [vmem:[#allocation8 + $0xb0] sm:$0xff]
    %v2680 = vld [vmem:[#allocation8 + $0xb8] sm:$0xff]
    %v2681 = vld [vmem:[#allocation8 + $0xc0] sm:$0xff]
    %v2682 = vld [vmem:[#allocation8 + $0xc8] sm:$0xff]
    %v2683 = vld [vmem:[#allocation8 + $0xd0] sm:$0xff]
    %v2684 = vld [vmem:[#allocation8 + $0xd8] sm:$0xff]
    %v2685 = vld [vmem:[#allocation8 + $0xe0] sm:$0xff]
    %v2686 = vld [vmem:[#allocation8 + $0xe8] sm:$0xff]
    %v2687 = vld [vmem:[#allocation8 + $0xf0] sm:$0xff]
    %v2688 = vld [vmem:[#allocation8 + $0xf8] sm:$0xff]
    %v2689 = vld [vmem:[#allocation8 + $0x100] sm:$0xff]
    %v2690 = vld [vmem:[#allocation8 + $0x108] sm:$0xff]
    %v2691 = vld [vmem:[#allocation8 + $0x110] sm:$0xff]
    %v2692 = vld [vmem:[#allocation8 + $0x118] sm:$0xff]
    %v2693 = vld [vmem:[#allocation8 + $0x120] sm:$0xff]
    %v2694 = vld [vmem:[#allocation8 + $0x128] sm:$0xff]
    %v2695 = vld [vmem:[#allocation8 + $0x130] sm:$0xff]
    %v2696 = vld [vmem:[#allocation8 + $0x138] sm:$0xff]
    %v2697 = vld [vmem:[#allocation8 + $0x140] sm:$0xff]
    %v2698 = vld [vmem:[#allocation8 + $0x148] sm:$0xff]
    %v2699 = vld [vmem:[#allocation8 + $0x150] sm:$0xff]
    %v2700 = vld [vmem:[#allocation8 + $0x158] sm:$0xff]
    %v2701 = vld [vmem:[#allocation8 + $0x160] sm:$0xff]
    %v2702 = vld [vmem:[#allocation8 + $0x168] sm:$0xff]
    %v2703 = vld [vmem:[#allocation8 + $0x170] sm:$0xff]
    %v2704 = vld [vmem:[#allocation8 + $0x178] sm:$0xff]
    %v2753 = vunpack.c.l.b16 %v2657
    %v2754 = vunpack.c.h.b16 %v2657
    %v2755 = vunpack.c.l.b16 %v2658
    %v2756 = vunpack.c.h.b16 %v2658
    %v2757 = vunpack.c.l.b16 %v2659
    %v2758 = vunpack.c.h.b16 %v2659
    %v2759 = vunpack.c.l.b16 %v2660
    %v2760 = vunpack.c.h.b16 %v2660
    %v2761 = vunpack.c.l.b16 %v2661
    %v2762 = vunpack.c.h.b16 %v2661
    %v2763 = vunpack.c.l.b16 %v2662
    %v2764 = vunpack.c.h.b16 %v2662
    %v2765 = vunpack.c.l.b16 %v2663
    %v2766 = vunpack.c.h.b16 %v2663
    %v2767 = vunpack.c.l.b16 %v2664
    %v2768 = vunpack.c.h.b16 %v2664
    %v2769 = vunpack.c.l.b16 %v2665
    %v2770 = vunpack.c.h.b16 %v2665
    %v2771 = vunpack.c.l.b16 %v2666
    %v2772 = vunpack.c.h.b16 %v2666
    %v2773 = vunpack.c.l.b16 %v2667
    %v2774 = vunpack.c.h.b16 %v2667
    %v2775 = vunpack.c.l.b16 %v2668
    %v2776 = vunpack.c.h.b16 %v2668
    %v2777 = vunpack.c.l.b16 %v2669
    %v2778 = vunpack.c.h.b16 %v2669
    %v2779 = vunpack.c.l.b16 %v2670
    %v2780 = vunpack.c.h.b16 %v2670
    %v2781 = vunpack.c.l.b16 %v2671
    %v2782 = vunpack.c.h.b16 %v2671
    %v2783 = vunpack.c.l.b16 %v2672
    %v2784 = vunpack.c.h.b16 %v2672
    %v2785 = vunpack.c.l.b16 %v2673
    %v2786 = vunpack.c.h.b16 %v2673
    %v2787 = vunpack.c.l.b16 %v2674
    %v2788 = vunpack.c.h.b16 %v2674
    %v2789 = vunpack.c.l.b16 %v2675
    %v2790 = vunpack.c.h.b16 %v2675
    %v2791 = vunpack.c.l.b16 %v2676
    %v2792 = vunpack.c.h.b16 %v2676
    %v2793 = vunpack.c.l.b16 %v2677
    %v2794 = vunpack.c.h.b16 %v2677
    %v2795 = vunpack.c.l.b16 %v2678
    %v2796 = vunpack.c.h.b16 %v2678
    %v2797 = vunpack.c.l.b16 %v2679
    %v2798 = vunpack.c.h.b16 %v2679
    %v2799 = vunpack.c.l.b16 %v2680
    %v2800 = vunpack.c.h.b16 %v2680
    %v2801 = vunpack.c.l.b16 %v2681
    %v2802 = vunpack.c.h.b16 %v2681
    %v2803 = vunpack.c.l.b16 %v2682
    %v2804 = vunpack.c.h.b16 %v2682
    %v2805 = vunpack.c.l.b16 %v2683
    %v2806 = vunpack.c.h.b16 %v2683
    %v2807 = vunpack.c.l.b16 %v2684
    %v2808 = vunpack.c.h.b16 %v2684
    %v2809 = vunpack.c.l.b16 %v2685
    %v2810 = vunpack.c.h.b16 %v2685
    %v2811 = vunpack.c.l.b16 %v2686
    %v2812 = vunpack.c.h.b16 %v2686
    %v2813 = vunpack.c.l.b16 %v2687
    %v2814 = vunpack.c.h.b16 %v2687
    %v2815 = vunpack.c.l.b16 %v2688
    %v2816 = vunpack.c.h.b16 %v2688
    %v2817 = vunpack.c.l.b16 %v2689
    %v2818 = vunpack.c.h.b16 %v2689
    %v2819 = vunpack.c.l.b16 %v2690
    %v2820 = vunpack.c.h.b16 %v2690
    %v2821 = vunpack.c.l.b16 %v2691
    %v2822 = vunpack.c.h.b16 %v2691
    %v2823 = vunpack.c.l.b16 %v2692
    %v2824 = vunpack.c.h.b16 %v2692
    %v2825 = vunpack.c.l.b16 %v2693
    %v2826 = vunpack.c.h.b16 %v2693
    %v2827 = vunpack.c.l.b16 %v2694
    %v2828 = vunpack.c.h.b16 %v2694
    %v2829 = vunpack.c.l.b16 %v2695
    %v2830 = vunpack.c.h.b16 %v2695
    %v2831 = vunpack.c.l.b16 %v2696
    %v2832 = vunpack.c.h.b16 %v2696
    %v2833 = vunpack.c.l.b16 %v2697
    %v2834 = vunpack.c.h.b16 %v2697
    %v2835 = vunpack.c.l.b16 %v2698
    %v2836 = vunpack.c.h.b16 %v2698
    %v2837 = vunpack.c.l.b16 %v2699
    %v2838 = vunpack.c.h.b16 %v2699
    %v2839 = vunpack.c.l.b16 %v2700
    %v2840 = vunpack.c.h.b16 %v2700
    %v2841 = vunpack.c.l.b16 %v2701
    %v2842 = vunpack.c.h.b16 %v2701
    %v2843 = vunpack.c.l.b16 %v2702
    %v2844 = vunpack.c.h.b16 %v2702
    %v2845 = vunpack.c.l.b16 %v2703
    %v2846 = vunpack.c.h.b16 %v2703
    %v2847 = vunpack.c.l.b16 %v2704
    %v2848 = vunpack.c.h.b16 %v2704
    %v2849 = vpack.c.b16 %v2759, %v2753
    %v2850 = vpack.c.b16 %v2760, %v2754
    %v2851 = vpack.c.b16 %v2761, %v2755
    %v2852 = vpack.c.b16 %v2762, %v2756
    %v2853 = vpack.c.b16 %v2763, %v2757
    %v2854 = vpack.c.b16 %v2764, %v2758
    %v2855 = vpack.c.b16 %v2771, %v2765
    %v2856 = vpack.c.b16 %v2772, %v2766
    %v2857 = vpack.c.b16 %v2773, %v2767
    %v2858 = vpack.c.b16 %v2774, %v2768
    %v2859 = vpack.c.b16 %v2775, %v2769
    %v2860 = vpack.c.b16 %v2776, %v2770
    %v2861 = vpack.c.b16 %v2783, %v2777
    %v2862 = vpack.c.b16 %v2784, %v2778
    %v2863 = vpack.c.b16 %v2785, %v2779
    %v2864 = vpack.c.b16 %v2786, %v2780
    %v2865 = vpack.c.b16 %v2787, %v2781
    %v2866 = vpack.c.b16 %v2788, %v2782
    %v2867 = vpack.c.b16 %v2795, %v2789
    %v2868 = vpack.c.b16 %v2796, %v2790
    %v2869 = vpack.c.b16 %v2797, %v2791
    %v2870 = vpack.c.b16 %v2798, %v2792
    %v2871 = vpack.c.b16 %v2799, %v2793
    %v2872 = vpack.c.b16 %v2800, %v2794
    %v2873 = vpack.c.b16 %v2807, %v2801
    %v2874 = vpack.c.b16 %v2808, %v2802
    %v2875 = vpack.c.b16 %v2809, %v2803
    %v2876 = vpack.c.b16 %v2810, %v2804
    %v2877 = vpack.c.b16 %v2811, %v2805
    %v2878 = vpack.c.b16 %v2812, %v2806
    %v2879 = vpack.c.b16 %v2819, %v2813
    %v2880 = vpack.c.b16 %v2820, %v2814
    %v2881 = vpack.c.b16 %v2821, %v2815
    %v2882 = vpack.c.b16 %v2822, %v2816
    %v2883 = vpack.c.b16 %v2823, %v2817
    %v2884 = vpack.c.b16 %v2824, %v2818
    %v2885 = vpack.c.b16 %v2831, %v2825
    %v2886 = vpack.c.b16 %v2832, %v2826
    %v2887 = vpack.c.b16 %v2833, %v2827
    %v2888 = vpack.c.b16 %v2834, %v2828
    %v2889 = vpack.c.b16 %v2835, %v2829
    %v2890 = vpack.c.b16 %v2836, %v2830
    %v2891 = vpack.c.b16 %v2843, %v2837
    %v2892 = vpack.c.b16 %v2844, %v2838
    %v2893 = vpack.c.b16 %v2845, %v2839
    %v2894 = vpack.c.b16 %v2846, %v2840
    %v2895 = vpack.c.b16 %v2847, %v2841
    %v2896 = vpack.c.b16 %v2848, %v2842
    %2945 = vmatprep.subr.bf16.mxu0 %v2850
    %2946 = vmatpush1.bf16.msra.mxu0 %v2849
    %2947 = vmatprep.subr.bf16.mxu0 %v2856
    %2948 = vmatpush1.bf16.msra.mxu0 %v2855
    %2949 = vmatprep.subr.bf16.mxu0 %v2862
    %2950 = vmatpush1.bf16.msra.mxu0 %v2861
    %2951 = vmatprep.subr.bf16.mxu0 %v2868
    %2952 = vmatpush1.bf16.msra.mxu0 %v2867
    %2953 = vmatprep.subr.bf16.mxu0 %v2874
    %2954 = vmatpush1.bf16.msra.mxu0 %v2873
    %2955 = vmatprep.subr.bf16.mxu0 %v2880
    %2956 = vmatpush1.bf16.msra.mxu0 %v2879
    %2957 = vmatprep.subr.bf16.mxu0 %v2886
    %2958 = vmatpush1.bf16.msra.mxu0 %v2885
    %2959 = vmatprep.subr.bf16.mxu0 %v2892
    %2960 = vmatpush1.bf16.msra.mxu0 %v2891
    %2961 = vmatprep.subr.bf16.mxu0 0
    %2962 = vmatpush1.bf16.msra.mxu0 0
    %2963 = vmatprep.subr.bf16.mxu0 0
    %2964 = vmatpush1.bf16.msra.mxu0 0
    %2965 = vmatprep.subr.bf16.mxu0 0
    %2966 = vmatpush1.bf16.msra.mxu0 0
    %2967 = vmatprep.subr.bf16.mxu0 0
    %2968 = vmatpush1.bf16.msra.mxu0 0
    %2969 = vmatprep.subr.bf16.mxu0 0
    %2970 = vmatpush1.bf16.msra.mxu0 0
    %2971 = vmatprep.subr.bf16.mxu0 0
    %2972 = vmatpush1.bf16.msra.mxu0 0
    %2973 = vmatprep.subr.bf16.mxu0 0
    %2974 = vmatpush1.bf16.msra.mxu0 0
    %2975 = vmatprep.subr.bf16.mxu0 0
    %2976 = vmatpush1.bf16.msra.mxu0 0
    %2977 = vmatprep.mubr.bf16.mxu0 0
    %2978 = vmatmul.mubr.bf16.gmra.mrb[0].mxu0 %v2656
    %v2979 = vpop.f32.mrb[0].mxu0
    %v2980 = vadd.f32 0.0, %v2979
    %v2981 = vpop.f32.mrb[0].mxu0
    %v2982 = vadd.f32 0.0, %v2981
    %v2983 = vpop.f32.mrb[0].mxu0
    %v2984 = vpop.f32.mrb[0].mxu0
    %2985 = vdwg.mxu0
    %2986 = vmatprep.subr.bf16.mxu0 %v2852
    %2987 = vmatpush1.bf16.msra.mxu0 %v2851
    %2988 = vmatprep.subr.bf16.mxu0 %v2858
    %2989 = vmatpush1.bf16.msra.mxu0 %v2857
    %2990 = vmatprep.subr.bf16.mxu0 %v2864
    %2991 = vmatpush1.bf16.msra.mxu0 %v2863
    %2992 = vmatprep.subr.bf16.mxu0 %v2870
    %2993 = vmatpush1.bf16.msra.mxu0 %v2869
    %2994 = vmatprep.subr.bf16.mxu0 %v2876
    %2995 = vmatpush1.bf16.msra.mxu0 %v2875
    %2996 = vmatprep.subr.bf16.mxu0 %v2882
    %2997 = vmatpush1.bf16.msra.mxu0 %v2881
    %2998 = vmatprep.subr.bf16.mxu0 %v2888
    %2999 = vmatpush1.bf16.msra.mxu0 %v2887
    %3000 = vmatprep.subr.bf16.mxu0 %v2894
    %3001 = vmatpush1.bf16.msra.mxu0 %v2893
    %3002 = vmatprep.subr.bf16.mxu0 0
    %3003 = vmatpush1.bf16.msra.mxu0 0
    %3004 = vmatprep.subr.bf16.mxu0 0
    %3005 = vmatpush1.bf16.msra.mxu0 0
    %3006 = vmatprep.subr.bf16.mxu0 0
    %3007 = vmatpush1.bf16.msra.mxu0 0
    %3008 = vmatprep.subr.bf16.mxu0 0
    %3009 = vmatpush1.bf16.msra.mxu0 0
    %3010 = vmatprep.subr.bf16.mxu0 0
    %3011 = vmatpush1.bf16.msra.mxu0 0
    %3012 = vmatprep.subr.bf16.mxu0 0
    %3013 = vmatpush1.bf16.msra.mxu0 0
    %3014 = vmatprep.subr.bf16.mxu0 0
    %3015 = vmatpush1.bf16.msra.mxu0 0
    %3016 = vmatprep.subr.bf16.mxu0 0
    %3017 = vmatpush1.bf16.msra.mxu0 0
    %3018 = vmatprep.mubr.bf16.mxu0 0
    %3019 = vmatmul.mubr.bf16.gmra.mrb[0].mxu0 %v2656
    %v3020 = vpop.f32.mrb[0].mxu0
    %v3021 = vadd.f32 0.0, %v3020
    %v3022 = vpop.f32.mrb[0].mxu0
    %v3023 = vadd.f32 0.0, %v3022
    %v3024 = vpop.f32.mrb[0].mxu0
    %v3025 = vpop.f32.mrb[0].mxu0
    %3026 = vdwg.mxu0
    %3027 = vmatprep.subr.bf16.mxu0 %v2854
    %3028 = vmatpush1.bf16.msra.mxu0 %v2853
    %3029 = vmatprep.subr.bf16.mxu0 %v2860
    %3030 = vmatpush1.bf16.msra.mxu0 %v2859
    %3031 = vmatprep.subr.bf16.mxu0 %v2866
    %3032 = vmatpush1.bf16.msra.mxu0 %v2865
    %3033 = vmatprep.subr.bf16.mxu0 %v2872
    %3034 = vmatpush1.bf16.msra.mxu0 %v2871
    %3035 = vmatprep.subr.bf16.mxu0 %v2878
    %3036 = vmatpush1.bf16.msra.mxu0 %v2877
    %3037 = vmatprep.subr.bf16.mxu0 %v2884
    %3038 = vmatpush1.bf16.msra.mxu0 %v2883
    %3039 = vmatprep.subr.bf16.mxu0 %v2890
    %3040 = vmatpush1.bf16.msra.mxu0 %v2889
    %3041 = vmatprep.subr.bf16.mxu0 %v2896
    %3042 = vmatpush1.bf16.msra.mxu0 %v2895
    %3043 = vmatprep.subr.bf16.mxu0 0
    %3044 = vmatpush1.bf16.msra.mxu0 0
    %3045 = vmatprep.subr.bf16.mxu0 0
    %3046 = vmatpush1.bf16.msra.mxu0 0
    %3047 = vmatprep.subr.bf16.mxu0 0
    %3048 = vmatpush1.bf16.msra.mxu0 0
    %3049 = vmatprep.subr.bf16.mxu0 0
    %3050 = vmatpush1.bf16.msra.mxu0 0
    %3051 = vmatprep.subr.bf16.mxu0 0
    %3052 = vmatpush1.bf16.msra.mxu0 0
    %3053 = vmatprep.subr.bf16.mxu0 0
    %3054 = vmatpush1.bf16.msra.mxu0 0
    %3055 = vmatprep.subr.bf16.mxu0 0
    %3056 = vmatpush1.bf16.msra.mxu0 0
    %3057 = vmatprep.subr.bf16.mxu0 0
    %3058 = vmatpush1.bf16.msra.mxu0 0
    %3059 = vmatprep.mubr.bf16.mxu0 0
    %3060 = vmatmul.mubr.bf16.gmra.mrb[0].mxu0 %v2656
    %v3061 = vpop.f32.mrb[0].mxu0
    %v3062 = vadd.f32 0.0, %v3061
    %v3063 = vpop.f32.mrb[0].mxu0
    %v3064 = vadd.f32 0.0, %v3063
    %v3065 = vpop.f32.mrb[0].mxu0
    %v3066 = vpop.f32.mrb[0].mxu0
    %3067 = vdwg.mxu0
    %v3068 = vld [vmem:[%s4] sm:$0x3]
    %v3070 = vlaneseq
    %v3071 = vshrl.u32 %v3070, 7
    %v3072 = vsub.s32 0, %v3071
    %v3073 = vrot.slane %v3068, %v3072
    %v3074 = vlaneseq
    %v3075 = vshrl.u32 %v3074, 7
    %v3076 = vsub.s32 1, %v3075
    %v3077 = vrot.slane %v3068, %v3076
    %v3080 = vadd.f32 %v3062, %v3073
    %v3081 = vadd.f32 %v3064, %v3077
    %3082 = vst [vmem:[#allocation9 + $0x40] sm:$0xff] %v3080
    %3083 = vst [vmem:[#allocation9 + $0x48] sm:$0xff] %v3081
    %v3084 = vld [vmem:[#allocation2 + $0xa0] sm:$0xff]
    %v3085 = vld [vmem:[#allocation2 + $0xa8] sm:$0xff]
    %v3086 = vld [vmem:[#allocation2 + $0xb0] sm:$0xff]
    %v3087 = vld [vmem:[#allocation2 + $0xb8] sm:$0xff]
    %v3088 = vadd.f32 %v3084, %v2980
    %v3089 = vadd.f32 %v3085, %v2982
    %v3090 = vadd.f32 %v3086, %v3021
    %v3091 = vadd.f32 %v3087, %v3023
    %v3092 = vxor.u32 %v3088, 2147483648
    %v3093 = vxor.u32 %v3089, 2147483648
    %v3094 = vxor.u32 %v3090, 2147483648
    %v3095 = vmul.f32 %v3092, 1.442695
    %v3096 = vpow.pop %v3095
    %v3097 = vmul.f32 %v3093, 1.442695
    %v3098 = vpow.pop %v3097
    %v3099 = vmul.f32 %v3094, 1.442695
    %v3100 = vpow.pop %v3099
    %v3101 = vadd.f32 %v3096, 1.0
    %v3102 = vadd.f32 %v3098, 1.0
    %v3103 = vadd.f32 %v3100, 1.0
    %v3104 = vrcp.pop %v3101
    %v3105 = vmul.f32 1.0, %v3104
    %v3106 = vrcp.pop %v3102
    %v3107 = vmul.f32 1.0, %v3106
    %v3108 = vrcp.pop %v3103
    %v3109 = vmul.f32 1.0, %v3108
    %v3110 = vtanh.pop %v3091
    %v3111 = vmul.f32 %v3107, %v2653
    %v3112 = vmul.f32 %v3105, %v3110
    %v3113 = vadd.f32 %v3111, %v3112
    %v3114 = vtanh.pop %v3113
    %v3115 = vmul.f32 %v3109, %v3114
    %v3116 = vpack.c.bf16 %v3115, %v3115
    %v3117 = vld [vmem:[#allocation8] sm:$0xff]
    %v3118 = vld [vmem:[#allocation8 + $0x8] sm:$0xff]
    %v3119 = vld [vmem:[#allocation8 + $0x10] sm:$0xff]
    %v3120 = vld [vmem:[#allocation8 + $0x18] sm:$0xff]
    %v3121 = vld [vmem:[#allocation8 + $0x20] sm:$0xff]
    %v3122 = vld [vmem:[#allocation8 + $0x28] sm:$0xff]
    %v3123 = vld [vmem:[#allocation8 + $0x30] sm:$0xff]
    %v3124 = vld [vmem:[#allocation8 + $0x38] sm:$0xff]
    %v3125 = vld [vmem:[#allocation8 + $0x40] sm:$0xff]
    %v3126 = vld [vmem:[#allocation8 + $0x48] sm:$0xff]
    %v3127 = vld [vmem:[#allocation8 + $0x50] sm:$0xff]
    %v3128 = vld [vmem:[#allocation8 + $0x58] sm:$0xff]
    %v3129 = vld [vmem:[#allocation8 + $0x60] sm:$0xff]
    %v3130 = vld [vmem:[#allocation8 + $0x68] sm:$0xff]
    %v3131 = vld [vmem:[#allocation8 + $0x70] sm:$0xff]
    %v3132 = vld [vmem:[#allocation8 + $0x78] sm:$0xff]
    %v3133 = vld [vmem:[#allocation8 + $0x80] sm:$0xff]
    %v3134 = vld [vmem:[#allocation8 + $0x88] sm:$0xff]
    %v3135 = vld [vmem:[#allocation8 + $0x90] sm:$0xff]
    %v3136 = vld [vmem:[#allocation8 + $0x98] sm:$0xff]
    %v3137 = vld [vmem:[#allocation8 + $0xa0] sm:$0xff]
    %v3138 = vld [vmem:[#allocation8 + $0xa8] sm:$0xff]
    %v3139 = vld [vmem:[#allocation8 + $0xb0] sm:$0xff]
    %v3140 = vld [vmem:[#allocation8 + $0xb8] sm:$0xff]
    %v3141 = vld [vmem:[#allocation8 + $0xc0] sm:$0xff]
    %v3142 = vld [vmem:[#allocation8 + $0xc8] sm:$0xff]
    %v3143 = vld [vmem:[#allocation8 + $0xd0] sm:$0xff]
    %v3144 = vld [vmem:[#allocation8 + $0xd8] sm:$0xff]
    %v3145 = vld [vmem:[#allocation8 + $0xe0] sm:$0xff]
    %v3146 = vld [vmem:[#allocation8 + $0xe8] sm:$0xff]
    %v3147 = vld [vmem:[#allocation8 + $0xf0] sm:$0xff]
    %v3148 = vld [vmem:[#allocation8 + $0xf8] sm:$0xff]
    %v3149 = vld [vmem:[#allocation8 + $0x100] sm:$0xff]
    %v3150 = vld [vmem:[#allocation8 + $0x108] sm:$0xff]
    %v3151 = vld [vmem:[#allocation8 + $0x110] sm:$0xff]
    %v3152 = vld [vmem:[#allocation8 + $0x118] sm:$0xff]
    %v3153 = vld [vmem:[#allocation8 + $0x120] sm:$0xff]
    %v3154 = vld [vmem:[#allocation8 + $0x128] sm:$0xff]
    %v3155 = vld [vmem:[#allocation8 + $0x130] sm:$0xff]
    %v3156 = vld [vmem:[#allocation8 + $0x138] sm:$0xff]
    %v3157 = vld [vmem:[#allocation8 + $0x140] sm:$0xff]
    %v3158 = vld [vmem:[#allocation8 + $0x148] sm:$0xff]
    %v3159 = vld [vmem:[#allocation8 + $0x150] sm:$0xff]
    %v3160 = vld [vmem:[#allocation8 + $0x158] sm:$0xff]
    %v3161 = vld [vmem:[#allocation8 + $0x160] sm:$0xff]
    %v3162 = vld [vmem:[#allocation8 + $0x168] sm:$0xff]
    %v3163 = vld [vmem:[#allocation8 + $0x170] sm:$0xff]
    %v3164 = vld [vmem:[#allocation8 + $0x178] sm:$0xff]
    %v3213 = vunpack.c.l.b16 %v3117
    %v3214 = vunpack.c.h.b16 %v3117
    %v3215 = vunpack.c.l.b16 %v3118
    %v3216 = vunpack.c.h.b16 %v3118
    %v3217 = vunpack.c.l.b16 %v3119
    %v3218 = vunpack.c.h.b16 %v3119
    %v3219 = vunpack.c.l.b16 %v3120
    %v3220 = vunpack.c.h.b16 %v3120
    %v3221 = vunpack.c.l.b16 %v3121
    %v3222 = vunpack.c.h.b16 %v3121
    %v3223 = vunpack.c.l.b16 %v3122
    %v3224 = vunpack.c.h.b16 %v3122
    %v3225 = vunpack.c.l.b16 %v3123
    %v3226 = vunpack.c.h.b16 %v3123
    %v3227 = vunpack.c.l.b16 %v3124
    %v3228 = vunpack.c.h.b16 %v3124
    %v3229 = vunpack.c.l.b16 %v3125
    %v3230 = vunpack.c.h.b16 %v3125
    %v3231 = vunpack.c.l.b16 %v3126
    %v3232 = vunpack.c.h.b16 %v3126
    %v3233 = vunpack.c.l.b16 %v3127
    %v3234 = vunpack.c.h.b16 %v3127
    %v3235 = vunpack.c.l.b16 %v3128
    %v3236 = vunpack.c.h.b16 %v3128
    %v3237 = vunpack.c.l.b16 %v3129
    %v3238 = vunpack.c.h.b16 %v3129
    %v3239 = vunpack.c.l.b16 %v3130
    %v3240 = vunpack.c.h.b16 %v3130
    %v3241 = vunpack.c.l.b16 %v3131
    %v3242 = vunpack.c.h.b16 %v3131
    %v3243 = vunpack.c.l.b16 %v3132
    %v3244 = vunpack.c.h.b16 %v3132
    %v3245 = vunpack.c.l.b16 %v3133
    %v3246 = vunpack.c.h.b16 %v3133
    %v3247 = vunpack.c.l.b16 %v3134
    %v3248 = vunpack.c.h.b16 %v3134
    %v3249 = vunpack.c.l.b16 %v3135
    %v3250 = vunpack.c.h.b16 %v3135
    %v3251 = vunpack.c.l.b16 %v3136
    %v3252 = vunpack.c.h.b16 %v3136
    %v3253 = vunpack.c.l.b16 %v3137
    %v3254 = vunpack.c.h.b16 %v3137
    %v3255 = vunpack.c.l.b16 %v3138
    %v3256 = vunpack.c.h.b16 %v3138
    %v3257 = vunpack.c.l.b16 %v3139
    %v3258 = vunpack.c.h.b16 %v3139
    %v3259 = vunpack.c.l.b16 %v3140
    %v3260 = vunpack.c.h.b16 %v3140
    %v3261 = vunpack.c.l.b16 %v3141
    %v3262 = vunpack.c.h.b16 %v3141
    %v3263 = vunpack.c.l.b16 %v3142
    %v3264 = vunpack.c.h.b16 %v3142
    %v3265 = vunpack.c.l.b16 %v3143
    %v3266 = vunpack.c.h.b16 %v3143
    %v3267 = vunpack.c.l.b16 %v3144
    %v3268 = vunpack.c.h.b16 %v3144
    %v3269 = vunpack.c.l.b16 %v3145
    %v3270 = vunpack.c.h.b16 %v3145
    %v3271 = vunpack.c.l.b16 %v3146
    %v3272 = vunpack.c.h.b16 %v3146
    %v3273 = vunpack.c.l.b16 %v3147
    %v3274 = vunpack.c.h.b16 %v3147
    %v3275 = vunpack.c.l.b16 %v3148
    %v3276 = vunpack.c.h.b16 %v3148
    %v3277 = vunpack.c.l.b16 %v3149
    %v3278 = vunpack.c.h.b16 %v3149
    %v3279 = vunpack.c.l.b16 %v3150
    %v3280 = vunpack.c.h.b16 %v3150
    %v3281 = vunpack.c.l.b16 %v3151
    %v3282 = vunpack.c.h.b16 %v3151
    %v3283 = vunpack.c.l.b16 %v3152
    %v3284 = vunpack.c.h.b16 %v3152
    %v3285 = vunpack.c.l.b16 %v3153
    %v3286 = vunpack.c.h.b16 %v3153
    %v3287 = vunpack.c.l.b16 %v3154
    %v3288 = vunpack.c.h.b16 %v3154
    %v3289 = vunpack.c.l.b16 %v3155
    %v3290 = vunpack.c.h.b16 %v3155
    %v3291 = vunpack.c.l.b16 %v3156
    %v3292 = vunpack.c.h.b16 %v3156
    %v3293 = vunpack.c.l.b16 %v3157
    %v3294 = vunpack.c.h.b16 %v3157
    %v3295 = vunpack.c.l.b16 %v3158
    %v3296 = vunpack.c.h.b16 %v3158
    %v3297 = vunpack.c.l.b16 %v3159
    %v3298 = vunpack.c.h.b16 %v3159
    %v3299 = vunpack.c.l.b16 %v3160
    %v3300 = vunpack.c.h.b16 %v3160
    %v3301 = vunpack.c.l.b16 %v3161
    %v3302 = vunpack.c.h.b16 %v3161
    %v3303 = vunpack.c.l.b16 %v3162
    %v3304 = vunpack.c.h.b16 %v3162
    %v3305 = vunpack.c.l.b16 %v3163
    %v3306 = vunpack.c.h.b16 %v3163
    %v3307 = vunpack.c.l.b16 %v3164
    %v3308 = vunpack.c.h.b16 %v3164
    %v3309 = vpack.c.b16 %v3219, %v3213
    %v3310 = vpack.c.b16 %v3220, %v3214
    %v3311 = vpack.c.b16 %v3221, %v3215
    %v3312 = vpack.c.b16 %v3222, %v3216
    %v3313 = vpack.c.b16 %v3223, %v3217
    %v3314 = vpack.c.b16 %v3224, %v3218
    %v3315 = vpack.c.b16 %v3231, %v3225
    %v3316 = vpack.c.b16 %v3232, %v3226
    %v3317 = vpack.c.b16 %v3233, %v3227
    %v3318 = vpack.c.b16 %v3234, %v3228
    %v3319 = vpack.c.b16 %v3235, %v3229
    %v3320 = vpack.c.b16 %v3236, %v3230
    %v3321 = vpack.c.b16 %v3243, %v3237
    %v3322 = vpack.c.b16 %v3244, %v3238
    %v3323 = vpack.c.b16 %v3245, %v3239
    %v3324 = vpack.c.b16 %v3246, %v3240
    %v3325 = vpack.c.b16 %v3247, %v3241
    %v3326 = vpack.c.b16 %v3248, %v3242
    %v3327 = vpack.c.b16 %v3255, %v3249
    %v3328 = vpack.c.b16 %v3256, %v3250
    %v3329 = vpack.c.b16 %v3257, %v3251
    %v3330 = vpack.c.b16 %v3258, %v3252
    %v3331 = vpack.c.b16 %v3259, %v3253
    %v3332 = vpack.c.b16 %v3260, %v3254
    %v3333 = vpack.c.b16 %v3267, %v3261
    %v3334 = vpack.c.b16 %v3268, %v3262
    %v3335 = vpack.c.b16 %v3269, %v3263
    %v3336 = vpack.c.b16 %v3270, %v3264
    %v3337 = vpack.c.b16 %v3271, %v3265
    %v3338 = vpack.c.b16 %v3272, %v3266
    %v3339 = vpack.c.b16 %v3279, %v3273
    %v3340 = vpack.c.b16 %v3280, %v3274
    %v3341 = vpack.c.b16 %v3281, %v3275
    %v3342 = vpack.c.b16 %v3282, %v3276
    %v3343 = vpack.c.b16 %v3283, %v3277
    %v3344 = vpack.c.b16 %v3284, %v3278
    %v3345 = vpack.c.b16 %v3291, %v3285
    %v3346 = vpack.c.b16 %v3292, %v3286
    %v3347 = vpack.c.b16 %v3293, %v3287
    %v3348 = vpack.c.b16 %v3294, %v3288
    %v3349 = vpack.c.b16 %v3295, %v3289
    %v3350 = vpack.c.b16 %v3296, %v3290
    %v3351 = vpack.c.b16 %v3303, %v3297
    %v3352 = vpack.c.b16 %v3304, %v3298
    %v3353 = vpack.c.b16 %v3305, %v3299
    %v3354 = vpack.c.b16 %v3306, %v3300
    %v3355 = vpack.c.b16 %v3307, %v3301
    %v3356 = vpack.c.b16 %v3308, %v3302
    %3405 = vmatprep.subr.bf16.mxu0 %v3310
    %3406 = vmatpush1.bf16.msra.mxu0 %v3309
    %3407 = vmatprep.subr.bf16.mxu0 %v3316
    %3408 = vmatpush1.bf16.msra.mxu0 %v3315
    %3409 = vmatprep.subr.bf16.mxu0 %v3322
    %3410 = vmatpush1.bf16.msra.mxu0 %v3321
    %3411 = vmatprep.subr.bf16.mxu0 %v3328
    %3412 = vmatpush1.bf16.msra.mxu0 %v3327
    %3413 = vmatprep.subr.bf16.mxu0 %v3334
    %3414 = vmatpush1.bf16.msra.mxu0 %v3333
    %3415 = vmatprep.subr.bf16.mxu0 %v3340
    %3416 = vmatpush1.bf16.msra.mxu0 %v3339
    %3417 = vmatprep.subr.bf16.mxu0 %v3346
    %3418 = vmatpush1.bf16.msra.mxu0 %v3345
    %3419 = vmatprep.subr.bf16.mxu0 %v3352
    %3420 = vmatpush1.bf16.msra.mxu0 %v3351
    %3421 = vmatprep.subr.bf16.mxu0 0
    %3422 = vmatpush1.bf16.msra.mxu0 0
    %3423 = vmatprep.subr.bf16.mxu0 0
    %3424 = vmatpush1.bf16.msra.mxu0 0
    %3425 = vmatprep.subr.bf16.mxu0 0
    %3426 = vmatpush1.bf16.msra.mxu0 0
    %3427 = vmatprep.subr.bf16.mxu0 0
    %3428 = vmatpush1.bf16.msra.mxu0 0
    %3429 = vmatprep.subr.bf16.mxu0 0
    %3430 = vmatpush1.bf16.msra.mxu0 0
    %3431 = vmatprep.subr.bf16.mxu0 0
    %3432 = vmatpush1.bf16.msra.mxu0 0
    %3433 = vmatprep.subr.bf16.mxu0 0
    %3434 = vmatpush1.bf16.msra.mxu0 0
    %3435 = vmatprep.subr.bf16.mxu0 0
    %3436 = vmatpush1.bf16.msra.mxu0 0
    %3437 = vmatprep.mubr.bf16.mxu0 0
    %3438 = vmatmul.mubr.bf16.gmra.mrb[0].mxu0 %v3116
    %v3439 = vpop.f32.mrb[0].mxu0
    %v3440 = vadd.f32 0.0, %v3439
    %v3441 = vpop.f32.mrb[0].mxu0
    %v3442 = vadd.f32 0.0, %v3441
    %v3443 = vpop.f32.mrb[0].mxu0
    %v3444 = vpop.f32.mrb[0].mxu0
    %3445 = vdwg.mxu0
    %3446 = vmatprep.subr.bf16.mxu0 %v3312
    %3447 = vmatpush1.bf16.msra.mxu0 %v3311
    %3448 = vmatprep.subr.bf16.mxu0 %v3318
    %3449 = vmatpush1.bf16.msra.mxu0 %v3317
    %3450 = vmatprep.subr.bf16.mxu0 %v3324
    %3451 = vmatpush1.bf16.msra.mxu0 %v3323
    %3452 = vmatprep.subr.bf16.mxu0 %v3330
    %3453 = vmatpush1.bf16.msra.mxu0 %v3329
    %3454 = vmatprep.subr.bf16.mxu0 %v3336
    %3455 = vmatpush1.bf16.msra.mxu0 %v3335
    %3456 = vmatprep.subr.bf16.mxu0 %v3342
    %3457 = vmatpush1.bf16.msra.mxu0 %v3341
    %3458 = vmatprep.subr.bf16.mxu0 %v3348
    %3459 = vmatpush1.bf16.msra.mxu0 %v3347
    %3460 = vmatprep.subr.bf16.mxu0 %v3354
    %3461 = vmatpush1.bf16.msra.mxu0 %v3353
    %3462 = vmatprep.subr.bf16.mxu0 0
    %3463 = vmatpush1.bf16.msra.mxu0 0
    %3464 = vmatprep.subr.bf16.mxu0 0
    %3465 = vmatpush1.bf16.msra.mxu0 0
    %3466 = vmatprep.subr.bf16.mxu0 0
    %3467 = vmatpush1.bf16.msra.mxu0 0
    %3468 = vmatprep.subr.bf16.mxu0 0
    %3469 = vmatpush1.bf16.msra.mxu0 0
    %3470 = vmatprep.subr.bf16.mxu0 0
    %3471 = vmatpush1.bf16.msra.mxu0 0
    %3472 = vmatprep.subr.bf16.mxu0 0
    %3473 = vmatpush1.bf16.msra.mxu0 0
    %3474 = vmatprep.subr.bf16.mxu0 0
    %3475 = vmatpush1.bf16.msra.mxu0 0
    %3476 = vmatprep.subr.bf16.mxu0 0
    %3477 = vmatpush1.bf16.msra.mxu0 0
    %3478 = vmatprep.mubr.bf16.mxu0 0
    %3479 = vmatmul.mubr.bf16.gmra.mrb[0].mxu0 %v3116
    %v3480 = vpop.f32.mrb[0].mxu0
    %v3481 = vadd.f32 0.0, %v3480
    %v3482 = vpop.f32.mrb[0].mxu0
    %v3483 = vadd.f32 0.0, %v3482
    %v3484 = vpop.f32.mrb[0].mxu0
    %v3485 = vpop.f32.mrb[0].mxu0
    %3486 = vdwg.mxu0
    %3487 = vmatprep.subr.bf16.mxu0 %v3314
    %3488 = vmatpush1.bf16.msra.mxu0 %v3313
    %3489 = vmatprep.subr.bf16.mxu0 %v3320
    %3490 = vmatpush1.bf16.msra.mxu0 %v3319
    %3491 = vmatprep.subr.bf16.mxu0 %v3326
    %3492 = vmatpush1.bf16.msra.mxu0 %v3325
    %3493 = vmatprep.subr.bf16.mxu0 %v3332
    %3494 = vmatpush1.bf16.msra.mxu0 %v3331
    %3495 = vmatprep.subr.bf16.mxu0 %v3338
    %3496 = vmatpush1.bf16.msra.mxu0 %v3337
    %3497 = vmatprep.subr.bf16.mxu0 %v3344
    %3498 = vmatpush1.bf16.msra.mxu0 %v3343
    %3499 = vmatprep.subr.bf16.mxu0 %v3350
    %3500 = vmatpush1.bf16.msra.mxu0 %v3349
    %3501 = vmatprep.subr.bf16.mxu0 %v3356
    %3502 = vmatpush1.bf16.msra.mxu0 %v3355
    %3503 = vmatprep.subr.bf16.mxu0 0
    %3504 = vmatpush1.bf16.msra.mxu0 0
    %3505 = vmatprep.subr.bf16.mxu0 0
    %3506 = vmatpush1.bf16.msra.mxu0 0
    %3507 = vmatprep.subr.bf16.mxu0 0
    %3508 = vmatpush1.bf16.msra.mxu0 0
    %3509 = vmatprep.subr.bf16.mxu0 0
    %3510 = vmatpush1.bf16.msra.mxu0 0
    %3511 = vmatprep.subr.bf16.mxu0 0
    %3512 = vmatpush1.bf16.msra.mxu0 0
    %3513 = vmatprep.subr.bf16.mxu0 0
    %3514 = vmatpush1.bf16.msra.mxu0 0
    %3515 = vmatprep.subr.bf16.mxu0 0
    %3516 = vmatpush1.bf16.msra.mxu0 0
    %3517 = vmatprep.subr.bf16.mxu0 0
    %3518 = vmatpush1.bf16.msra.mxu0 0
    %3519 = vmatprep.mubr.bf16.mxu0 0
    %3520 = vmatmul.mubr.bf16.gmra.mrb[0].mxu0 %v3116
    %v3521 = vpop.f32.mrb[0].mxu0
    %v3522 = vadd.f32 0.0, %v3521
    %v3523 = vpop.f32.mrb[0].mxu0
    %v3524 = vadd.f32 0.0, %v3523
    %v3525 = vpop.f32.mrb[0].mxu0
    %v3526 = vpop.f32.mrb[0].mxu0
    %3527 = vdwg.mxu0
    %v3528 = vld [vmem:[%s4] sm:$0x3]
    %v3530 = vlaneseq
    %v3531 = vshrl.u32 %v3530, 7
    %v3532 = vsub.s32 0, %v3531
    %v3533 = vrot.slane %v3528, %v3532
    %v3534 = vlaneseq
    %v3535 = vshrl.u32 %v3534, 7
    %v3536 = vsub.s32 1, %v3535
    %v3537 = vrot.slane %v3528, %v3536
    %v3540 = vadd.f32 %v3522, %v3533
    %v3541 = vadd.f32 %v3524, %v3537
    %3542 = vst [vmem:[#allocation9 + $0x50] sm:$0xff] %v3540
    %3543 = vst [vmem:[#allocation9 + $0x58] sm:$0xff] %v3541
    %v3544 = vld [vmem:[#allocation2 + $0xc0] sm:$0xff]
    %v3545 = vld [vmem:[#allocation2 + $0xc8] sm:$0xff]
    %v3546 = vld [vmem:[#allocation2 + $0xd0] sm:$0xff]
    %v3547 = vld [vmem:[#allocation2 + $0xd8] sm:$0xff]
    %v3548 = vadd.f32 %v3544, %v3440
    %v3549 = vadd.f32 %v3545, %v3442
    %v3550 = vadd.f32 %v3546, %v3481
    %v3551 = vadd.f32 %v3547, %v3483
    %v3552 = vxor.u32 %v3548, 2147483648
    %v3553 = vxor.u32 %v3549, 2147483648
    %v3554 = vxor.u32 %v3550, 2147483648
    %v3555 = vmul.f32 %v3552, 1.442695
    %v3556 = vpow.pop %v3555
    %v3557 = vmul.f32 %v3553, 1.442695
    %v3558 = vpow.pop %v3557
    %v3559 = vmul.f32 %v3554, 1.442695
    %v3560 = vpow.pop %v3559
    %v3561 = vadd.f32 %v3556, 1.0
    %v3562 = vadd.f32 %v3558, 1.0
    %v3563 = vadd.f32 %v3560, 1.0
    %v3564 = vrcp.pop %v3561
    %v3565 = vmul.f32 1.0, %v3564
    %v3566 = vrcp.pop %v3562
    %v3567 = vmul.f32 1.0, %v3566
    %v3568 = vrcp.pop %v3563
    %v3569 = vmul.f32 1.0, %v3568
    %v3570 = vtanh.pop %v3551
    %v3571 = vmul.f32 %v3567, %v3113
    %v3572 = vmul.f32 %v3565, %v3570
    %v3573 = vadd.f32 %v3571, %v3572
    %v3574 = vtanh.pop %v3573
    %v3575 = vmul.f32 %v3569, %v3574
    %v3576 = vpack.c.bf16 %v3575, %v3575
    %v3577 = vld [vmem:[#allocation8] sm:$0xff]
    %v3578 = vld [vmem:[#allocation8 + $0x8] sm:$0xff]
    %v3579 = vld [vmem:[#allocation8 + $0x10] sm:$0xff]
    %v3580 = vld [vmem:[#allocation8 + $0x18] sm:$0xff]
    %v3581 = vld [vmem:[#allocation8 + $0x20] sm:$0xff]
    %v3582 = vld [vmem:[#allocation8 + $0x28] sm:$0xff]
    %v3583 = vld [vmem:[#allocation8 + $0x30] sm:$0xff]
    %v3584 = vld [vmem:[#allocation8 + $0x38] sm:$0xff]
    %v3585 = vld [vmem:[#allocation8 + $0x40] sm:$0xff]
    %v3586 = vld [vmem:[#allocation8 + $0x48] sm:$0xff]
    %v3587 = vld [vmem:[#allocation8 + $0x50] sm:$0xff]
    %v3588 = vld [vmem:[#allocation8 + $0x58] sm:$0xff]
    %v3589 = vld [vmem:[#allocation8 + $0x60] sm:$0xff]
    %v3590 = vld [vmem:[#allocation8 + $0x68] sm:$0xff]
    %v3591 = vld [vmem:[#allocation8 + $0x70] sm:$0xff]
    %v3592 = vld [vmem:[#allocation8 + $0x78] sm:$0xff]
    %v3593 = vld [vmem:[#allocation8 + $0x80] sm:$0xff]
    %v3594 = vld [vmem:[#allocation8 + $0x88] sm:$0xff]
    %v3595 = vld [vmem:[#allocation8 + $0x90] sm:$0xff]
    %v3596 = vld [vmem:[#allocation8 + $0x98] sm:$0xff]
    %v3597 = vld [vmem:[#allocation8 + $0xa0] sm:$0xff]
    %v3598 = vld [vmem:[#allocation8 + $0xa8] sm:$0xff]
    %v3599 = vld [vmem:[#allocation8 + $0xb0] sm:$0xff]
    %v3600 = vld [vmem:[#allocation8 + $0xb8] sm:$0xff]
    %v3601 = vld [vmem:[#allocation8 + $0xc0] sm:$0xff]
    %v3602 = vld [vmem:[#allocation8 + $0xc8] sm:$0xff]
    %v3603 = vld [vmem:[#allocation8 + $0xd0] sm:$0xff]
    %v3604 = vld [vmem:[#allocation8 + $0xd8] sm:$0xff]
    %v3605 = vld [vmem:[#allocation8 + $0xe0] sm:$0xff]
    %v3606 = vld [vmem:[#allocation8 + $0xe8] sm:$0xff]
    %v3607 = vld [vmem:[#allocation8 + $0xf0] sm:$0xff]
    %v3608 = vld [vmem:[#allocation8 + $0xf8] sm:$0xff]
    %v3609 = vld [vmem:[#allocation8 + $0x100] sm:$0xff]
    %v3610 = vld [vmem:[#allocation8 + $0x108] sm:$0xff]
    %v3611 = vld [vmem:[#allocation8 + $0x110] sm:$0xff]
    %v3612 = vld [vmem:[#allocation8 + $0x118] sm:$0xff]
    %v3613 = vld [vmem:[#allocation8 + $0x120] sm:$0xff]
    %v3614 = vld [vmem:[#allocation8 + $0x128] sm:$0xff]
    %v3615 = vld [vmem:[#allocation8 + $0x130] sm:$0xff]
    %v3616 = vld [vmem:[#allocation8 + $0x138] sm:$0xff]
    %v3617 = vld [vmem:[#allocation8 + $0x140] sm:$0xff]
    %v3618 = vld [vmem:[#allocation8 + $0x148] sm:$0xff]
    %v3619 = vld [vmem:[#allocation8 + $0x150] sm:$0xff]
    %v3620 = vld [vmem:[#allocation8 + $0x158] sm:$0xff]
    %v3621 = vld [vmem:[#allocation8 + $0x160] sm:$0xff]
    %v3622 = vld [vmem:[#allocation8 + $0x168] sm:$0xff]
    %v3623 = vld [vmem:[#allocation8 + $0x170] sm:$0xff]
    %v3624 = vld [vmem:[#allocation8 + $0x178] sm:$0xff]
    %v3673 = vunpack.c.l.b16 %v3577
    %v3674 = vunpack.c.h.b16 %v3577
    %v3675 = vunpack.c.l.b16 %v3578
    %v3676 = vunpack.c.h.b16 %v3578
    %v3677 = vunpack.c.l.b16 %v3579
    %v3678 = vunpack.c.h.b16 %v3579
    %v3679 = vunpack.c.l.b16 %v3580
    %v3680 = vunpack.c.h.b16 %v3580
    %v3681 = vunpack.c.l.b16 %v3581
    %v3682 = vunpack.c.h.b16 %v3581
    %v3683 = vunpack.c.l.b16 %v3582
    %v3684 = vunpack.c.h.b16 %v3582
    %v3685 = vunpack.c.l.b16 %v3583
    %v3686 = vunpack.c.h.b16 %v3583
    %v3687 = vunpack.c.l.b16 %v3584
    %v3688 = vunpack.c.h.b16 %v3584
    %v3689 = vunpack.c.l.b16 %v3585
    %v3690 = vunpack.c.h.b16 %v3585
    %v3691 = vunpack.c.l.b16 %v3586
    %v3692 = vunpack.c.h.b16 %v3586
    %v3693 = vunpack.c.l.b16 %v3587
    %v3694 = vunpack.c.h.b16 %v3587
    %v3695 = vunpack.c.l.b16 %v3588
    %v3696 = vunpack.c.h.b16 %v3588
    %v3697 = vunpack.c.l.b16 %v3589
    %v3698 = vunpack.c.h.b16 %v3589
    %v3699 = vunpack.c.l.b16 %v3590
    %v3700 = vunpack.c.h.b16 %v3590
    %v3701 = vunpack.c.l.b16 %v3591
    %v3702 = vunpack.c.h.b16 %v3591
    %v3703 = vunpack.c.l.b16 %v3592
    %v3704 = vunpack.c.h.b16 %v3592
    %v3705 = vunpack.c.l.b16 %v3593
    %v3706 = vunpack.c.h.b16 %v3593
    %v3707 = vunpack.c.l.b16 %v3594
    %v3708 = vunpack.c.h.b16 %v3594
    %v3709 = vunpack.c.l.b16 %v3595
    %v3710 = vunpack.c.h.b16 %v3595
    %v3711 = vunpack.c.l.b16 %v3596
    %v3712 = vunpack.c.h.b16 %v3596
    %v3713 = vunpack.c.l.b16 %v3597
    %v3714 = vunpack.c.h.b16 %v3597
    %v3715 = vunpack.c.l.b16 %v3598
    %v3716 = vunpack.c.h.b16 %v3598
    %v3717 = vunpack.c.l.b16 %v3599
    %v3718 = vunpack.c.h.b16 %v3599
    %v3719 = vunpack.c.l.b16 %v3600
    %v3720 = vunpack.c.h.b16 %v3600
    %v3721 = vunpack.c.l.b16 %v3601
    %v3722 = vunpack.c.h.b16 %v3601
    %v3723 = vunpack.c.l.b16 %v3602
    %v3724 = vunpack.c.h.b16 %v3602
    %v3725 = vunpack.c.l.b16 %v3603
    %v3726 = vunpack.c.h.b16 %v3603
    %v3727 = vunpack.c.l.b16 %v3604
    %v3728 = vunpack.c.h.b16 %v3604
    %v3729 = vunpack.c.l.b16 %v3605
    %v3730 = vunpack.c.h.b16 %v3605
    %v3731 = vunpack.c.l.b16 %v3606
    %v3732 = vunpack.c.h.b16 %v3606
    %v3733 = vunpack.c.l.b16 %v3607
    %v3734 = vunpack.c.h.b16 %v3607
    %v3735 = vunpack.c.l.b16 %v3608
    %v3736 = vunpack.c.h.b16 %v3608
    %v3737 = vunpack.c.l.b16 %v3609
    %v3738 = vunpack.c.h.b16 %v3609
    %v3739 = vunpack.c.l.b16 %v3610
    %v3740 = vunpack.c.h.b16 %v3610
    %v3741 = vunpack.c.l.b16 %v3611
    %v3742 = vunpack.c.h.b16 %v3611
    %v3743 = vunpack.c.l.b16 %v3612
    %v3744 = vunpack.c.h.b16 %v3612
    %v3745 = vunpack.c.l.b16 %v3613
    %v3746 = vunpack.c.h.b16 %v3613
    %v3747 = vunpack.c.l.b16 %v3614
    %v3748 = vunpack.c.h.b16 %v3614
    %v3749 = vunpack.c.l.b16 %v3615
    %v3750 = vunpack.c.h.b16 %v3615
    %v3751 = vunpack.c.l.b16 %v3616
    %v3752 = vunpack.c.h.b16 %v3616
    %v3753 = vunpack.c.l.b16 %v3617
    %v3754 = vunpack.c.h.b16 %v3617
    %v3755 = vunpack.c.l.b16 %v3618
    %v3756 = vunpack.c.h.b16 %v3618
    %v3757 = vunpack.c.l.b16 %v3619
    %v3758 = vunpack.c.h.b16 %v3619
    %v3759 = vunpack.c.l.b16 %v3620
    %v3760 = vunpack.c.h.b16 %v3620
    %v3761 = vunpack.c.l.b16 %v3621
    %v3762 = vunpack.c.h.b16 %v3621
    %v3763 = vunpack.c.l.b16 %v3622
    %v3764 = vunpack.c.h.b16 %v3622
    %v3765 = vunpack.c.l.b16 %v3623
    %v3766 = vunpack.c.h.b16 %v3623
    %v3767 = vunpack.c.l.b16 %v3624
    %v3768 = vunpack.c.h.b16 %v3624
    %v3769 = vpack.c.b16 %v3679, %v3673
    %v3770 = vpack.c.b16 %v3680, %v3674
    %v3771 = vpack.c.b16 %v3681, %v3675
    %v3772 = vpack.c.b16 %v3682, %v3676
    %v3773 = vpack.c.b16 %v3683, %v3677
    %v3774 = vpack.c.b16 %v3684, %v3678
    %v3775 = vpack.c.b16 %v3691, %v3685
    %v3776 = vpack.c.b16 %v3692, %v3686
    %v3777 = vpack.c.b16 %v3693, %v3687
    %v3778 = vpack.c.b16 %v3694, %v3688
    %v3779 = vpack.c.b16 %v3695, %v3689
    %v3780 = vpack.c.b16 %v3696, %v3690
    %v3781 = vpack.c.b16 %v3703, %v3697
    %v3782 = vpack.c.b16 %v3704, %v3698
    %v3783 = vpack.c.b16 %v3705, %v3699
    %v3784 = vpack.c.b16 %v3706, %v3700
    %v3785 = vpack.c.b16 %v3707, %v3701
    %v3786 = vpack.c.b16 %v3708, %v3702
    %v3787 = vpack.c.b16 %v3715, %v3709
    %v3788 = vpack.c.b16 %v3716, %v3710
    %v3789 = vpack.c.b16 %v3717, %v3711
    %v3790 = vpack.c.b16 %v3718, %v3712
    %v3791 = vpack.c.b16 %v3719, %v3713
    %v3792 = vpack.c.b16 %v3720, %v3714
    %v3793 = vpack.c.b16 %v3727, %v3721
    %v3794 = vpack.c.b16 %v3728, %v3722
    %v3795 = vpack.c.b16 %v3729, %v3723
    %v3796 = vpack.c.b16 %v3730, %v3724
    %v3797 = vpack.c.b16 %v3731, %v3725
    %v3798 = vpack.c.b16 %v3732, %v3726
    %v3799 = vpack.c.b16 %v3739, %v3733
    %v3800 = vpack.c.b16 %v3740, %v3734
    %v3801 = vpack.c.b16 %v3741, %v3735
    %v3802 = vpack.c.b16 %v3742, %v3736
    %v3803 = vpack.c.b16 %v3743, %v3737
    %v3804 = vpack.c.b16 %v3744, %v3738
    %v3805 = vpack.c.b16 %v3751, %v3745
    %v3806 = vpack.c.b16 %v3752, %v3746
    %v3807 = vpack.c.b16 %v3753, %v3747
    %v3808 = vpack.c.b16 %v3754, %v3748
    %v3809 = vpack.c.b16 %v3755, %v3749
    %v3810 = vpack.c.b16 %v3756, %v3750
    %v3811 = vpack.c.b16 %v3763, %v3757
    %v3812 = vpack.c.b16 %v3764, %v3758
    %v3813 = vpack.c.b16 %v3765, %v3759
    %v3814 = vpack.c.b16 %v3766, %v3760
    %v3815 = vpack.c.b16 %v3767, %v3761
    %v3816 = vpack.c.b16 %v3768, %v3762
    %3865 = vmatprep.subr.bf16.mxu0 %v3770
    %3866 = vmatpush1.bf16.msra.mxu0 %v3769
    %3867 = vmatprep.subr.bf16.mxu0 %v3776
    %3868 = vmatpush1.bf16.msra.mxu0 %v3775
    %3869 = vmatprep.subr.bf16.mxu0 %v3782
    %3870 = vmatpush1.bf16.msra.mxu0 %v3781
    %3871 = vmatprep.subr.bf16.mxu0 %v3788
    %3872 = vmatpush1.bf16.msra.mxu0 %v3787
    %3873 = vmatprep.subr.bf16.mxu0 %v3794
    %3874 = vmatpush1.bf16.msra.mxu0 %v3793
    %3875 = vmatprep.subr.bf16.mxu0 %v3800
    %3876 = vmatpush1.bf16.msra.mxu0 %v3799
    %3877 = vmatprep.subr.bf16.mxu0 %v3806
    %3878 = vmatpush1.bf16.msra.mxu0 %v3805
    %3879 = vmatprep.subr.bf16.mxu0 %v3812
    %3880 = vmatpush1.bf16.msra.mxu0 %v3811
    %3881 = vmatprep.subr.bf16.mxu0 0
    %3882 = vmatpush1.bf16.msra.mxu0 0
    %3883 = vmatprep.subr.bf16.mxu0 0
    %3884 = vmatpush1.bf16.msra.mxu0 0
    %3885 = vmatprep.subr.bf16.mxu0 0
    %3886 = vmatpush1.bf16.msra.mxu0 0
    %3887 = vmatprep.subr.bf16.mxu0 0
    %3888 = vmatpush1.bf16.msra.mxu0 0
    %3889 = vmatprep.subr.bf16.mxu0 0
    %3890 = vmatpush1.bf16.msra.mxu0 0
    %3891 = vmatprep.subr.bf16.mxu0 0
    %3892 = vmatpush1.bf16.msra.mxu0 0
    %3893 = vmatprep.subr.bf16.mxu0 0
    %3894 = vmatpush1.bf16.msra.mxu0 0
    %3895 = vmatprep.subr.bf16.mxu0 0
    %3896 = vmatpush1.bf16.msra.mxu0 0
    %3897 = vmatprep.mubr.bf16.mxu0 0
    %3898 = vmatmul.mubr.bf16.gmra.mrb[0].mxu0 %v3576
    %v3899 = vpop.f32.mrb[0].mxu0
    %v3900 = vadd.f32 0.0, %v3899
    %v3901 = vpop.f32.mrb[0].mxu0
    %v3902 = vadd.f32 0.0, %v3901
    %v3903 = vpop.f32.mrb[0].mxu0
    %v3904 = vpop.f32.mrb[0].mxu0
    %3905 = vdwg.mxu0
    %3906 = vmatprep.subr.bf16.mxu0 %v3772
    %3907 = vmatpush1.bf16.msra.mxu0 %v3771
    %3908 = vmatprep.subr.bf16.mxu0 %v3778
    %3909 = vmatpush1.bf16.msra.mxu0 %v3777
    %3910 = vmatprep.subr.bf16.mxu0 %v3784
    %3911 = vmatpush1.bf16.msra.mxu0 %v3783
    %3912 = vmatprep.subr.bf16.mxu0 %v3790
    %3913 = vmatpush1.bf16.msra.mxu0 %v3789
    %3914 = vmatprep.subr.bf16.mxu0 %v3796
    %3915 = vmatpush1.bf16.msra.mxu0 %v3795
    %3916 = vmatprep.subr.bf16.mxu0 %v3802
    %3917 = vmatpush1.bf16.msra.mxu0 %v3801
    %3918 = vmatprep.subr.bf16.mxu0 %v3808
    %3919 = vmatpush1.bf16.msra.mxu0 %v3807
    %3920 = vmatprep.subr.bf16.mxu0 %v3814
    %3921 = vmatpush1.bf16.msra.mxu0 %v3813
    %3922 = vmatprep.subr.bf16.mxu0 0
    %3923 = vmatpush1.bf16.msra.mxu0 0
    %3924 = vmatprep.subr.bf16.mxu0 0
    %3925 = vmatpush1.bf16.msra.mxu0 0
    %3926 = vmatprep.subr.bf16.mxu0 0
    %3927 = vmatpush1.bf16.msra.mxu0 0
    %3928 = vmatprep.subr.bf16.mxu0 0
    %3929 = vmatpush1.bf16.msra.mxu0 0
    %3930 = vmatprep.subr.bf16.mxu0 0
    %3931 = vmatpush1.bf16.msra.mxu0 0
    %3932 = vmatprep.subr.bf16.mxu0 0
    %3933 = vmatpush1.bf16.msra.mxu0 0
    %3934 = vmatprep.subr.bf16.mxu0 0
    %3935 = vmatpush1.bf16.msra.mxu0 0
    %3936 = vmatprep.subr.bf16.mxu0 0
    %3937 = vmatpush1.bf16.msra.mxu0 0
    %3938 = vmatprep.mubr.bf16.mxu0 0
    %3939 = vmatmul.mubr.bf16.gmra.mrb[0].mxu0 %v3576
    %v3940 = vpop.f32.mrb[0].mxu0
    %v3941 = vadd.f32 0.0, %v3940
    %v3942 = vpop.f32.mrb[0].mxu0
    %v3943 = vadd.f32 0.0, %v3942
    %v3944 = vpop.f32.mrb[0].mxu0
    %v3945 = vpop.f32.mrb[0].mxu0
    %3946 = vdwg.mxu0
    %3947 = vmatprep.subr.bf16.mxu0 %v3774
    %3948 = vmatpush1.bf16.msra.mxu0 %v3773
    %3949 = vmatprep.subr.bf16.mxu0 %v3780
    %3950 = vmatpush1.bf16.msra.mxu0 %v3779
    %3951 = vmatprep.subr.bf16.mxu0 %v3786
    %3952 = vmatpush1.bf16.msra.mxu0 %v3785
    %3953 = vmatprep.subr.bf16.mxu0 %v3792
    %3954 = vmatpush1.bf16.msra.mxu0 %v3791
    %3955 = vmatprep.subr.bf16.mxu0 %v3798
    %3956 = vmatpush1.bf16.msra.mxu0 %v3797
    %3957 = vmatprep.subr.bf16.mxu0 %v3804
    %3958 = vmatpush1.bf16.msra.mxu0 %v3803
    %3959 = vmatprep.subr.bf16.mxu0 %v3810
    %3960 = vmatpush1.bf16.msra.mxu0 %v3809
    %3961 = vmatprep.subr.bf16.mxu0 %v3816
    %3962 = vmatpush1.bf16.msra.mxu0 %v3815
    %3963 = vmatprep.subr.bf16.mxu0 0
    %3964 = vmatpush1.bf16.msra.mxu0 0
    %3965 = vmatprep.subr.bf16.mxu0 0
    %3966 = vmatpush1.bf16.msra.mxu0 0
    %3967 = vmatprep.subr.bf16.mxu0 0
    %3968 = vmatpush1.bf16.msra.mxu0 0
    %3969 = vmatprep.subr.bf16.mxu0 0
    %3970 = vmatpush1.bf16.msra.mxu0 0
    %3971 = vmatprep.subr.bf16.mxu0 0
    %3972 = vmatpush1.bf16.msra.mxu0 0
    %3973 = vmatprep.subr.bf16.mxu0 0
    %3974 = vmatpush1.bf16.msra.mxu0 0
    %3975 = vmatprep.subr.bf16.mxu0 0
    %3976 = vmatpush1.bf16.msra.mxu0 0
    %3977 = vmatprep.subr.bf16.mxu0 0
    %3978 = vmatpush1.bf16.msra.mxu0 0
    %3979 = vmatprep.mubr.bf16.mxu0 0
    %3980 = vmatmul.mubr.bf16.gmra.mrb[0].mxu0 %v3576
    %v3981 = vpop.f32.mrb[0].mxu0
    %v3982 = vadd.f32 0.0, %v3981
    %v3983 = vpop.f32.mrb[0].mxu0
    %v3984 = vadd.f32 0.0, %v3983
    %v3985 = vpop.f32.mrb[0].mxu0
    %v3986 = vpop.f32.mrb[0].mxu0
    %3987 = vdwg.mxu0
    %v3988 = vld [vmem:[%s4] sm:$0x3]
    %v3990 = vlaneseq
    %v3991 = vshrl.u32 %v3990, 7
    %v3992 = vsub.s32 0, %v3991
    %v3993 = vrot.slane %v3988, %v3992
    %v3994 = vlaneseq
    %v3995 = vshrl.u32 %v3994, 7
    %v3996 = vsub.s32 1, %v3995
    %v3997 = vrot.slane %v3988, %v3996
    %v4000 = vadd.f32 %v3982, %v3993
    %v4001 = vadd.f32 %v3984, %v3997
    %4002 = vst [vmem:[#allocation9 + $0x60] sm:$0xff] %v4000
    %4003 = vst [vmem:[#allocation9 + $0x68] sm:$0xff] %v4001
    %v4004 = vld [vmem:[#allocation2 + $0xe0] sm:$0xff]
    %v4005 = vld [vmem:[#allocation2 + $0xe8] sm:$0xff]
    %v4006 = vld [vmem:[#allocation2 + $0xf0] sm:$0xff]
    %v4007 = vld [vmem:[#allocation2 + $0xf8] sm:$0xff]
    %v4008 = vadd.f32 %v4004, %v3900
    %v4009 = vadd.f32 %v4005, %v3902
    %v4010 = vadd.f32 %v4006, %v3941
    %v4011 = vadd.f32 %v4007, %v3943
    %v4012 = vxor.u32 %v4008, 2147483648
    %v4013 = vxor.u32 %v4009, 2147483648
    %v4014 = vxor.u32 %v4010, 2147483648
    %v4015 = vmul.f32 %v4012, 1.442695
    %v4016 = vpow.pop %v4015
    %v4017 = vmul.f32 %v4013, 1.442695
    %v4018 = vpow.pop %v4017
    %v4019 = vmul.f32 %v4014, 1.442695
    %v4020 = vpow.pop %v4019
    %v4021 = vadd.f32 %v4016, 1.0
    %v4022 = vadd.f32 %v4018, 1.0
    %v4023 = vadd.f32 %v4020, 1.0
    %v4024 = vrcp.pop %v4021
    %v4025 = vmul.f32 1.0, %v4024
    %v4026 = vrcp.pop %v4022
    %v4027 = vmul.f32 1.0, %v4026
    %v4028 = vrcp.pop %v4023
    %v4029 = vmul.f32 1.0, %v4028
    %v4030 = vtanh.pop %v4011
    %v4031 = vmul.f32 %v4027, %v3573
    %v4032 = vmul.f32 %v4025, %v4030
    %v4033 = vadd.f32 %v4031, %v4032
    %v4034 = vtanh.pop %v4033
    %v4035 = vmul.f32 %v4029, %v4034
    %v4036 = vpack.c.bf16 %v4035, %v4035
    %v4037 = vld [vmem:[#allocation8] sm:$0xff]
    %v4038 = vld [vmem:[#allocation8 + $0x8] sm:$0xff]
    %v4039 = vld [vmem:[#allocation8 + $0x10] sm:$0xff]
    %v4040 = vld [vmem:[#allocation8 + $0x18] sm:$0xff]
    %v4041 = vld [vmem:[#allocation8 + $0x20] sm:$0xff]
    %v4042 = vld [vmem:[#allocation8 + $0x28] sm:$0xff]
    %v4043 = vld [vmem:[#allocation8 + $0x30] sm:$0xff]
    %v4044 = vld [vmem:[#allocation8 + $0x38] sm:$0xff]
    %v4045 = vld [vmem:[#allocation8 + $0x40] sm:$0xff]
    %v4046 = vld [vmem:[#allocation8 + $0x48] sm:$0xff]
    %v4047 = vld [vmem:[#allocation8 + $0x50] sm:$0xff]
    %v4048 = vld [vmem:[#allocation8 + $0x58] sm:$0xff]
    %v4049 = vld [vmem:[#allocation8 + $0x60] sm:$0xff]
    %v4050 = vld [vmem:[#allocation8 + $0x68] sm:$0xff]
    %v4051 = vld [vmem:[#allocation8 + $0x70] sm:$0xff]
    %v4052 = vld [vmem:[#allocation8 + $0x78] sm:$0xff]
    %v4053 = vld [vmem:[#allocation8 + $0x80] sm:$0xff]
    %v4054 = vld [vmem:[#allocation8 + $0x88] sm:$0xff]
    %v4055 = vld [vmem:[#allocation8 + $0x90] sm:$0xff]
    %v4056 = vld [vmem:[#allocation8 + $0x98] sm:$0xff]
    %v4057 = vld [vmem:[#allocation8 + $0xa0] sm:$0xff]
    %v4058 = vld [vmem:[#allocation8 + $0xa8] sm:$0xff]
    %v4059 = vld [vmem:[#allocation8 + $0xb0] sm:$0xff]
    %v4060 = vld [vmem:[#allocation8 + $0xb8] sm:$0xff]
    %v4061 = vld [vmem:[#allocation8 + $0xc0] sm:$0xff]
    %v4062 = vld [vmem:[#allocation8 + $0xc8] sm:$0xff]
    %v4063 = vld [vmem:[#allocation8 + $0xd0] sm:$0xff]
    %v4064 = vld [vmem:[#allocation8 + $0xd8] sm:$0xff]
    %v4065 = vld [vmem:[#allocation8 + $0xe0] sm:$0xff]
    %v4066 = vld [vmem:[#allocation8 + $0xe8] sm:$0xff]
    %v4067 = vld [vmem:[#allocation8 + $0xf0] sm:$0xff]
    %v4068 = vld [vmem:[#allocation8 + $0xf8] sm:$0xff]
    %v4069 = vld [vmem:[#allocation8 + $0x100] sm:$0xff]
    %v4070 = vld [vmem:[#allocation8 + $0x108] sm:$0xff]
    %v4071 = vld [vmem:[#allocation8 + $0x110] sm:$0xff]
    %v4072 = vld [vmem:[#allocation8 + $0x118] sm:$0xff]
    %v4073 = vld [vmem:[#allocation8 + $0x120] sm:$0xff]
    %v4074 = vld [vmem:[#allocation8 + $0x128] sm:$0xff]
    %v4075 = vld [vmem:[#allocation8 + $0x130] sm:$0xff]
    %v4076 = vld [vmem:[#allocation8 + $0x138] sm:$0xff]
    %v4077 = vld [vmem:[#allocation8 + $0x140] sm:$0xff]
    %v4078 = vld [vmem:[#allocation8 + $0x148] sm:$0xff]
    %v4079 = vld [vmem:[#allocation8 + $0x150] sm:$0xff]
    %v4080 = vld [vmem:[#allocation8 + $0x158] sm:$0xff]
    %v4081 = vld [vmem:[#allocation8 + $0x160] sm:$0xff]
    %v4082 = vld [vmem:[#allocation8 + $0x168] sm:$0xff]
    %v4083 = vld [vmem:[#allocation8 + $0x170] sm:$0xff]
    %v4084 = vld [vmem:[#allocation8 + $0x178] sm:$0xff]
    %v4133 = vunpack.c.l.b16 %v4037
    %v4134 = vunpack.c.h.b16 %v4037
    %v4135 = vunpack.c.l.b16 %v4038
    %v4136 = vunpack.c.h.b16 %v4038
    %v4137 = vunpack.c.l.b16 %v4039
    %v4138 = vunpack.c.h.b16 %v4039
    %v4139 = vunpack.c.l.b16 %v4040
    %v4140 = vunpack.c.h.b16 %v4040
    %v4141 = vunpack.c.l.b16 %v4041
    %v4142 = vunpack.c.h.b16 %v4041
    %v4143 = vunpack.c.l.b16 %v4042
    %v4144 = vunpack.c.h.b16 %v4042
    %v4145 = vunpack.c.l.b16 %v4043
    %v4146 = vunpack.c.h.b16 %v4043
    %v4147 = vunpack.c.l.b16 %v4044
    %v4148 = vunpack.c.h.b16 %v4044
    %v4149 = vunpack.c.l.b16 %v4045
    %v4150 = vunpack.c.h.b16 %v4045
    %v4151 = vunpack.c.l.b16 %v4046
    %v4152 = vunpack.c.h.b16 %v4046
    %v4153 = vunpack.c.l.b16 %v4047
    %v4154 = vunpack.c.h.b16 %v4047
    %v4155 = vunpack.c.l.b16 %v4048
    %v4156 = vunpack.c.h.b16 %v4048
    %v4157 = vunpack.c.l.b16 %v4049
    %v4158 = vunpack.c.h.b16 %v4049
    %v4159 = vunpack.c.l.b16 %v4050
    %v4160 = vunpack.c.h.b16 %v4050
    %v4161 = vunpack.c.l.b16 %v4051
    %v4162 = vunpack.c.h.b16 %v4051
    %v4163 = vunpack.c.l.b16 %v4052
    %v4164 = vunpack.c.h.b16 %v4052
    %v4165 = vunpack.c.l.b16 %v4053
    %v4166 = vunpack.c.h.b16 %v4053
    %v4167 = vunpack.c.l.b16 %v4054
    %v4168 = vunpack.c.h.b16 %v4054
    %v4169 = vunpack.c.l.b16 %v4055
    %v4170 = vunpack.c.h.b16 %v4055
    %v4171 = vunpack.c.l.b16 %v4056
    %v4172 = vunpack.c.h.b16 %v4056
    %v4173 = vunpack.c.l.b16 %v4057
    %v4174 = vunpack.c.h.b16 %v4057
    %v4175 = vunpack.c.l.b16 %v4058
    %v4176 = vunpack.c.h.b16 %v4058
    %v4177 = vunpack.c.l.b16 %v4059
    %v4178 = vunpack.c.h.b16 %v4059
    %v4179 = vunpack.c.l.b16 %v4060
    %v4180 = vunpack.c.h.b16 %v4060
    %v4181 = vunpack.c.l.b16 %v4061
    %v4182 = vunpack.c.h.b16 %v4061
    %v4183 = vunpack.c.l.b16 %v4062
    %v4184 = vunpack.c.h.b16 %v4062
    %v4185 = vunpack.c.l.b16 %v4063
    %v4186 = vunpack.c.h.b16 %v4063
    %v4187 = vunpack.c.l.b16 %v4064
    %v4188 = vunpack.c.h.b16 %v4064
    %v4189 = vunpack.c.l.b16 %v4065
    %v4190 = vunpack.c.h.b16 %v4065
    %v4191 = vunpack.c.l.b16 %v4066
    %v4192 = vunpack.c.h.b16 %v4066
    %v4193 = vunpack.c.l.b16 %v4067
    %v4194 = vunpack.c.h.b16 %v4067
    %v4195 = vunpack.c.l.b16 %v4068
    %v4196 = vunpack.c.h.b16 %v4068
    %v4197 = vunpack.c.l.b16 %v4069
    %v4198 = vunpack.c.h.b16 %v4069
    %v4199 = vunpack.c.l.b16 %v4070
    %v4200 = vunpack.c.h.b16 %v4070
    %v4201 = vunpack.c.l.b16 %v4071
    %v4202 = vunpack.c.h.b16 %v4071
    %v4203 = vunpack.c.l.b16 %v4072
    %v4204 = vunpack.c.h.b16 %v4072
    %v4205 = vunpack.c.l.b16 %v4073
    %v4206 = vunpack.c.h.b16 %v4073
    %v4207 = vunpack.c.l.b16 %v4074
    %v4208 = vunpack.c.h.b16 %v4074
    %v4209 = vunpack.c.l.b16 %v4075
    %v4210 = vunpack.c.h.b16 %v4075
    %v4211 = vunpack.c.l.b16 %v4076
    %v4212 = vunpack.c.h.b16 %v4076
    %v4213 = vunpack.c.l.b16 %v4077
    %v4214 = vunpack.c.h.b16 %v4077
    %v4215 = vunpack.c.l.b16 %v4078
    %v4216 = vunpack.c.h.b16 %v4078
    %v4217 = vunpack.c.l.b16 %v4079
    %v4218 = vunpack.c.h.b16 %v4079
    %v4219 = vunpack.c.l.b16 %v4080
    %v4220 = vunpack.c.h.b16 %v4080
    %v4221 = vunpack.c.l.b16 %v4081
    %v4222 = vunpack.c.h.b16 %v4081
    %v4223 = vunpack.c.l.b16 %v4082
    %v4224 = vunpack.c.h.b16 %v4082
    %v4225 = vunpack.c.l.b16 %v4083
    %v4226 = vunpack.c.h.b16 %v4083
    %v4227 = vunpack.c.l.b16 %v4084
    %v4228 = vunpack.c.h.b16 %v4084
    %v4229 = vpack.c.b16 %v4139, %v4133
    %v4230 = vpack.c.b16 %v4140, %v4134
    %v4231 = vpack.c.b16 %v4141, %v4135
    %v4232 = vpack.c.b16 %v4142, %v4136
    %v4233 = vpack.c.b16 %v4143, %v4137
    %v4234 = vpack.c.b16 %v4144, %v4138
    %v4235 = vpack.c.b16 %v4151, %v4145
    %v4236 = vpack.c.b16 %v4152, %v4146
    %v4237 = vpack.c.b16 %v4153, %v4147
    %v4238 = vpack.c.b16 %v4154, %v4148
    %v4239 = vpack.c.b16 %v4155, %v4149
    %v4240 = vpack.c.b16 %v4156, %v4150
    %v4241 = vpack.c.b16 %v4163, %v4157
    %v4242 = vpack.c.b16 %v4164, %v4158
    %v4243 = vpack.c.b16 %v4165, %v4159
    %v4244 = vpack.c.b16 %v4166, %v4160
    %v4245 = vpack.c.b16 %v4167, %v4161
    %v4246 = vpack.c.b16 %v4168, %v4162
    %v4247 = vpack.c.b16 %v4175, %v4169
    %v4248 = vpack.c.b16 %v4176, %v4170
    %v4249 = vpack.c.b16 %v4177, %v4171
    %v4250 = vpack.c.b16 %v4178, %v4172
    %v4251 = vpack.c.b16 %v4179, %v4173
    %v4252 = vpack.c.b16 %v4180, %v4174
    %v4253 = vpack.c.b16 %v4187, %v4181
    %v4254 = vpack.c.b16 %v4188, %v4182
    %v4255 = vpack.c.b16 %v4189, %v4183
    %v4256 = vpack.c.b16 %v4190, %v4184
    %v4257 = vpack.c.b16 %v4191, %v4185
    %v4258 = vpack.c.b16 %v4192, %v4186
    %v4259 = vpack.c.b16 %v4199, %v4193
    %v4260 = vpack.c.b16 %v4200, %v4194
    %v4261 = vpack.c.b16 %v4201, %v4195
    %v4262 = vpack.c.b16 %v4202, %v4196
    %v4263 = vpack.c.b16 %v4203, %v4197
    %v4264 = vpack.c.b16 %v4204, %v4198
    %v4265 = vpack.c.b16 %v4211, %v4205
    %v4266 = vpack.c.b16 %v4212, %v4206
    %v4267 = vpack.c.b16 %v4213, %v4207
    %v4268 = vpack.c.b16 %v4214, %v4208
    %v4269 = vpack.c.b16 %v4215, %v4209
    %v4270 = vpack.c.b16 %v4216, %v4210
    %v4271 = vpack.c.b16 %v4223, %v4217
    %v4272 = vpack.c.b16 %v4224, %v4218
    %v4273 = vpack.c.b16 %v4225, %v4219
    %v4274 = vpack.c.b16 %v4226, %v4220
    %v4275 = vpack.c.b16 %v4227, %v4221
    %v4276 = vpack.c.b16 %v4228, %v4222
    %4325 = vmatprep.subr.bf16.mxu0 %v4230
    %4326 = vmatpush1.bf16.msra.mxu0 %v4229
    %4327 = vmatprep.subr.bf16.mxu0 %v4236
    %4328 = vmatpush1.bf16.msra.mxu0 %v4235
    %4329 = vmatprep.subr.bf16.mxu0 %v4242
    %4330 = vmatpush1.bf16.msra.mxu0 %v4241
    %4331 = vmatprep.subr.bf16.mxu0 %v4248
    %4332 = vmatpush1.bf16.msra.mxu0 %v4247
    %4333 = vmatprep.subr.bf16.mxu0 %v4254
    %4334 = vmatpush1.bf16.msra.mxu0 %v4253
    %4335 = vmatprep.subr.bf16.mxu0 %v4260
    %4336 = vmatpush1.bf16.msra.mxu0 %v4259
    %4337 = vmatprep.subr.bf16.mxu0 %v4266
    %4338 = vmatpush1.bf16.msra.mxu0 %v4265
    %4339 = vmatprep.subr.bf16.mxu0 %v4272
    %4340 = vmatpush1.bf16.msra.mxu0 %v4271
    %4341 = vmatprep.subr.bf16.mxu0 0
    %4342 = vmatpush1.bf16.msra.mxu0 0
    %4343 = vmatprep.subr.bf16.mxu0 0
    %4344 = vmatpush1.bf16.msra.mxu0 0
    %4345 = vmatprep.subr.bf16.mxu0 0
    %4346 = vmatpush1.bf16.msra.mxu0 0
    %4347 = vmatprep.subr.bf16.mxu0 0
    %4348 = vmatpush1.bf16.msra.mxu0 0
    %4349 = vmatprep.subr.bf16.mxu0 0
    %4350 = vmatpush1.bf16.msra.mxu0 0
    %4351 = vmatprep.subr.bf16.mxu0 0
    %4352 = vmatpush1.bf16.msra.mxu0 0
    %4353 = vmatprep.subr.bf16.mxu0 0
    %4354 = vmatpush1.bf16.msra.mxu0 0
    %4355 = vmatprep.subr.bf16.mxu0 0
    %4356 = vmatpush1.bf16.msra.mxu0 0
    %4357 = vmatprep.mubr.bf16.mxu0 0
    %4358 = vmatmul.mubr.bf16.gmra.mrb[0].mxu0 %v4036
    %v4359 = vpop.f32.mrb[0].mxu0
    %v4360 = vadd.f32 0.0, %v4359
    %v4361 = vpop.f32.mrb[0].mxu0
    %v4362 = vadd.f32 0.0, %v4361
    %v4363 = vpop.f32.mrb[0].mxu0
    %v4364 = vpop.f32.mrb[0].mxu0
    %4365 = vdwg.mxu0
    %4366 = vmatprep.subr.bf16.mxu0 %v4232
    %4367 = vmatpush1.bf16.msra.mxu0 %v4231
    %4368 = vmatprep.subr.bf16.mxu0 %v4238
    %4369 = vmatpush1.bf16.msra.mxu0 %v4237
    %4370 = vmatprep.subr.bf16.mxu0 %v4244
    %4371 = vmatpush1.bf16.msra.mxu0 %v4243
    %4372 = vmatprep.subr.bf16.mxu0 %v4250
    %4373 = vmatpush1.bf16.msra.mxu0 %v4249
    %4374 = vmatprep.subr.bf16.mxu0 %v4256
    %4375 = vmatpush1.bf16.msra.mxu0 %v4255
    %4376 = vmatprep.subr.bf16.mxu0 %v4262
    %4377 = vmatpush1.bf16.msra.mxu0 %v4261
    %4378 = vmatprep.subr.bf16.mxu0 %v4268
    %4379 = vmatpush1.bf16.msra.mxu0 %v4267
    %4380 = vmatprep.subr.bf16.mxu0 %v4274
    %4381 = vmatpush1.bf16.msra.mxu0 %v4273
    %4382 = vmatprep.subr.bf16.mxu0 0
    %4383 = vmatpush1.bf16.msra.mxu0 0
    %4384 = vmatprep.subr.bf16.mxu0 0
    %4385 = vmatpush1.bf16.msra.mxu0 0
    %4386 = vmatprep.subr.bf16.mxu0 0
    %4387 = vmatpush1.bf16.msra.mxu0 0
    %4388 = vmatprep.subr.bf16.mxu0 0
    %4389 = vmatpush1.bf16.msra.mxu0 0
    %4390 = vmatprep.subr.bf16.mxu0 0
    %4391 = vmatpush1.bf16.msra.mxu0 0
    %4392 = vmatprep.subr.bf16.mxu0 0
    %4393 = vmatpush1.bf16.msra.mxu0 0
    %4394 = vmatprep.subr.bf16.mxu0 0
    %4395 = vmatpush1.bf16.msra.mxu0 0
    %4396 = vmatprep.subr.bf16.mxu0 0
    %4397 = vmatpush1.bf16.msra.mxu0 0
    %4398 = vmatprep.mubr.bf16.mxu0 0
    %4399 = vmatmul.mubr.bf16.gmra.mrb[0].mxu0 %v4036
    %v4400 = vpop.f32.mrb[0].mxu0
    %v4401 = vadd.f32 0.0, %v4400
    %v4402 = vpop.f32.mrb[0].mxu0
    %v4403 = vadd.f32 0.0, %v4402
    %v4404 = vpop.f32.mrb[0].mxu0
    %v4405 = vpop.f32.mrb[0].mxu0
    %4406 = vdwg.mxu0
    %4407 = vmatprep.subr.bf16.mxu0 %v4234
    %4408 = vmatpush1.bf16.msra.mxu0 %v4233
    %4409 = vmatprep.subr.bf16.mxu0 %v4240
    %4410 = vmatpush1.bf16.msra.mxu0 %v4239
    %4411 = vmatprep.subr.bf16.mxu0 %v4246
    %4412 = vmatpush1.bf16.msra.mxu0 %v4245
    %4413 = vmatprep.subr.bf16.mxu0 %v4252
    %4414 = vmatpush1.bf16.msra.mxu0 %v4251
    %4415 = vmatprep.subr.bf16.mxu0 %v4258
    %4416 = vmatpush1.bf16.msra.mxu0 %v4257
    %4417 = vmatprep.subr.bf16.mxu0 %v4264
    %4418 = vmatpush1.bf16.msra.mxu0 %v4263
    %4419 = vmatprep.subr.bf16.mxu0 %v4270
    %4420 = vmatpush1.bf16.msra.mxu0 %v4269
    %4421 = vmatprep.subr.bf16.mxu0 %v4276
    %4422 = vmatpush1.bf16.msra.mxu0 %v4275
    %4423 = vmatprep.subr.bf16.mxu0 0
    %4424 = vmatpush1.bf16.msra.mxu0 0
    %4425 = vmatprep.subr.bf16.mxu0 0
    %4426 = vmatpush1.bf16.msra.mxu0 0
    %4427 = vmatprep.subr.bf16.mxu0 0
    %4428 = vmatpush1.bf16.msra.mxu0 0
    %4429 = vmatprep.subr.bf16.mxu0 0
    %4430 = vmatpush1.bf16.msra.mxu0 0
    %4431 = vmatprep.subr.bf16.mxu0 0
    %4432 = vmatpush1.bf16.msra.mxu0 0
    %4433 = vmatprep.subr.bf16.mxu0 0
    %4434 = vmatpush1.bf16.msra.mxu0 0
    %4435 = vmatprep.subr.bf16.mxu0 0
    %4436 = vmatpush1.bf16.msra.mxu0 0
    %4437 = vmatprep.subr.bf16.mxu0 0
    %4438 = vmatpush1.bf16.msra.mxu0 0
    %4439 = vmatprep.mubr.bf16.mxu0 0
    %4440 = vmatmul.mubr.bf16.gmra.mrb[0].mxu0 %v4036
    %v4441 = vpop.f32.mrb[0].mxu0
    %v4442 = vadd.f32 0.0, %v4441
    %v4443 = vpop.f32.mrb[0].mxu0
    %v4444 = vadd.f32 0.0, %v4443
    %v4445 = vpop.f32.mrb[0].mxu0
    %v4446 = vpop.f32.mrb[0].mxu0
    %4447 = vdwg.mxu0
    %v4448 = vld [vmem:[%s4] sm:$0x3]
    %v4450 = vlaneseq
    %v4451 = vshrl.u32 %v4450, 7
    %v4452 = vsub.s32 0, %v4451
    %v4453 = vrot.slane %v4448, %v4452
    %v4454 = vlaneseq
    %v4455 = vshrl.u32 %v4454, 7
    %v4456 = vsub.s32 1, %v4455
    %v4457 = vrot.slane %v4448, %v4456
    %v4460 = vadd.f32 %v4442, %v4453
    %v4461 = vadd.f32 %v4444, %v4457
    %4462 = vst [vmem:[#allocation9 + $0x70] sm:$0xff] %v4460
    %4463 = vst [vmem:[#allocation9 + $0x78] sm:$0xff] %v4461
    %v4464 = vld [vmem:[#allocation2 + $0x100] sm:$0xff]
    %v4465 = vld [vmem:[#allocation2 + $0x108] sm:$0xff]
    %v4466 = vld [vmem:[#allocation2 + $0x110] sm:$0xff]
    %v4467 = vld [vmem:[#allocation2 + $0x118] sm:$0xff]
    %v4468 = vadd.f32 %v4464, %v4360
    %v4469 = vadd.f32 %v4465, %v4362
    %v4470 = vadd.f32 %v4466, %v4401
    %v4471 = vadd.f32 %v4467, %v4403
    %v4472 = vxor.u32 %v4468, 2147483648
    %v4473 = vxor.u32 %v4469, 2147483648
    %v4474 = vxor.u32 %v4470, 2147483648
    %v4475 = vmul.f32 %v4472, 1.442695
    %v4476 = vpow.pop %v4475
    %v4477 = vmul.f32 %v4473, 1.442695
    %v4478 = vpow.pop %v4477
    %v4479 = vmul.f32 %v4474, 1.442695
    %v4480 = vpow.pop %v4479
    %v4481 = vadd.f32 %v4476, 1.0
    %v4482 = vadd.f32 %v4478, 1.0
    %v4483 = vadd.f32 %v4480, 1.0
    %v4484 = vrcp.pop %v4481
    %v4485 = vmul.f32 1.0, %v4484
    %v4486 = vrcp.pop %v4482
    %v4487 = vmul.f32 1.0, %v4486
    %v4488 = vrcp.pop %v4483
    %v4489 = vmul.f32 1.0, %v4488
    %v4490 = vtanh.pop %v4471
    %v4491 = vmul.f32 %v4487, %v4033
    %v4492 = vmul.f32 %v4485, %v4490
    %v4493 = vadd.f32 %v4491, %v4492
    %v4494 = vtanh.pop %v4493
    %v4495 = vmul.f32 %v4489, %v4494
    %v4496 = vpack.c.bf16 %v4495, %v4495
    %v4497 = vld [vmem:[#allocation8 + $0x10] sm:$0xff]
    %v4498 = vld [vmem:[#allocation8 + $0x28] sm:$0xff]
    %v4499 = vld [vmem:[#allocation8 + $0x40] sm:$0xff]
    %v4500 = vld [vmem:[#allocation8 + $0x58] sm:$0xff]
    %v4501 = vld [vmem:[#allocation8 + $0x70] sm:$0xff]
    %v4502 = vld [vmem:[#allocation8 + $0x88] sm:$0xff]
    %v4503 = vld [vmem:[#allocation8 + $0xa0] sm:$0xff]
    %v4504 = vld [vmem:[#allocation8 + $0xb8] sm:$0xff]
    %v4505 = vld [vmem:[#allocation8 + $0xd0] sm:$0xff]
    %v4506 = vld [vmem:[#allocation8 + $0xe8] sm:$0xff]
    %v4507 = vld [vmem:[#allocation8 + $0x100] sm:$0xff]
    %v4508 = vld [vmem:[#allocation8 + $0x118] sm:$0xff]
    %v4509 = vld [vmem:[#allocation8 + $0x130] sm:$0xff]
    %v4510 = vld [vmem:[#allocation8 + $0x148] sm:$0xff]
    %v4511 = vld [vmem:[#allocation8 + $0x160] sm:$0xff]
    %v4512 = vld [vmem:[#allocation8 + $0x178] sm:$0xff]
    %v4513 = vld [vmem:[%s4] sm:$0x3]
    %v4515 = vlaneseq
    %v4516 = vshrl.u32 %v4515, 7
    %v4517 = vsub.s32 0, %v4516
    %v4518 = vrot.slane %v4513, %v4517
    %v4519 = vlaneseq
    %v4520 = vshrl.u32 %v4519, 7
    %v4521 = vsub.s32 1, %v4520
    %v4522 = vrot.slane %v4513, %v4521
    %v4541 = vunpack.c.l.b16 %v4497
    %v4542 = vunpack.c.h.b16 %v4497
    %v4543 = vunpack.c.l.b16 %v4498
    %v4544 = vunpack.c.h.b16 %v4498
    %v4545 = vunpack.c.l.b16 %v4499
    %v4546 = vunpack.c.h.b16 %v4499
    %v4547 = vunpack.c.l.b16 %v4500
    %v4548 = vunpack.c.h.b16 %v4500
    %v4549 = vunpack.c.l.b16 %v4501
    %v4550 = vunpack.c.h.b16 %v4501
    %v4551 = vunpack.c.l.b16 %v4502
    %v4552 = vunpack.c.h.b16 %v4502
    %v4553 = vunpack.c.l.b16 %v4503
    %v4554 = vunpack.c.h.b16 %v4503
    %v4555 = vunpack.c.l.b16 %v4504
    %v4556 = vunpack.c.h.b16 %v4504
    %v4557 = vunpack.c.l.b16 %v4505
    %v4558 = vunpack.c.h.b16 %v4505
    %v4559 = vunpack.c.l.b16 %v4506
    %v4560 = vunpack.c.h.b16 %v4506
    %v4561 = vunpack.c.l.b16 %v4507
    %v4562 = vunpack.c.h.b16 %v4507
    %v4563 = vunpack.c.l.b16 %v4508
    %v4564 = vunpack.c.h.b16 %v4508
    %v4565 = vunpack.c.l.b16 %v4509
    %v4566 = vunpack.c.h.b16 %v4509
    %v4567 = vunpack.c.l.b16 %v4510
    %v4568 = vunpack.c.h.b16 %v4510
    %v4569 = vunpack.c.l.b16 %v4511
    %v4570 = vunpack.c.h.b16 %v4511
    %v4571 = vunpack.c.l.b16 %v4512
    %v4572 = vunpack.c.h.b16 %v4512
    %v4573 = vpack.c.b16 %v4543, %v4541
    %v4574 = vpack.c.b16 %v4544, %v4542
    %v4575 = vpack.c.b16 %v4547, %v4545
    %v4576 = vpack.c.b16 %v4548, %v4546
    %v4577 = vpack.c.b16 %v4551, %v4549
    %v4578 = vpack.c.b16 %v4552, %v4550
    %v4579 = vpack.c.b16 %v4555, %v4553
    %v4580 = vpack.c.b16 %v4556, %v4554
    %v4581 = vpack.c.b16 %v4559, %v4557
    %v4582 = vpack.c.b16 %v4560, %v4558
    %v4583 = vpack.c.b16 %v4563, %v4561
    %v4584 = vpack.c.b16 %v4564, %v4562
    %v4585 = vpack.c.b16 %v4567, %v4565
    %v4586 = vpack.c.b16 %v4568, %v4566
    %v4587 = vpack.c.b16 %v4571, %v4569
    %v4588 = vpack.c.b16 %v4572, %v4570
    %4605 = vmatprep.subr.bf16.mxu0 %v4574
    %4606 = vmatpush1.bf16.msra.mxu0 %v4573
    %4607 = vmatprep.subr.bf16.mxu0 %v4576
    %4608 = vmatpush1.bf16.msra.mxu0 %v4575
    %4609 = vmatprep.subr.bf16.mxu0 %v4578
    %4610 = vmatpush1.bf16.msra.mxu0 %v4577
    %4611 = vmatprep.subr.bf16.mxu0 %v4580
    %4612 = vmatpush1.bf16.msra.mxu0 %v4579
    %4613 = vmatprep.subr.bf16.mxu0 %v4582
    %4614 = vmatpush1.bf16.msra.mxu0 %v4581
    %4615 = vmatprep.subr.bf16.mxu0 %v4584
    %4616 = vmatpush1.bf16.msra.mxu0 %v4583
    %4617 = vmatprep.subr.bf16.mxu0 %v4586
    %4618 = vmatpush1.bf16.msra.mxu0 %v4585
    %4619 = vmatprep.subr.bf16.mxu0 %v4588
    %4620 = vmatpush1.bf16.msra.mxu0 %v4587
    %4621 = vmatprep.subr.bf16.mxu0 0
    %4622 = vmatpush1.bf16.msra.mxu0 0
    %4623 = vmatprep.subr.bf16.mxu0 0
    %4624 = vmatpush1.bf16.msra.mxu0 0
    %4625 = vmatprep.subr.bf16.mxu0 0
    %4626 = vmatpush1.bf16.msra.mxu0 0
    %4627 = vmatprep.subr.bf16.mxu0 0
    %4628 = vmatpush1.bf16.msra.mxu0 0
    %4629 = vmatprep.subr.bf16.mxu0 0
    %4630 = vmatpush1.bf16.msra.mxu0 0
    %4631 = vmatprep.subr.bf16.mxu0 0
    %4632 = vmatpush1.bf16.msra.mxu0 0
    %4633 = vmatprep.subr.bf16.mxu0 0
    %4634 = vmatpush1.bf16.msra.mxu0 0
    %4635 = vmatprep.subr.bf16.mxu0 0
    %4636 = vmatpush1.bf16.msra.mxu0 0
    %4637 = vmatprep.mubr.bf16.mxu0 0
    %4638 = vmatmul.mubr.bf16.gmra.mrb[0].mxu0 %v4496
    %v4639 = vpop.f32.mrb[0].mxu0
    %v4640 = vadd.f32 %v4518, %v4639
    %v4641 = vpop.f32.mrb[0].mxu0
    %v4642 = vadd.f32 %v4522, %v4641
    %v4643 = vpop.f32.mrb[0].mxu0
    %v4644 = vpop.f32.mrb[0].mxu0
    %4645 = vdwg.mxu0
    %4646 = vst [vmem:[#allocation9 + $0x80] sm:$0xff] %v4640
    %4647 = vst [vmem:[#allocation9 + $0x88] sm:$0xff] %v4642
    // Predicated region
    $region34: #{tpu_custom_call.1} parent=1 // pred_check
      _
    $region35: #{tpu_custom_call.1} parent=1 // pred_check_branch
      %4649 = sbr.rel (0) target = $region37
    $region36: #{tpu_custom_call.1} parent=1 // pred_region
      %s4651 = ssub.s32 2304, 2304
      %4652 = vsyncadd [#allocation5], %s4651
      %s4653 = sshll.u32 [#allocation9], 4
      %s4654 = int_to_ptr.vmem [resolvable:$true] %s4653
      %4659 = dma.vmem_to_hbm [thread:$0]  %s4654, 2304, %s5, [#allocation5], 256, 256, 16
    $region37: #{tpu_custom_call.1} parent=1 // pred_fallthru
      _
    // Predicated region
    $region38: #{tpu_custom_call.1} parent=1 // pred_check
      _
    $region39: #{tpu_custom_call.1} parent=1 // pred_check_branch
      %4661 = sbr.rel (0) target = $region41
    $region40: #{tpu_custom_call.1} parent=1 // pred_region
      %4662 = dma.done [#allocation5], 2304
    $region41: #{tpu_custom_call.1} parent=1 // pred_fallthru
      _
    %4663 = vsyncpa [#allocation4], 1
    %4664 = vsyncpa [#allocation7], 1
    %4665 = vsyncpa [#allocation5], 1

</llo_original>
